<compile_context>
chip_gen: v7x
topology: tpu7x:2x2x1
jax: 0.10.0
libtpu: 0.0.40
codegen_flags: <defaults>
</compile_context>

<pallas_src>
import functools

import jax
import jax.numpy as jnp
from jax.experimental import pallas as pl
from jax.experimental.pallas import tpu as pltpu

# ---------------------------------------------------------------------------
# Model configuration (small, but shape-consistent with SARL's ValueNetwork).
# ---------------------------------------------------------------------------
INPUT_DIM = 13          # rotated joint-state length
SELF_STATE_DIM = 6      # self_state_dim
MLP1_DIMS = (32, 32)    # last_relu=True
MLP2_DIMS = (32, 32)    # no relu after last layer
ATTN_DIMS = (32, 1)     # attention MLP (with_global_state=True -> input = 2 * MLP1_DIMS[-1])
MLP3_DIMS = (32, 1)     # value head, input = MLP2_DIMS[-1] + SELF_STATE_DIM

BATCH = 20
N_HUMANS = 5
TILE_B = 8              # states per grid step (multiple of 8 sublanes)
OUT_PAD = 128           # lane-dense output width (col 0 holds the value)


def _relu(x):
    return jnp.maximum(x, 0.0)


def _value_net_kernel(x_ref, self_ref, pool_ref, bcast_ref,
                      w1a_ref, b1a_ref, w1b_ref, b1b_ref,
                      w2a_ref, b2a_ref, w2b_ref, b2b_ref,
                      wa1h_ref, wa1g_ref, ba1_ref, wa2_ref, ba2_ref,
                      w3as_ref, w3af_ref, b3a_ref, w3bp_ref, b3bp_ref,
                      out_ref, *, n_humans):
    f32 = jnp.float32
    x = x_ref[...]                                    # (ROWS, D), ROWS = TILE_B * n_humans
    rows = x.shape[0]
    tile_b = rows // n_humans

    def dense(a, w_ref, b_ref=None):
        y = jnp.dot(a, w_ref[...], preferred_element_type=f32)
        if b_ref is not None:
            y = y + b_ref[...]
        return y

    # mlp1 (last_relu=True)
    h1 = _relu(dense(x, w1a_ref, b1a_ref))
    h1 = _relu(dense(h1, w1b_ref, b1b_ref))           # (ROWS, H1)

    # mlp2 (no relu after last layer)
    m2 = _relu(dense(h1, w2a_ref, b2a_ref))
    m2 = dense(m2, w2b_ref, b2b_ref)                  # (ROWS, H2)

    # global state: block-diagonal sum-pool (MXU) -> mean, project once per state,
    # broadcast back to rows with the transposed block-diagonal matrix (MXU).
    pool = pool_ref[...]                              # (TILE_B, ROWS), ones on block diag
    g = jnp.dot(pool, h1, preferred_element_type=f32) * (1.0 / n_humans)    # (TILE_B, H1)
    g_proj = jnp.dot(g, wa1g_ref[...], preferred_element_type=f32)          # (TILE_B, A1)
    g_rows = jnp.dot(bcast_ref[...], g_proj, preferred_element_type=f32)    # (ROWS, A1)

    # attention MLP -> scores (split weights instead of lane-axis concat)
    a = _relu(dense(h1, wa1h_ref) + g_rows + ba1_ref[...])
    scores = dense(a, wa2_ref, ba2_ref)               # (ROWS, 1)

    # softmax over humans (fixed-length path: mask is all ones)
    s = scores.reshape(tile_b, n_humans)              # tiny relayout
    s_max = jnp.max(s, axis=1, keepdims=True)
    e = jnp.exp(s - s_max)
    denom = jnp.sum(e, axis=1, keepdims=True)
    w = e * pl.reciprocal(denom, approx=True)         # (TILE_B, N)
    w_rows = w.reshape(rows, 1)

    # attention-weighted sum of mlp2 features via the same block-diagonal pool matmul
    wf = jnp.dot(pool, w_rows * m2, preferred_element_type=f32)             # (TILE_B, H2)

    # mlp3 value head: split weights instead of lane-axis concat; lane-dense store
    v = _relu(dense(self_ref[...], w3as_ref) + dense(wf, w3af_ref) + b3a_ref[...])
    out_ref[...] = dense(v, w3bp_ref, b3bp_ref)       # (TILE_B, OUT_PAD), value in col 0


def value_network_forward(state, params, *, tile_b=TILE_B):
    """state: (B, N, INPUT_DIM) float32 -> (B, 1) float32 value."""
    assert tile_b % 8 == 0, "tile_b must be a multiple of 8 sublanes"
    B, N, D = state.shape
    S = SELF_STATE_DIM
    b_pad = pl.cdiv(B, tile_b) * tile_b
    rows_per_tile = tile_b * N

    # Wrapper-side layout plumbing (kept out of the kernel).
    x_flat = jnp.pad(state.reshape(B * N, D), ((0, (b_pad - B) * N), (0, 0)))
    self_state = jnp.pad(state[:, 0, :S], ((0, b_pad - B), (0, 0)))

    # Constant block-diagonal pooling / broadcast matrices for one tile.
    row_batch = jnp.arange(rows_per_tile) // N
    pool = (row_batch[None, :] == jnp.arange(tile_b)[:, None]).astype(jnp.float32)   # (tile_b, rows)
    bcast = pool.T                                                                    # (rows, tile_b)

    # Split / pad weights once in the wrapper.
    h1_dim = params["w1b"].shape[1]
    wa1h = params["wa1"][:h1_dim]
    wa1g = params["wa1"][h1_dim:]
    w3as = params["w3a"][:S]
    w3af = params["w3a"][S:]
    w3bp = jnp.zeros((params["w3b"].shape[0], OUT_PAD), jnp.float32).at[:, :1].set(params["w3b"])
    b3bp = jnp.zeros((1, OUT_PAD), jnp.float32).at[:, :1].set(params["b3b"])

    weights = [params["w1a"], params["b1a"], params["w1b"], params["b1b"],
               params["w2a"], params["b2a"], params["w2b"], params["b2b"],
               wa1h, wa1g, params["ba1"], params["wa2"], params["ba2"],
               w3as, w3af, params["b3a"], w3bp, b3bp]

    def resident(arr):
        # Same block every grid step -> stays resident in VMEM across the grid.
        return pl.BlockSpec(arr.shape, lambda i: (0, 0))

    grid = (b_pad // tile_b,)
    in_specs = ([pl.BlockSpec((rows_per_tile, D), lambda i: (i, 0)),
                 pl.BlockSpec((tile_b, S), lambda i: (i, 0)),
                 resident(pool), resident(bcast)]
                + [resident(w) for w in weights])
    out_specs = pl.BlockSpec((tile_b, OUT_PAD), lambda i: (i, 0))

    kernel = functools.partial(_value_net_kernel, n_humans=N)
    out = pl.pallas_call(
        kernel,
        grid=grid,
        in_specs=in_specs,
        out_specs=out_specs,
        out_shape=jax.ShapeDtypeStruct((b_pad, OUT_PAD), jnp.float32),
        compiler_params=pltpu.CompilerParams(dimension_semantics=("parallel",)),
    )(x_flat, self_state, pool, bcast, *weights)

    return out[:B, :1]


def _init_params(key):
    def lin(k, fan_in, fan_out):
        kw, kb = jax.random.split(k)
        w = 0.1 * jax.random.normal(kw, (fan_in, fan_out), jnp.float32)
        b = 0.1 * jax.random.normal(kb, (1, fan_out), jnp.float32)
        return w, b

    ks = jax.random.split(key, 8)
    p = {}
    p["w1a"], p["b1a"] = lin(ks[0], INPUT_DIM, MLP1_DIMS[0])
    p["w1b"], p["b1b"] = lin(ks[1], MLP1_DIMS[0], MLP1_DIMS[1])
    p["w2a"], p["b2a"] = lin(ks[2], MLP1_DIMS[1], MLP2_DIMS[0])
    p["w2b"], p["b2b"] = lin(ks[3], MLP2_DIMS[0], MLP2_DIMS[1])
    p["wa1"], p["ba1"] = lin(ks[4], 2 * MLP1_DIMS[1], ATTN_DIMS[0])      # with_global_state=True
    p["wa2"], p["ba2"] = lin(ks[5], ATTN_DIMS[0], ATTN_DIMS[1])
    p["w3a"], p["b3a"] = lin(ks[6], MLP2_DIMS[1] + SELF_STATE_DIM, MLP3_DIMS[0])
    p["w3b"], p["b3b"] = lin(ks[7], MLP3_DIMS[0], MLP3_DIMS[1])
    return p


def _reference_forward(state, p):
    """Pure-JAX reference mirroring the PyTorch forward (fixed-length path)."""
    B, N, D = state.shape
    xf = state.reshape(B * N, D)
    h1 = jnp.maximum(xf @ p["w1a"] + p["b1a"], 0.0)
    h1 = jnp.maximum(h1 @ p["w1b"] + p["b1b"], 0.0)
    m2 = jnp.maximum(h1 @ p["w2a"] + p["b2a"], 0.0)
    m2 = m2 @ p["w2b"] + p["b2b"]
    g = jnp.mean(h1.reshape(B, N, -1), axis=1, keepdims=True)
    g = jnp.broadcast_to(g, (B, N, g.shape[-1])).reshape(B * N, -1)
    att_in = jnp.concatenate([h1, g], axis=1)
    a = jnp.maximum(att_in @ p["wa1"] + p["ba1"], 0.0)
    scores = (a @ p["wa2"] + p["ba2"]).reshape(B, N)
    w = jax.nn.softmax(scores, axis=1)
    wf = jnp.sum(w[:, :, None] * m2.reshape(B, N, -1), axis=1)
    joint = jnp.concatenate([state[:, 0, :SELF_STATE_DIM], wf], axis=1)
    v = jnp.maximum(joint @ p["w3a"] + p["b3a"], 0.0)
    return v @ p["w3b"] + p["b3b"]


if __name__ == "__main__":
    key = jax.random.PRNGKey(0)
    k_state, k_params = jax.random.split(key)

    state = jax.random.normal(k_state, (BATCH, N_HUMANS, INPUT_DIM), jnp.float32)
    params = _init_params(k_params)

    value = value_network_forward(state, params)
    value = jax.block_until_ready(value)

    ref = _reference_forward(state, params)
    if value.shape != (BATCH, 1):
        raise RuntimeError(f"unexpected output shape {value.shape}")
    # Tolerance accounts for pl.reciprocal(approx=True) in the softmax normalization.
    if not jnp.allclose(value, ref, atol=5e-3, rtol=5e-3):
        raise RuntimeError("Pallas kernel output mismatch vs JAX reference")

    print("KERNEL_OK")
</pallas_src>

<mosaic_0001>
module attributes {stable_mosaic.version = 11 : i64} {
  func.func @_value_net_kernel(%arg0: i32, %arg1: memref<40x13xf32, #tpu.memory_space<vmem>>, %arg2: memref<8x6xf32, #tpu.memory_space<vmem>>, %arg3: memref<8x40xf32, #tpu.memory_space<vmem>>, %arg4: memref<40x8xf32, #tpu.memory_space<vmem>>, %arg5: memref<13x32xf32, #tpu.memory_space<vmem>>, %arg6: memref<1x32xf32, #tpu.memory_space<vmem>>, %arg7: memref<32x32xf32, #tpu.memory_space<vmem>>, %arg8: memref<1x32xf32, #tpu.memory_space<vmem>>, %arg9: memref<32x32xf32, #tpu.memory_space<vmem>>, %arg10: memref<1x32xf32, #tpu.memory_space<vmem>>, %arg11: memref<32x32xf32, #tpu.memory_space<vmem>>, %arg12: memref<1x32xf32, #tpu.memory_space<vmem>>, %arg13: memref<32x32xf32, #tpu.memory_space<vmem>>, %arg14: memref<32x32xf32, #tpu.memory_space<vmem>>, %arg15: memref<1x32xf32, #tpu.memory_space<vmem>>, %arg16: memref<32x1xf32, #tpu.memory_space<vmem>>, %arg17: memref<1x1xf32, #tpu.memory_space<vmem>>, %arg18: memref<6x32xf32, #tpu.memory_space<vmem>>, %arg19: memref<32x32xf32, #tpu.memory_space<vmem>>, %arg20: memref<1x32xf32, #tpu.memory_space<vmem>>, %arg21: memref<32x128xf32, #tpu.memory_space<vmem>>, %arg22: memref<1x128xf32, #tpu.memory_space<vmem>>, %arg23: memref<8x128xf32, #tpu.memory_space<vmem>>) attributes {dimension_semantics = [#tpu.dimension_semantics<parallel>], iteration_bounds = array<i64: 3>, scalar_prefetch = 0 : i64, scratch_operands = 0 : i64, tpu.core_type = #tpu.core_type<tc>, window_params = [{transform_indices = @transform_0, window_bounds = array<i64: 40, 13>}, {transform_indices = @transform_1, window_bounds = array<i64: 8, 6>}, {pipeline_mode = #tpu.pipeline_mode<synchronous>, transform_indices = @transform_2, window_bounds = array<i64: 8, 40>}, {pipeline_mode = #tpu.pipeline_mode<synchronous>, transform_indices = @transform_3, window_bounds = array<i64: 40, 8>}, {pipeline_mode = #tpu.pipeline_mode<synchronous>, transform_indices = @transform_4, window_bounds = array<i64: 13, 32>}, {pipeline_mode = #tpu.pipeline_mode<synchronous>, transform_indices = @transform_5, window_bounds = array<i64: 1, 32>}, {pipeline_mode = #tpu.pipeline_mode<synchronous>, transform_indices = @transform_6, window_bounds = array<i64: 32, 32>}, {pipeline_mode = #tpu.pipeline_mode<synchronous>, transform_indices = @transform_7, window_bounds = array<i64: 1, 32>}, {pipeline_mode = #tpu.pipeline_mode<synchronous>, transform_indices = @transform_8, window_bounds = array<i64: 32, 32>}, {pipeline_mode = #tpu.pipeline_mode<synchronous>, transform_indices = @transform_9, window_bounds = array<i64: 1, 32>}, {pipeline_mode = #tpu.pipeline_mode<synchronous>, transform_indices = @transform_10, window_bounds = array<i64: 32, 32>}, {pipeline_mode = #tpu.pipeline_mode<synchronous>, transform_indices = @transform_11, window_bounds = array<i64: 1, 32>}, {pipeline_mode = #tpu.pipeline_mode<synchronous>, transform_indices = @transform_12, window_bounds = array<i64: 32, 32>}, {pipeline_mode = #tpu.pipeline_mode<synchronous>, transform_indices = @transform_13, window_bounds = array<i64: 32, 32>}, {pipeline_mode = #tpu.pipeline_mode<synchronous>, transform_indices = @transform_14, window_bounds = array<i64: 1, 32>}, {pipeline_mode = #tpu.pipeline_mode<synchronous>, transform_indices = @transform_15, window_bounds = array<i64: 32, 1>}, {pipeline_mode = #tpu.pipeline_mode<synchronous>, transform_indices = @transform_16, window_bounds = array<i64: 1, 1>}, {pipeline_mode = #tpu.pipeline_mode<synchronous>, transform_indices = @transform_17, window_bounds = array<i64: 6, 32>}, {pipeline_mode = #tpu.pipeline_mode<synchronous>, transform_indices = @transform_18, window_bounds = array<i64: 32, 32>}, {pipeline_mode = #tpu.pipeline_mode<synchronous>, transform_indices = @transform_19, window_bounds = array<i64: 1, 32>}, {pipeline_mode = #tpu.pipeline_mode<synchronous>, transform_indices = @transform_20, window_bounds = array<i64: 32, 128>}, {pipeline_mode = #tpu.pipeline_mode<synchronous>, transform_indices = @transform_21, window_bounds = array<i64: 1, 128>}, {transform_indices = @transform_22, window_bounds = array<i64: 8, 128>}]} {
    %c0 = arith.constant 0 : index
    %c0_0 = arith.constant 0 : index
    %0 = vector.load %arg1[%c0, %c0_0] : memref<40x13xf32, #tpu.memory_space<vmem>>, vector<40x13xf32>
    %c0_1 = arith.constant 0 : index
    %c0_2 = arith.constant 0 : index
    %1 = vector.load %arg5[%c0_1, %c0_2] : memref<13x32xf32, #tpu.memory_space<vmem>>, vector<13x32xf32>
    %cst = arith.constant dense<0.000000e+00> : vector<40x32xf32>
    %2 = tpu.matmul %0, %1, %cst {dimension_numbers = #tpu.dot_dimension_numbers<[1], [0], [0], [1], [0, 0, 1, 1], [], []>} : vector<40x13xf32>, vector<13x32xf32>, vector<40x32xf32> -> vector<40x32xf32>
    %c0_3 = arith.constant 0 : index
    %c0_4 = arith.constant 0 : index
    %3 = vector.load %arg6[%c0_3, %c0_4] : memref<1x32xf32, #tpu.memory_space<vmem>>, vector<1x32xf32>
    %4 = vector.broadcast %3 : vector<1x32xf32> to vector<40x32xf32>
    %5 = arith.addf %2, %4 : vector<40x32xf32>
    %cst_5 = arith.constant 0.000000e+00 : f32
    %6 = vector.broadcast %cst_5 : f32 to vector<40x32xf32>
    %7 = arith.maximumf %5, %6 : vector<40x32xf32>
    %c0_6 = arith.constant 0 : index
    %c0_7 = arith.constant 0 : index
    %8 = vector.load %arg7[%c0_6, %c0_7] : memref<32x32xf32, #tpu.memory_space<vmem>>, vector<32x32xf32>
    %cst_8 = arith.constant dense<0.000000e+00> : vector<40x32xf32>
    %9 = tpu.matmul %7, %8, %cst_8 {dimension_numbers = #tpu.dot_dimension_numbers<[1], [0], [0], [1], [0, 0, 1, 1], [], []>} : vector<40x32xf32>, vector<32x32xf32>, vector<40x32xf32> -> vector<40x32xf32>
    %c0_9 = arith.constant 0 : index
    %c0_10 = arith.constant 0 : index
    %10 = vector.load %arg8[%c0_9, %c0_10] : memref<1x32xf32, #tpu.memory_space<vmem>>, vector<1x32xf32>
    %11 = vector.broadcast %10 : vector<1x32xf32> to vector<40x32xf32>
    %12 = arith.addf %9, %11 : vector<40x32xf32>
    %cst_11 = arith.constant 0.000000e+00 : f32
    %13 = vector.broadcast %cst_11 : f32 to vector<40x32xf32>
    %14 = arith.maximumf %12, %13 : vector<40x32xf32>
    %c0_12 = arith.constant 0 : index
    %c0_13 = arith.constant 0 : index
    %15 = vector.load %arg9[%c0_12, %c0_13] : memref<32x32xf32, #tpu.memory_space<vmem>>, vector<32x32xf32>
    %cst_14 = arith.constant dense<0.000000e+00> : vector<40x32xf32>
    %16 = tpu.matmul %14, %15, %cst_14 {dimension_numbers = #tpu.dot_dimension_numbers<[1], [0], [0], [1], [0, 0, 1, 1], [], []>} : vector<40x32xf32>, vector<32x32xf32>, vector<40x32xf32> -> vector<40x32xf32>
    %c0_15 = arith.constant 0 : index
    %c0_16 = arith.constant 0 : index
    %17 = vector.load %arg10[%c0_15, %c0_16] : memref<1x32xf32, #tpu.memory_space<vmem>>, vector<1x32xf32>
    %18 = vector.broadcast %17 : vector<1x32xf32> to vector<40x32xf32>
    %19 = arith.addf %16, %18 : vector<40x32xf32>
    %cst_17 = arith.constant 0.000000e+00 : f32
    %20 = vector.broadcast %cst_17 : f32 to vector<40x32xf32>
    %21 = arith.maximumf %19, %20 : vector<40x32xf32>
    %c0_18 = arith.constant 0 : index
    %c0_19 = arith.constant 0 : index
    %22 = vector.load %arg11[%c0_18, %c0_19] : memref<32x32xf32, #tpu.memory_space<vmem>>, vector<32x32xf32>
    %cst_20 = arith.constant dense<0.000000e+00> : vector<40x32xf32>
    %23 = tpu.matmul %21, %22, %cst_20 {dimension_numbers = #tpu.dot_dimension_numbers<[1], [0], [0], [1], [0, 0, 1, 1], [], []>} : vector<40x32xf32>, vector<32x32xf32>, vector<40x32xf32> -> vector<40x32xf32>
    %c0_21 = arith.constant 0 : index
    %c0_22 = arith.constant 0 : index
    %24 = vector.load %arg12[%c0_21, %c0_22] : memref<1x32xf32, #tpu.memory_space<vmem>>, vector<1x32xf32>
    %25 = vector.broadcast %24 : vector<1x32xf32> to vector<40x32xf32>
    %26 = arith.addf %23, %25 : vector<40x32xf32>
    %c0_23 = arith.constant 0 : index
    %c0_24 = arith.constant 0 : index
    %27 = vector.load %arg3[%c0_23, %c0_24] : memref<8x40xf32, #tpu.memory_space<vmem>>, vector<8x40xf32>
    %cst_25 = arith.constant dense<0.000000e+00> : vector<8x32xf32>
    %28 = tpu.matmul %27, %14, %cst_25 {dimension_numbers = #tpu.dot_dimension_numbers<[1], [0], [0], [1], [0, 0, 1, 1], [], []>} : vector<8x40xf32>, vector<40x32xf32>, vector<8x32xf32> -> vector<8x32xf32>
    %cst_26 = arith.constant 2.000000e-01 : f32
    %29 = vector.broadcast %cst_26 : f32 to vector<8x32xf32>
    %30 = arith.mulf %28, %29 : vector<8x32xf32>
    %c0_27 = arith.constant 0 : index
    %c0_28 = arith.constant 0 : index
    %31 = vector.load %arg14[%c0_27, %c0_28] : memref<32x32xf32, #tpu.memory_space<vmem>>, vector<32x32xf32>
    %cst_29 = arith.constant dense<0.000000e+00> : vector<8x32xf32>
    %32 = tpu.matmul %30, %31, %cst_29 {dimension_numbers = #tpu.dot_dimension_numbers<[1], [0], [0], [1], [0, 0, 1, 1], [], []>} : vector<8x32xf32>, vector<32x32xf32>, vector<8x32xf32> -> vector<8x32xf32>
    %c0_30 = arith.constant 0 : index
    %c0_31 = arith.constant 0 : index
    %33 = vector.load %arg4[%c0_30, %c0_31] : memref<40x8xf32, #tpu.memory_space<vmem>>, vector<40x8xf32>
    %cst_32 = arith.constant dense<0.000000e+00> : vector<40x32xf32>
    %34 = tpu.matmul %33, %32, %cst_32 {dimension_numbers = #tpu.dot_dimension_numbers<[1], [0], [0], [1], [0, 0, 1, 1], [], []>} : vector<40x8xf32>, vector<8x32xf32>, vector<40x32xf32> -> vector<40x32xf32>
    %c0_33 = arith.constant 0 : index
    %c0_34 = arith.constant 0 : index
    %35 = vector.load %arg13[%c0_33, %c0_34] : memref<32x32xf32, #tpu.memory_space<vmem>>, vector<32x32xf32>
    %cst_35 = arith.constant dense<0.000000e+00> : vector<40x32xf32>
    %36 = tpu.matmul %14, %35, %cst_35 {dimension_numbers = #tpu.dot_dimension_numbers<[1], [0], [0], [1], [0, 0, 1, 1], [], []>} : vector<40x32xf32>, vector<32x32xf32>, vector<40x32xf32> -> vector<40x32xf32>
    %37 = arith.addf %36, %34 : vector<40x32xf32>
    %c0_36 = arith.constant 0 : index
    %c0_37 = arith.constant 0 : index
    %38 = vector.load %arg15[%c0_36, %c0_37] : memref<1x32xf32, #tpu.memory_space<vmem>>, vector<1x32xf32>
    %39 = vector.broadcast %38 : vector<1x32xf32> to vector<40x32xf32>
    %40 = arith.addf %37, %39 : vector<40x32xf32>
    %cst_38 = arith.constant 0.000000e+00 : f32
    %41 = vector.broadcast %cst_38 : f32 to vector<40x32xf32>
    %42 = arith.maximumf %40, %41 : vector<40x32xf32>
    %c0_39 = arith.constant 0 : index
    %c0_40 = arith.constant 0 : index
    %43 = vector.load %arg16[%c0_39, %c0_40] : memref<32x1xf32, #tpu.memory_space<vmem>>, vector<32x1xf32>
    %cst_41 = arith.constant dense<0.000000e+00> : vector<40x1xf32>
    %44 = tpu.matmul %42, %43, %cst_41 {dimension_numbers = #tpu.dot_dimension_numbers<[1], [0], [0], [1], [0, 0, 1, 1], [], []>} : vector<40x32xf32>, vector<32x1xf32>, vector<40x1xf32> -> vector<40x1xf32>
    %c0_42 = arith.constant 0 : index
    %c0_43 = arith.constant 0 : index
    %45 = vector.load %arg17[%c0_42, %c0_43] : memref<1x1xf32, #tpu.memory_space<vmem>>, vector<1x1xf32>
    %46 = vector.broadcast %45 : vector<1x1xf32> to vector<40x1xf32>
    %47 = arith.addf %44, %46 : vector<40x1xf32>
    %48 = vector.shape_cast %47 : vector<40x1xf32> to vector<8x5xf32>
    %cst_44 = arith.constant dense<0xFF800000> : vector<8xf32>
    %49 = vector.multi_reduction <maximumf>, %48, %cst_44 [1] : vector<8x5xf32> to vector<8xf32>
    %50 = vector.shape_cast %49 : vector<8xf32> to vector<8x1xf32>
    %51 = vector.broadcast %50 : vector<8x1xf32> to vector<8x5xf32>
    %52 = arith.subf %48, %51 : vector<8x5xf32>
    %53 = math.exp %52 : vector<8x5xf32>
    %cst_45 = arith.constant dense<0.000000e+00> : vector<8xf32>
    %54 = vector.multi_reduction <add>, %53, %cst_45 [1] : vector<8x5xf32> to vector<8xf32>
    %55 = vector.shape_cast %54 : vector<8xf32> to vector<8x1xf32>
    %56 = tpu.reciprocal %55 {approx = true} : vector<8x1xf32> -> vector<8x1xf32>
    %57 = vector.broadcast %56 : vector<8x1xf32> to vector<8x5xf32>
    %58 = arith.mulf %53, %57 : vector<8x5xf32>
    %59 = vector.shape_cast %58 : vector<8x5xf32> to vector<40x1xf32>
    %60 = vector.broadcast %59 : vector<40x1xf32> to vector<40x32xf32>
    %61 = arith.mulf %60, %26 : vector<40x32xf32>
    %cst_46 = arith.constant dense<0.000000e+00> : vector<8x32xf32>
    %62 = tpu.matmul %27, %61, %cst_46 {dimension_numbers = #tpu.dot_dimension_numbers<[1], [0], [0], [1], [0, 0, 1, 1], [], []>} : vector<8x40xf32>, vector<40x32xf32>, vector<8x32xf32> -> vector<8x32xf32>
    %c0_47 = arith.constant 0 : index
    %c0_48 = arith.constant 0 : index
    %63 = vector.load %arg2[%c0_47, %c0_48] : memref<8x6xf32, #tpu.memory_space<vmem>>, vector<8x6xf32>
    %c0_49 = arith.constant 0 : index
    %c0_50 = arith.constant 0 : index
    %64 = vector.load %arg18[%c0_49, %c0_50] : memref<6x32xf32, #tpu.memory_space<vmem>>, vector<6x32xf32>
    %cst_51 = arith.constant dense<0.000000e+00> : vector<8x32xf32>
    %65 = tpu.matmul %63, %64, %cst_51 {dimension_numbers = #tpu.dot_dimension_numbers<[1], [0], [0], [1], [0, 0, 1, 1], [], []>} : vector<8x6xf32>, vector<6x32xf32>, vector<8x32xf32> -> vector<8x32xf32>
    %c0_52 = arith.constant 0 : index
    %c0_53 = arith.constant 0 : index
    %66 = vector.load %arg19[%c0_52, %c0_53] : memref<32x32xf32, #tpu.memory_space<vmem>>, vector<32x32xf32>
    %cst_54 = arith.constant dense<0.000000e+00> : vector<8x32xf32>
    %67 = tpu.matmul %62, %66, %cst_54 {dimension_numbers = #tpu.dot_dimension_numbers<[1], [0], [0], [1], [0, 0, 1, 1], [], []>} : vector<8x32xf32>, vector<32x32xf32>, vector<8x32xf32> -> vector<8x32xf32>
    %68 = arith.addf %65, %67 : vector<8x32xf32>
    %c0_55 = arith.constant 0 : index
    %c0_56 = arith.constant 0 : index
    %69 = vector.load %arg20[%c0_55, %c0_56] : memref<1x32xf32, #tpu.memory_space<vmem>>, vector<1x32xf32>
    %70 = vector.broadcast %69 : vector<1x32xf32> to vector<8x32xf32>
    %71 = arith.addf %68, %70 : vector<8x32xf32>
    %cst_57 = arith.constant 0.000000e+00 : f32
    %72 = vector.broadcast %cst_57 : f32 to vector<8x32xf32>
    %73 = arith.maximumf %71, %72 : vector<8x32xf32>
    %c0_58 = arith.constant 0 : index
    %c0_59 = arith.constant 0 : index
    %74 = vector.load %arg21[%c0_58, %c0_59] : memref<32x128xf32, #tpu.memory_space<vmem>>, vector<32x128xf32>
    %cst_60 = arith.constant dense<0.000000e+00> : vector<8x128xf32>
    %75 = tpu.matmul %73, %74, %cst_60 {dimension_numbers = #tpu.dot_dimension_numbers<[1], [0], [0], [1], [0, 0, 1, 1], [], []>} : vector<8x32xf32>, vector<32x128xf32>, vector<8x128xf32> -> vector<8x128xf32>
    %c0_61 = arith.constant 0 : index
    %c0_62 = arith.constant 0 : index
    %76 = vector.load %arg22[%c0_61, %c0_62] : memref<1x128xf32, #tpu.memory_space<vmem>>, vector<1x128xf32>
    %77 = vector.broadcast %76 : vector<1x128xf32> to vector<8x128xf32>
    %78 = arith.addf %75, %77 : vector<8x128xf32>
    %c0_63 = arith.constant 0 : index
    %c0_64 = arith.constant 0 : index
    %79 = vector.load %arg23[%c0_63, %c0_64] : memref<8x128xf32, #tpu.memory_space<vmem>>, vector<8x128xf32>
    tpu.vector_store %arg23[%c0_63, %c0_64], %78 {strides = array<i32>} : memref<8x128xf32, #tpu.memory_space<vmem>>, vector<8x128xf32>,
    return
  }
  func.func @transform_0(%arg0: i32) -> (i32, i32) {
    %c0_i32 = arith.constant 0 : i32
    %c0_i32_0 = arith.constant 0 : i32
    return %arg0, %c0_i32 : i32, i32
  }
  func.func @transform_1(%arg0: i32) -> (i32, i32) {
    %c0_i32 = arith.constant 0 : i32
    %c0_i32_0 = arith.constant 0 : i32
    return %arg0, %c0_i32 : i32, i32
  }
  func.func @transform_2(%arg0: i32) -> (i32, i32) {
    %c0_i32 = arith.constant 0 : i32
    %c0_i32_0 = arith.constant 0 : i32
    %c0_i32_1 = arith.constant 0 : i32
    return %c0_i32, %c0_i32_0 : i32, i32
  }
  func.func @transform_3(%arg0: i32) -> (i32, i32) {
    %c0_i32 = arith.constant 0 : i32
    %c0_i32_0 = arith.constant 0 : i32
    %c0_i32_1 = arith.constant 0 : i32
    return %c0_i32, %c0_i32_0 : i32, i32
  }
  func.func @transform_4(%arg0: i32) -> (i32, i32) {
    %c0_i32 = arith.constant 0 : i32
    %c0_i32_0 = arith.constant 0 : i32
    %c0_i32_1 = arith.constant 0 : i32
    return %c0_i32, %c0_i32_0 : i32, i32
  }
  func.func @transform_5(%arg0: i32) -> (i32, i32) {
    %c0_i32 = arith.constant 0 : i32
    %c0_i32_0 = arith.constant 0 : i32
    %c0_i32_1 = arith.constant 0 : i32
    return %c0_i32, %c0_i32_0 : i32, i32
  }
  func.func @transform_6(%arg0: i32) -> (i32, i32) {
    %c0_i32 = arith.constant 0 : i32
    %c0_i32_0 = arith.constant 0 : i32
    %c0_i32_1 = arith.constant 0 : i32
    return %c0_i32, %c0_i32_0 : i32, i32
  }
  func.func @transform_7(%arg0: i32) -> (i32, i32) {
    %c0_i32 = arith.constant 0 : i32
    %c0_i32_0 = arith.constant 0 : i32
    %c0_i32_1 = arith.constant 0 : i32
    return %c0_i32, %c0_i32_0 : i32, i32
  }
  func.func @transform_8(%arg0: i32) -> (i32, i32) {
    %c0_i32 = arith.constant 0 : i32
    %c0_i32_0 = arith.constant 0 : i32
    %c0_i32_1 = arith.constant 0 : i32
    return %c0_i32, %c0_i32_0 : i32, i32
  }
  func.func @transform_9(%arg0: i32) -> (i32, i32) {
    %c0_i32 = arith.constant 0 : i32
    %c0_i32_0 = arith.constant 0 : i32
    %c0_i32_1 = arith.constant 0 : i32
    return %c0_i32, %c0_i32_0 : i32, i32
  }
  func.func @transform_10(%arg0: i32) -> (i32, i32) {
    %c0_i32 = arith.constant 0 : i32
    %c0_i32_0 = arith.constant 0 : i32
    %c0_i32_1 = arith.constant 0 : i32
    return %c0_i32, %c0_i32_0 : i32, i32
  }
  func.func @transform_11(%arg0: i32) -> (i32, i32) {
    %c0_i32 = arith.constant 0 : i32
    %c0_i32_0 = arith.constant 0 : i32
    %c0_i32_1 = arith.constant 0 : i32
    return %c0_i32, %c0_i32_0 : i32, i32
  }
  func.func @transform_12(%arg0: i32) -> (i32, i32) {
    %c0_i32 = arith.constant 0 : i32
    %c0_i32_0 = arith.constant 0 : i32
    %c0_i32_1 = arith.constant 0 : i32
    return %c0_i32, %c0_i32_0 : i32, i32
  }
  func.func @transform_13(%arg0: i32) -> (i32, i32) {
    %c0_i32 = arith.constant 0 : i32
    %c0_i32_0 = arith.constant 0 : i32
    %c0_i32_1 = arith.constant 0 : i32
    return %c0_i32, %c0_i32_0 : i32, i32
  }
  func.func @transform_14(%arg0: i32) -> (i32, i32) {
    %c0_i32 = arith.constant 0 : i32
    %c0_i32_0 = arith.constant 0 : i32
    %c0_i32_1 = arith.constant 0 : i32
    return %c0_i32, %c0_i32_0 : i32, i32
  }
  func.func @transform_15(%arg0: i32) -> (i32, i32) {
    %c0_i32 = arith.constant 0 : i32
    %c0_i32_0 = arith.constant 0 : i32
    %c0_i32_1 = arith.constant 0 : i32
    return %c0_i32, %c0_i32_0 : i32, i32
  }
  func.func @transform_16(%arg0: i32) -> (i32, i32) {
    %c0_i32 = arith.constant 0 : i32
    %c0_i32_0 = arith.constant 0 : i32
    %c0_i32_1 = arith.constant 0 : i32
    return %c0_i32, %c0_i32_0 : i32, i32
  }
  func.func @transform_17(%arg0: i32) -> (i32, i32) {
    %c0_i32 = arith.constant 0 : i32
    %c0_i32_0 = arith.constant 0 : i32
    %c0_i32_1 = arith.constant 0 : i32
    return %c0_i32, %c0_i32_0 : i32, i32
  }
  func.func @transform_18(%arg0: i32) -> (i32, i32) {
    %c0_i32 = arith.constant 0 : i32
    %c0_i32_0 = arith.constant 0 : i32
    %c0_i32_1 = arith.constant 0 : i32
    return %c0_i32, %c0_i32_0 : i32, i32
  }
  func.func @transform_19(%arg0: i32) -> (i32, i32) {
    %c0_i32 = arith.constant 0 : i32
    %c0_i32_0 = arith.constant 0 : i32
    %c0_i32_1 = arith.constant 0 : i32
    return %c0_i32, %c0_i32_0 : i32, i32
  }
  func.func @transform_20(%arg0: i32) -> (i32, i32) {
    %c0_i32 = arith.constant 0 : i32
    %c0_i32_0 = arith.constant 0 : i32
    %c0_i32_1 = arith.constant 0 : i32
    return %c0_i32, %c0_i32_0 : i32, i32
  }
  func.func @transform_21(%arg0: i32) -> (i32, i32) {
    %c0_i32 = arith.constant 0 : i32
    %c0_i32_0 = arith.constant 0 : i32
    %c0_i32_1 = arith.constant 0 : i32
    return %c0_i32, %c0_i32_0 : i32, i32
  }
  func.func @transform_22(%arg0: i32) -> (i32, i32) {
    %c0_i32 = arith.constant 0 : i32
    %c0_i32_0 = arith.constant 0 : i32
    return %arg0, %c0_i32 : i32, i32
  }
}

</mosaic_0001>

<llo_original>
// kernel: tpu_custom_call.1
$region0: #{tpu_custom_call.1}
  #allocation0 [shape = 'u32[]', space=smem, size = 0x4, offset = 0x4, fixed_abs, tag = 'smem constant byte address 0x4 - core index']
  #allocation1 [shape = 'u32[144,128]{1,0:T(1,128)}', space=vmem, size = 0x12000, scoped, tag = 'internal scratch']
  #allocation2 [shape = 'f32[1,1]{1,0:T(1,128)S(1)}', space=vmem, size = 0x200, scoped, tag = 'scoped memory for tpu_custom_call.1']
  %s0 = inlined_call_operand.vmem [shape: f32[120,13], index: 0, kind: input, shape index: {}]
  %s1 = inlined_call_operand.vmem [shape: f32[24,6], index: 1, kind: input, shape index: {}]
  %s2 = inlined_call_operand.vmem [shape: f32[8,40], index: 2, kind: input, shape index: {}]
  %s3 = inlined_call_operand.vmem [shape: f32[40,8], index: 3, kind: input, shape index: {}]
  %s4 = inlined_call_operand.vmem [shape: f32[13,32], index: 4, kind: input, shape index: {}]
  %s5 = inlined_call_operand.vmem [shape: f32[1,32], index: 5, kind: input, shape index: {}]
  %s6 = inlined_call_operand.vmem [shape: f32[32,32], index: 6, kind: input, shape index: {}]
  %s7 = inlined_call_operand.vmem [shape: f32[1,32], index: 7, kind: input, shape index: {}]
  %s8 = inlined_call_operand.vmem [shape: f32[32,32], index: 8, kind: input, shape index: {}]
  %s9 = inlined_call_operand.vmem [shape: f32[1,32], index: 9, kind: input, shape index: {}]
  %s10 = inlined_call_operand.vmem [shape: f32[32,32], index: 10, kind: input, shape index: {}]
  %s11 = inlined_call_operand.vmem [shape: f32[1,32], index: 11, kind: input, shape index: {}]
  %s12 = inlined_call_operand.vmem [shape: f32[32,32], index: 12, kind: input, shape index: {}]
  %s13 = inlined_call_operand.vmem [shape: f32[32,32], index: 13, kind: input, shape index: {}]
  %s14 = inlined_call_operand.vmem [shape: f32[1,32], index: 14, kind: input, shape index: {}]
  %s15 = inlined_call_operand.vmem [shape: f32[32,1], index: 15, kind: input, shape index: {}]
  %s16 = inlined_call_operand.<no memory space> [shape: f32[1,1], index: 16, kind: input, shape index: {}]
  %s17 = inlined_call_operand.vmem [shape: f32[6,32], index: 17, kind: input, shape index: {}]
  %s18 = inlined_call_operand.vmem [shape: f32[32,32], index: 18, kind: input, shape index: {}]
  %s19 = inlined_call_operand.vmem [shape: f32[1,32], index: 19, kind: input, shape index: {}]
  %s20 = inlined_call_operand.vmem [shape: f32[32,128], index: 20, kind: input, shape index: {}]
  %s21 = inlined_call_operand.vmem [shape: f32[1,128], index: 21, kind: input, shape index: {}]
  %s22 = inlined_call_operand.hbm [shape: f32[24,128], index: 22, kind: output, shape index: {}]
  %s23 = sld [smem:[#allocation0]]
  $region121: #{tpu_custom_call.1} parent=0
    _
  %s25 = ssub.s32 1, %s23
  %s26 = scalar_select 0, %s25, %s23
  %v27 = vstv %s16
  %28 = vst [vmem:[#allocation2] sm:$0x1] %v27
  $region1: #{tpu_custom_call.1} parent=0
    #allocation3 [shape = 'u8[8192]{0}', space=vmem, size = 0x2000, scoped, tag = 'output window, operand 0']
    #allocation4 [shape = 's32[2]{0}', space=sflag, size = 0x8, scoped, tag = 'scoped memory for tpu_custom_call.1']
    %29 = vsyncpa [#allocation4], 0
    %s30 = scalar_lea.sflag [#allocation4], 1
    %31 = vsyncpa %s30, 0
    loop: start=0, step=1, limit=5
    $region2: #{tpu_custom_call.1} parent=1 // loop_pre_header
      _
    $region3: #{tpu_custom_call.1} parent=1 // loop_header
      %s33 = sphi 0, %s37
      %p34 = scmp.ge.s32.totalorder %s33, 5
      %s43 = sphi 0, %s45
      %s46 = sphi 0, %s43
      %s47 = sphi 0, %s46
      %s63 = sphi 0, %s47
      %s69 = sphi 0, %s71
      %s72 = sphi 0, %s69
      %s73 = sphi 0, %s72
      %s89 = sphi 0, %s73
      %s93 = sphi 0, %s93
      %s95 = sphi 0, %s93
      %s96 = sphi 0, %s95
      %s110 = sphi 0, %s96
      %s114 = sphi 0, %s114
      %s116 = sphi 0, %s114
      %s117 = sphi 0, %s116
      %s131 = sphi 0, %s117
      %s135 = sphi 0, %s135
      %s137 = sphi 0, %s135
      %s138 = sphi 0, %s137
      %s152 = sphi 0, %s138
      %s156 = sphi 0, %s156
      %s158 = sphi 0, %s156
      %s159 = sphi 0, %s158
      %s173 = sphi 0, %s159
      %s177 = sphi 0, %s177
      %s179 = sphi 0, %s177
      %s180 = sphi 0, %s179
      %s194 = sphi 0, %s180
      %s198 = sphi 0, %s198
      %s200 = sphi 0, %s198
      %s201 = sphi 0, %s200
      %s215 = sphi 0, %s201
      %s219 = sphi 0, %s219
      %s221 = sphi 0, %s219
      %s222 = sphi 0, %s221
      %s236 = sphi 0, %s222
      %s240 = sphi 0, %s240
      %s242 = sphi 0, %s240
      %s243 = sphi 0, %s242
      %s257 = sphi 0, %s243
      %s261 = sphi 0, %s261
      %s263 = sphi 0, %s261
      %s264 = sphi 0, %s263
      %s278 = sphi 0, %s264
      %s282 = sphi 0, %s282
      %s284 = sphi 0, %s282
      %s285 = sphi 0, %s284
      %s299 = sphi 0, %s285
      %s303 = sphi 0, %s303
      %s305 = sphi 0, %s303
      %s306 = sphi 0, %s305
      %s320 = sphi 0, %s306
      %s324 = sphi 0, %s324
      %s326 = sphi 0, %s324
      %s327 = sphi 0, %s326
      %s341 = sphi 0, %s327
      %s345 = sphi 0, %s345
      %s347 = sphi 0, %s345
      %s348 = sphi 0, %s347
      %s362 = sphi 0, %s348
      %s366 = sphi 0, %s366
      %s368 = sphi 0, %s366
      %s369 = sphi 0, %s368
      %s383 = sphi 0, %s369
      %s387 = sphi 0, %s387
      %s389 = sphi 0, %s387
      %s390 = sphi 0, %s389
      %s404 = sphi 0, %s390
      %s408 = sphi 0, %s408
      %s410 = sphi 0, %s408
      %s411 = sphi 0, %s410
      %s425 = sphi 0, %s411
      %s429 = sphi 0, %s429
      %s431 = sphi 0, %s429
      %s432 = sphi 0, %s431
      %s446 = sphi 0, %s432
      %s450 = sphi 0, %s450
      %s452 = sphi 0, %s450
      %s453 = sphi 0, %s452
      %s467 = sphi 0, %s453
      %s471 = sphi 0, %s471
      %s473 = sphi 0, %s471
      %s474 = sphi 0, %s473
      %s488 = sphi 0, %s474
      %s492 = sphi 0, %s492
      %s494 = sphi 0, %s492
      %s495 = sphi 0, %s494
      %s509 = sphi 0, %s495
      %s515 = sphi 0, %s517
      %s518 = sphi 0, %s515
      %s519 = sphi 0, %s518
      %s535 = sphi 0, %s519
    $region4: #{tpu_custom_call.1} parent=1 // loop_header_branch
      %36 = sbr.rel (%p34) target = $region8
    $region5: #{tpu_custom_call.1} parent=1 // loop_body
      %s38 = ssub.s32 %s33, 1
      %s39 = ssub.s32 %s33, 2
      %s40 = sadd.s32 %s33, 1
      %s41 = ssub.s32 %s33, %s40
      %p42 = scmp.eq.s32.totalorder %s41, 0
      %s44 = sadd.s32 %s43, 1
      %s45 = scalar_select %p42, %s43, %s44
      %p48 = pneg %p42
      %p49 = scmp.eq.s32.totalorder %s33, 2
      %p50 = por %p48, %p49
      %p51 = scmp.ne.s32.totalorder %s43, %s46
      %p52 = scmp.eq.s32.totalorder %s33, 0
      %p53 = por %p51, %p52
      %p54 = scmp.ne.s32.totalorder %s43, %s46
      %p55 = scmp.eq.s32.totalorder %s38, 2
      %p56 = por %p54, %p55
      %p57 = scmp.ne.s32.totalorder %s46, %s47
      %p58 = scmp.eq.s32.totalorder %s38, 0
      %p59 = por %p57, %p58
      %p60 = scmp.ne.s32.totalorder %s46, %s47
      %p61 = scmp.eq.s32.totalorder %s39, 2
      %p62 = por %p60, %p61
      %p64 = scmp.ne.s32.totalorder %s47, %s63
      %p65 = scmp.eq.s32.totalorder %s39, 0
      %p66 = por %p64, %p65
      %s67 = ssub.s32 %s33, %s40
      %p68 = scmp.eq.s32.totalorder %s67, 0
      %s70 = sadd.s32 %s69, 1
      %s71 = scalar_select %p68, %s69, %s70
      %p74 = pneg %p68
      %p75 = scmp.eq.s32.totalorder %s33, 2
      %p76 = por %p74, %p75
      %p77 = scmp.ne.s32.totalorder %s69, %s72
      %p78 = scmp.eq.s32.totalorder %s33, 0
      %p79 = por %p77, %p78
      %p80 = scmp.ne.s32.totalorder %s69, %s72
      %p81 = scmp.eq.s32.totalorder %s38, 2
      %p82 = por %p80, %p81
      %p83 = scmp.ne.s32.totalorder %s72, %s73
      %p84 = scmp.eq.s32.totalorder %s38, 0
      %p85 = por %p83, %p84
      %p86 = scmp.ne.s32.totalorder %s72, %s73
      %p87 = scmp.eq.s32.totalorder %s39, 2
      %p88 = por %p86, %p87
      %p90 = scmp.ne.s32.totalorder %s73, %s89
      %p91 = scmp.eq.s32.totalorder %s39, 0
      %p92 = por %p90, %p91
      %s94 = sadd.s32 %s93, 1
      %p97 = scmp.eq.s32.totalorder %s33, 2
      %p98 = scmp.ne.s32.totalorder %s93, %s95
      %p99 = scmp.eq.s32.totalorder %s33, 0
      %p100 = por %p98, %p99
      %p101 = scmp.ne.s32.totalorder %s93, %s95
      %p102 = scmp.eq.s32.totalorder %s38, 2
      %p103 = por %p101, %p102
      %p104 = scmp.ne.s32.totalorder %s95, %s96
      %p105 = scmp.eq.s32.totalorder %s38, 0
      %p106 = por %p104, %p105
      %p107 = scmp.ne.s32.totalorder %s95, %s96
      %p108 = scmp.eq.s32.totalorder %s39, 2
      %p109 = por %p107, %p108
      %p111 = scmp.ne.s32.totalorder %s96, %s110
      %p112 = scmp.eq.s32.totalorder %s39, 0
      %p113 = por %p111, %p112
      %s115 = sadd.s32 %s114, 1
      %p118 = scmp.eq.s32.totalorder %s33, 2
      %p119 = scmp.ne.s32.totalorder %s114, %s116
      %p120 = scmp.eq.s32.totalorder %s33, 0
      %p121 = por %p119, %p120
      %p122 = scmp.ne.s32.totalorder %s114, %s116
      %p123 = scmp.eq.s32.totalorder %s38, 2
      %p124 = por %p122, %p123
      %p125 = scmp.ne.s32.totalorder %s116, %s117
      %p126 = scmp.eq.s32.totalorder %s38, 0
      %p127 = por %p125, %p126
      %p128 = scmp.ne.s32.totalorder %s116, %s117
      %p129 = scmp.eq.s32.totalorder %s39, 2
      %p130 = por %p128, %p129
      %p132 = scmp.ne.s32.totalorder %s117, %s131
      %p133 = scmp.eq.s32.totalorder %s39, 0
      %p134 = por %p132, %p133
      %s136 = sadd.s32 %s135, 1
      %p139 = scmp.eq.s32.totalorder %s33, 2
      %p140 = scmp.ne.s32.totalorder %s135, %s137
      %p141 = scmp.eq.s32.totalorder %s33, 0
      %p142 = por %p140, %p141
      %p143 = scmp.ne.s32.totalorder %s135, %s137
      %p144 = scmp.eq.s32.totalorder %s38, 2
      %p145 = por %p143, %p144
      %p146 = scmp.ne.s32.totalorder %s137, %s138
      %p147 = scmp.eq.s32.totalorder %s38, 0
      %p148 = por %p146, %p147
      %p149 = scmp.ne.s32.totalorder %s137, %s138
      %p150 = scmp.eq.s32.totalorder %s39, 2
      %p151 = por %p149, %p150
      %p153 = scmp.ne.s32.totalorder %s138, %s152
      %p154 = scmp.eq.s32.totalorder %s39, 0
      %p155 = por %p153, %p154
      %s157 = sadd.s32 %s156, 1
      %p160 = scmp.eq.s32.totalorder %s33, 2
      %p161 = scmp.ne.s32.totalorder %s156, %s158
      %p162 = scmp.eq.s32.totalorder %s33, 0
      %p163 = por %p161, %p162
      %p164 = scmp.ne.s32.totalorder %s156, %s158
      %p165 = scmp.eq.s32.totalorder %s38, 2
      %p166 = por %p164, %p165
      %p167 = scmp.ne.s32.totalorder %s158, %s159
      %p168 = scmp.eq.s32.totalorder %s38, 0
      %p169 = por %p167, %p168
      %p170 = scmp.ne.s32.totalorder %s158, %s159
      %p171 = scmp.eq.s32.totalorder %s39, 2
      %p172 = por %p170, %p171
      %p174 = scmp.ne.s32.totalorder %s159, %s173
      %p175 = scmp.eq.s32.totalorder %s39, 0
      %p176 = por %p174, %p175
      %s178 = sadd.s32 %s177, 1
      %p181 = scmp.eq.s32.totalorder %s33, 2
      %p182 = scmp.ne.s32.totalorder %s177, %s179
      %p183 = scmp.eq.s32.totalorder %s33, 0
      %p184 = por %p182, %p183
      %p185 = scmp.ne.s32.totalorder %s177, %s179
      %p186 = scmp.eq.s32.totalorder %s38, 2
      %p187 = por %p185, %p186
      %p188 = scmp.ne.s32.totalorder %s179, %s180
      %p189 = scmp.eq.s32.totalorder %s38, 0
      %p190 = por %p188, %p189
      %p191 = scmp.ne.s32.totalorder %s179, %s180
      %p192 = scmp.eq.s32.totalorder %s39, 2
      %p193 = por %p191, %p192
      %p195 = scmp.ne.s32.totalorder %s180, %s194
      %p196 = scmp.eq.s32.totalorder %s39, 0
      %p197 = por %p195, %p196
      %s199 = sadd.s32 %s198, 1
      %p202 = scmp.eq.s32.totalorder %s33, 2
      %p203 = scmp.ne.s32.totalorder %s198, %s200
      %p204 = scmp.eq.s32.totalorder %s33, 0
      %p205 = por %p203, %p204
      %p206 = scmp.ne.s32.totalorder %s198, %s200
      %p207 = scmp.eq.s32.totalorder %s38, 2
      %p208 = por %p206, %p207
      %p209 = scmp.ne.s32.totalorder %s200, %s201
      %p210 = scmp.eq.s32.totalorder %s38, 0
      %p211 = por %p209, %p210
      %p212 = scmp.ne.s32.totalorder %s200, %s201
      %p213 = scmp.eq.s32.totalorder %s39, 2
      %p214 = por %p212, %p213
      %p216 = scmp.ne.s32.totalorder %s201, %s215
      %p217 = scmp.eq.s32.totalorder %s39, 0
      %p218 = por %p216, %p217
      %s220 = sadd.s32 %s219, 1
      %p223 = scmp.eq.s32.totalorder %s33, 2
      %p224 = scmp.ne.s32.totalorder %s219, %s221
      %p225 = scmp.eq.s32.totalorder %s33, 0
      %p226 = por %p224, %p225
      %p227 = scmp.ne.s32.totalorder %s219, %s221
      %p228 = scmp.eq.s32.totalorder %s38, 2
      %p229 = por %p227, %p228
      %p230 = scmp.ne.s32.totalorder %s221, %s222
      %p231 = scmp.eq.s32.totalorder %s38, 0
      %p232 = por %p230, %p231
      %p233 = scmp.ne.s32.totalorder %s221, %s222
      %p234 = scmp.eq.s32.totalorder %s39, 2
      %p235 = por %p233, %p234
      %p237 = scmp.ne.s32.totalorder %s222, %s236
      %p238 = scmp.eq.s32.totalorder %s39, 0
      %p239 = por %p237, %p238
      %s241 = sadd.s32 %s240, 1
      %p244 = scmp.eq.s32.totalorder %s33, 2
      %p245 = scmp.ne.s32.totalorder %s240, %s242
      %p246 = scmp.eq.s32.totalorder %s33, 0
      %p247 = por %p245, %p246
      %p248 = scmp.ne.s32.totalorder %s240, %s242
      %p249 = scmp.eq.s32.totalorder %s38, 2
      %p250 = por %p248, %p249
      %p251 = scmp.ne.s32.totalorder %s242, %s243
      %p252 = scmp.eq.s32.totalorder %s38, 0
      %p253 = por %p251, %p252
      %p254 = scmp.ne.s32.totalorder %s242, %s243
      %p255 = scmp.eq.s32.totalorder %s39, 2
      %p256 = por %p254, %p255
      %p258 = scmp.ne.s32.totalorder %s243, %s257
      %p259 = scmp.eq.s32.totalorder %s39, 0
      %p260 = por %p258, %p259
      %s262 = sadd.s32 %s261, 1
      %p265 = scmp.eq.s32.totalorder %s33, 2
      %p266 = scmp.ne.s32.totalorder %s261, %s263
      %p267 = scmp.eq.s32.totalorder %s33, 0
      %p268 = por %p266, %p267
      %p269 = scmp.ne.s32.totalorder %s261, %s263
      %p270 = scmp.eq.s32.totalorder %s38, 2
      %p271 = por %p269, %p270
      %p272 = scmp.ne.s32.totalorder %s263, %s264
      %p273 = scmp.eq.s32.totalorder %s38, 0
      %p274 = por %p272, %p273
      %p275 = scmp.ne.s32.totalorder %s263, %s264
      %p276 = scmp.eq.s32.totalorder %s39, 2
      %p277 = por %p275, %p276
      %p279 = scmp.ne.s32.totalorder %s264, %s278
      %p280 = scmp.eq.s32.totalorder %s39, 0
      %p281 = por %p279, %p280
      %s283 = sadd.s32 %s282, 1
      %p286 = scmp.eq.s32.totalorder %s33, 2
      %p287 = scmp.ne.s32.totalorder %s282, %s284
      %p288 = scmp.eq.s32.totalorder %s33, 0
      %p289 = por %p287, %p288
      %p290 = scmp.ne.s32.totalorder %s282, %s284
      %p291 = scmp.eq.s32.totalorder %s38, 2
      %p292 = por %p290, %p291
      %p293 = scmp.ne.s32.totalorder %s284, %s285
      %p294 = scmp.eq.s32.totalorder %s38, 0
      %p295 = por %p293, %p294
      %p296 = scmp.ne.s32.totalorder %s284, %s285
      %p297 = scmp.eq.s32.totalorder %s39, 2
      %p298 = por %p296, %p297
      %p300 = scmp.ne.s32.totalorder %s285, %s299
      %p301 = scmp.eq.s32.totalorder %s39, 0
      %p302 = por %p300, %p301
      %s304 = sadd.s32 %s303, 1
      %p307 = scmp.eq.s32.totalorder %s33, 2
      %p308 = scmp.ne.s32.totalorder %s303, %s305
      %p309 = scmp.eq.s32.totalorder %s33, 0
      %p310 = por %p308, %p309
      %p311 = scmp.ne.s32.totalorder %s303, %s305
      %p312 = scmp.eq.s32.totalorder %s38, 2
      %p313 = por %p311, %p312
      %p314 = scmp.ne.s32.totalorder %s305, %s306
      %p315 = scmp.eq.s32.totalorder %s38, 0
      %p316 = por %p314, %p315
      %p317 = scmp.ne.s32.totalorder %s305, %s306
      %p318 = scmp.eq.s32.totalorder %s39, 2
      %p319 = por %p317, %p318
      %p321 = scmp.ne.s32.totalorder %s306, %s320
      %p322 = scmp.eq.s32.totalorder %s39, 0
      %p323 = por %p321, %p322
      %s325 = sadd.s32 %s324, 1
      %p328 = scmp.eq.s32.totalorder %s33, 2
      %p329 = scmp.ne.s32.totalorder %s324, %s326
      %p330 = scmp.eq.s32.totalorder %s33, 0
      %p331 = por %p329, %p330
      %p332 = scmp.ne.s32.totalorder %s324, %s326
      %p333 = scmp.eq.s32.totalorder %s38, 2
      %p334 = por %p332, %p333
      %p335 = scmp.ne.s32.totalorder %s326, %s327
      %p336 = scmp.eq.s32.totalorder %s38, 0
      %p337 = por %p335, %p336
      %p338 = scmp.ne.s32.totalorder %s326, %s327
      %p339 = scmp.eq.s32.totalorder %s39, 2
      %p340 = por %p338, %p339
      %p342 = scmp.ne.s32.totalorder %s327, %s341
      %p343 = scmp.eq.s32.totalorder %s39, 0
      %p344 = por %p342, %p343
      %s346 = sadd.s32 %s345, 1
      %p349 = scmp.eq.s32.totalorder %s33, 2
      %p350 = scmp.ne.s32.totalorder %s345, %s347
      %p351 = scmp.eq.s32.totalorder %s33, 0
      %p352 = por %p350, %p351
      %p353 = scmp.ne.s32.totalorder %s345, %s347
      %p354 = scmp.eq.s32.totalorder %s38, 2
      %p355 = por %p353, %p354
      %p356 = scmp.ne.s32.totalorder %s347, %s348
      %p357 = scmp.eq.s32.totalorder %s38, 0
      %p358 = por %p356, %p357
      %p359 = scmp.ne.s32.totalorder %s347, %s348
      %p360 = scmp.eq.s32.totalorder %s39, 2
      %p361 = por %p359, %p360
      %p363 = scmp.ne.s32.totalorder %s348, %s362
      %p364 = scmp.eq.s32.totalorder %s39, 0
      %p365 = por %p363, %p364
      %s367 = sadd.s32 %s366, 1
      %p370 = scmp.eq.s32.totalorder %s33, 2
      %p371 = scmp.ne.s32.totalorder %s366, %s368
      %p372 = scmp.eq.s32.totalorder %s33, 0
      %p373 = por %p371, %p372
      %p374 = scmp.ne.s32.totalorder %s366, %s368
      %p375 = scmp.eq.s32.totalorder %s38, 2
      %p376 = por %p374, %p375
      %p377 = scmp.ne.s32.totalorder %s368, %s369
      %p378 = scmp.eq.s32.totalorder %s38, 0
      %p379 = por %p377, %p378
      %p380 = scmp.ne.s32.totalorder %s368, %s369
      %p381 = scmp.eq.s32.totalorder %s39, 2
      %p382 = por %p380, %p381
      %p384 = scmp.ne.s32.totalorder %s369, %s383
      %p385 = scmp.eq.s32.totalorder %s39, 0
      %p386 = por %p384, %p385
      %s388 = sadd.s32 %s387, 1
      %p391 = scmp.eq.s32.totalorder %s33, 2
      %p392 = scmp.ne.s32.totalorder %s387, %s389
      %p393 = scmp.eq.s32.totalorder %s33, 0
      %p394 = por %p392, %p393
      %p395 = scmp.ne.s32.totalorder %s387, %s389
      %p396 = scmp.eq.s32.totalorder %s38, 2
      %p397 = por %p395, %p396
      %p398 = scmp.ne.s32.totalorder %s389, %s390
      %p399 = scmp.eq.s32.totalorder %s38, 0
      %p400 = por %p398, %p399
      %p401 = scmp.ne.s32.totalorder %s389, %s390
      %p402 = scmp.eq.s32.totalorder %s39, 2
      %p403 = por %p401, %p402
      %p405 = scmp.ne.s32.totalorder %s390, %s404
      %p406 = scmp.eq.s32.totalorder %s39, 0
      %p407 = por %p405, %p406
      %s409 = sadd.s32 %s408, 1
      %p412 = scmp.eq.s32.totalorder %s33, 2
      %p413 = scmp.ne.s32.totalorder %s408, %s410
      %p414 = scmp.eq.s32.totalorder %s33, 0
      %p415 = por %p413, %p414
      %p416 = scmp.ne.s32.totalorder %s408, %s410
      %p417 = scmp.eq.s32.totalorder %s38, 2
      %p418 = por %p416, %p417
      %p419 = scmp.ne.s32.totalorder %s410, %s411
      %p420 = scmp.eq.s32.totalorder %s38, 0
      %p421 = por %p419, %p420
      %p422 = scmp.ne.s32.totalorder %s410, %s411
      %p423 = scmp.eq.s32.totalorder %s39, 2
      %p424 = por %p422, %p423
      %p426 = scmp.ne.s32.totalorder %s411, %s425
      %p427 = scmp.eq.s32.totalorder %s39, 0
      %p428 = por %p426, %p427
      %s430 = sadd.s32 %s429, 1
      %p433 = scmp.eq.s32.totalorder %s33, 2
      %p434 = scmp.ne.s32.totalorder %s429, %s431
      %p435 = scmp.eq.s32.totalorder %s33, 0
      %p436 = por %p434, %p435
      %p437 = scmp.ne.s32.totalorder %s429, %s431
      %p438 = scmp.eq.s32.totalorder %s38, 2
      %p439 = por %p437, %p438
      %p440 = scmp.ne.s32.totalorder %s431, %s432
      %p441 = scmp.eq.s32.totalorder %s38, 0
      %p442 = por %p440, %p441
      %p443 = scmp.ne.s32.totalorder %s431, %s432
      %p444 = scmp.eq.s32.totalorder %s39, 2
      %p445 = por %p443, %p444
      %p447 = scmp.ne.s32.totalorder %s432, %s446
      %p448 = scmp.eq.s32.totalorder %s39, 0
      %p449 = por %p447, %p448
      %s451 = sadd.s32 %s450, 1
      %p454 = scmp.eq.s32.totalorder %s33, 2
      %p455 = scmp.ne.s32.totalorder %s450, %s452
      %p456 = scmp.eq.s32.totalorder %s33, 0
      %p457 = por %p455, %p456
      %p458 = scmp.ne.s32.totalorder %s450, %s452
      %p459 = scmp.eq.s32.totalorder %s38, 2
      %p460 = por %p458, %p459
      %p461 = scmp.ne.s32.totalorder %s452, %s453
      %p462 = scmp.eq.s32.totalorder %s38, 0
      %p463 = por %p461, %p462
      %p464 = scmp.ne.s32.totalorder %s452, %s453
      %p465 = scmp.eq.s32.totalorder %s39, 2
      %p466 = por %p464, %p465
      %p468 = scmp.ne.s32.totalorder %s453, %s467
      %p469 = scmp.eq.s32.totalorder %s39, 0
      %p470 = por %p468, %p469
      %s472 = sadd.s32 %s471, 1
      %p475 = scmp.eq.s32.totalorder %s33, 2
      %p476 = scmp.ne.s32.totalorder %s471, %s473
      %p477 = scmp.eq.s32.totalorder %s33, 0
      %p478 = por %p476, %p477
      %p479 = scmp.ne.s32.totalorder %s471, %s473
      %p480 = scmp.eq.s32.totalorder %s38, 2
      %p481 = por %p479, %p480
      %p482 = scmp.ne.s32.totalorder %s473, %s474
      %p483 = scmp.eq.s32.totalorder %s38, 0
      %p484 = por %p482, %p483
      %p485 = scmp.ne.s32.totalorder %s473, %s474
      %p486 = scmp.eq.s32.totalorder %s39, 2
      %p487 = por %p485, %p486
      %p489 = scmp.ne.s32.totalorder %s474, %s488
      %p490 = scmp.eq.s32.totalorder %s39, 0
      %p491 = por %p489, %p490
      %s493 = sadd.s32 %s492, 1
      %p496 = scmp.eq.s32.totalorder %s33, 2
      %p497 = scmp.ne.s32.totalorder %s492, %s494
      %p498 = scmp.eq.s32.totalorder %s33, 0
      %p499 = por %p497, %p498
      %p500 = scmp.ne.s32.totalorder %s492, %s494
      %p501 = scmp.eq.s32.totalorder %s38, 2
      %p502 = por %p500, %p501
      %p503 = scmp.ne.s32.totalorder %s494, %s495
      %p504 = scmp.eq.s32.totalorder %s38, 0
      %p505 = por %p503, %p504
      %p506 = scmp.ne.s32.totalorder %s494, %s495
      %p507 = scmp.eq.s32.totalorder %s39, 2
      %p508 = por %p506, %p507
      %p510 = scmp.ne.s32.totalorder %s495, %s509
      %p511 = scmp.eq.s32.totalorder %s39, 0
      %p512 = por %p510, %p511
      %s513 = ssub.s32 %s33, %s40
      %p514 = scmp.eq.s32.totalorder %s513, 0
      %s516 = sadd.s32 %s515, 1
      %s517 = scalar_select %p514, %s515, %s516
      %p520 = pneg %p514
      %p521 = scmp.eq.s32.totalorder %s33, 2
      %p522 = por %p520, %p521
      %p523 = scmp.ne.s32.totalorder %s515, %s518
      %p524 = scmp.eq.s32.totalorder %s33, 0
      %p525 = por %p523, %p524
      %p526 = scmp.ne.s32.totalorder %s515, %s518
      %p527 = scmp.eq.s32.totalorder %s38, 2
      %p528 = por %p526, %p527
      %p529 = scmp.ne.s32.totalorder %s518, %s519
      %p530 = scmp.eq.s32.totalorder %s38, 0
      %p531 = por %p529, %p530
      %p532 = scmp.ne.s32.totalorder %s518, %s519
      %p533 = scmp.eq.s32.totalorder %s39, 2
      %p534 = por %p532, %p533
      %p536 = scmp.ne.s32.totalorder %s519, %s535
      %p537 = scmp.eq.s32.totalorder %s39, 0
      %p538 = por %p536, %p537
      %p539 = scmp.le.s32.totalorder 1, %s33
      %p540 = scmp.lt.s32.totalorder %s33, 4
      %p541 = pnand %p539, %p540
      %p542 = pneg %p541
      // Predicated region
      $region9: #{tpu_custom_call.1} parent=5 // pred_check
        _
      $region10: #{tpu_custom_call.1} parent=5 // pred_check_branch
        %544 = sbr.rel (%p541) target = $region12
      $region11: #{tpu_custom_call.1} parent=5 // pred_region
        %s545 = ssub.s32 %s33, 1
        // Predicated region
        $region13: #{tpu_custom_call.1} parent=11 // pred_check
          %p546 = pneg %p106
        $region14: #{tpu_custom_call.1} parent=11 // pred_check_branch
          %548 = sbr.rel (%p546) target = $region16
        $region15: #{tpu_custom_call.1} parent=11 // pred_region
          _
        $region16: #{tpu_custom_call.1} parent=11 // pred_fallthru
          _
        // Predicated region
        $region17: #{tpu_custom_call.1} parent=11 // pred_check
          %p549 = pneg %p127
        $region18: #{tpu_custom_call.1} parent=11 // pred_check_branch
          %551 = sbr.rel (%p549) target = $region20
        $region19: #{tpu_custom_call.1} parent=11 // pred_region
          _
        $region20: #{tpu_custom_call.1} parent=11 // pred_fallthru
          _
        // Predicated region
        $region21: #{tpu_custom_call.1} parent=11 // pred_check
          %p552 = pneg %p148
        $region22: #{tpu_custom_call.1} parent=11 // pred_check_branch
          %554 = sbr.rel (%p552) target = $region24
        $region23: #{tpu_custom_call.1} parent=11 // pred_region
          _
        $region24: #{tpu_custom_call.1} parent=11 // pred_fallthru
          _
        // Predicated region
        $region25: #{tpu_custom_call.1} parent=11 // pred_check
          %p555 = pneg %p169
        $region26: #{tpu_custom_call.1} parent=11 // pred_check_branch
          %557 = sbr.rel (%p555) target = $region28
        $region27: #{tpu_custom_call.1} parent=11 // pred_region
          _
        $region28: #{tpu_custom_call.1} parent=11 // pred_fallthru
          _
        // Predicated region
        $region29: #{tpu_custom_call.1} parent=11 // pred_check
          %p558 = pneg %p190
        $region30: #{tpu_custom_call.1} parent=11 // pred_check_branch
          %560 = sbr.rel (%p558) target = $region32
        $region31: #{tpu_custom_call.1} parent=11 // pred_region
          _
        $region32: #{tpu_custom_call.1} parent=11 // pred_fallthru
          _
        // Predicated region
        $region33: #{tpu_custom_call.1} parent=11 // pred_check
          %p561 = pneg %p211
        $region34: #{tpu_custom_call.1} parent=11 // pred_check_branch
          %563 = sbr.rel (%p561) target = $region36
        $region35: #{tpu_custom_call.1} parent=11 // pred_region
          _
        $region36: #{tpu_custom_call.1} parent=11 // pred_fallthru
          _
        // Predicated region
        $region37: #{tpu_custom_call.1} parent=11 // pred_check
          %p564 = pneg %p232
        $region38: #{tpu_custom_call.1} parent=11 // pred_check_branch
          %566 = sbr.rel (%p564) target = $region40
        $region39: #{tpu_custom_call.1} parent=11 // pred_region
          _
        $region40: #{tpu_custom_call.1} parent=11 // pred_fallthru
          _
        // Predicated region
        $region41: #{tpu_custom_call.1} parent=11 // pred_check
          %p567 = pneg %p253
        $region42: #{tpu_custom_call.1} parent=11 // pred_check_branch
          %569 = sbr.rel (%p567) target = $region44
        $region43: #{tpu_custom_call.1} parent=11 // pred_region
          _
        $region44: #{tpu_custom_call.1} parent=11 // pred_fallthru
          _
        // Predicated region
        $region45: #{tpu_custom_call.1} parent=11 // pred_check
          %p570 = pneg %p274
        $region46: #{tpu_custom_call.1} parent=11 // pred_check_branch
          %572 = sbr.rel (%p570) target = $region48
        $region47: #{tpu_custom_call.1} parent=11 // pred_region
          _
        $region48: #{tpu_custom_call.1} parent=11 // pred_fallthru
          _
        // Predicated region
        $region49: #{tpu_custom_call.1} parent=11 // pred_check
          %p573 = pneg %p295
        $region50: #{tpu_custom_call.1} parent=11 // pred_check_branch
          %575 = sbr.rel (%p573) target = $region52
        $region51: #{tpu_custom_call.1} parent=11 // pred_region
          _
        $region52: #{tpu_custom_call.1} parent=11 // pred_fallthru
          _
        // Predicated region
        $region53: #{tpu_custom_call.1} parent=11 // pred_check
          %p576 = pneg %p316
        $region54: #{tpu_custom_call.1} parent=11 // pred_check_branch
          %578 = sbr.rel (%p576) target = $region56
        $region55: #{tpu_custom_call.1} parent=11 // pred_region
          _
        $region56: #{tpu_custom_call.1} parent=11 // pred_fallthru
          _
        // Predicated region
        $region57: #{tpu_custom_call.1} parent=11 // pred_check
          %p579 = pneg %p337
        $region58: #{tpu_custom_call.1} parent=11 // pred_check_branch
          %581 = sbr.rel (%p579) target = $region60
        $region59: #{tpu_custom_call.1} parent=11 // pred_region
          _
        $region60: #{tpu_custom_call.1} parent=11 // pred_fallthru
          _
        // Predicated region
        $region61: #{tpu_custom_call.1} parent=11 // pred_check
          %p582 = pneg %p358
        $region62: #{tpu_custom_call.1} parent=11 // pred_check_branch
          %584 = sbr.rel (%p582) target = $region64
        $region63: #{tpu_custom_call.1} parent=11 // pred_region
          _
        $region64: #{tpu_custom_call.1} parent=11 // pred_fallthru
          _
        // Predicated region
        $region65: #{tpu_custom_call.1} parent=11 // pred_check
          %p585 = pneg %p379
        $region66: #{tpu_custom_call.1} parent=11 // pred_check_branch
          %587 = sbr.rel (%p585) target = $region68
        $region67: #{tpu_custom_call.1} parent=11 // pred_region
          _
        $region68: #{tpu_custom_call.1} parent=11 // pred_fallthru
          _
        // Predicated region
        $region69: #{tpu_custom_call.1} parent=11 // pred_check
          %p588 = pneg %p400
        $region70: #{tpu_custom_call.1} parent=11 // pred_check_branch
          %590 = sbr.rel (%p588) target = $region72
        $region71: #{tpu_custom_call.1} parent=11 // pred_region
          _
        $region72: #{tpu_custom_call.1} parent=11 // pred_fallthru
          _
        // Predicated region
        $region73: #{tpu_custom_call.1} parent=11 // pred_check
          %p591 = pneg %p421
        $region74: #{tpu_custom_call.1} parent=11 // pred_check_branch
          %593 = sbr.rel (%p591) target = $region76
        $region75: #{tpu_custom_call.1} parent=11 // pred_region
          _
        $region76: #{tpu_custom_call.1} parent=11 // pred_fallthru
          _
        // Predicated region
        $region77: #{tpu_custom_call.1} parent=11 // pred_check
          %p594 = pneg %p442
        $region78: #{tpu_custom_call.1} parent=11 // pred_check_branch
          %596 = sbr.rel (%p594) target = $region80
        $region79: #{tpu_custom_call.1} parent=11 // pred_region
          _
        $region80: #{tpu_custom_call.1} parent=11 // pred_fallthru
          _
        // Predicated region
        $region81: #{tpu_custom_call.1} parent=11 // pred_check
          %p597 = pneg %p463
        $region82: #{tpu_custom_call.1} parent=11 // pred_check_branch
          %599 = sbr.rel (%p597) target = $region84
        $region83: #{tpu_custom_call.1} parent=11 // pred_region
          _
        $region84: #{tpu_custom_call.1} parent=11 // pred_fallthru
          _
        // Predicated region
        $region85: #{tpu_custom_call.1} parent=11 // pred_check
          %p600 = pneg %p484
        $region86: #{tpu_custom_call.1} parent=11 // pred_check_branch
          %602 = sbr.rel (%p600) target = $region88
        $region87: #{tpu_custom_call.1} parent=11 // pred_region
          _
        $region88: #{tpu_custom_call.1} parent=11 // pred_fallthru
          _
        // Predicated region
        $region89: #{tpu_custom_call.1} parent=11 // pred_check
          %p603 = pneg %p505
        $region90: #{tpu_custom_call.1} parent=11 // pred_check_branch
          %605 = sbr.rel (%p603) target = $region92
        $region91: #{tpu_custom_call.1} parent=11 // pred_region
          _
        $region92: #{tpu_custom_call.1} parent=11 // pred_fallthru
          _
      $region12: #{tpu_custom_call.1} parent=5 // pred_fallthru
        _
      %p606 = scmp.lt.s32.totalorder %s33, 3
      // Predicated region
      $region93: #{tpu_custom_call.1} parent=5 // pred_check
        %p607 = pneg %p606
      $region94: #{tpu_custom_call.1} parent=5 // pred_check_branch
        %609 = sbr.rel (%p607) target = $region96
      $region95: #{tpu_custom_call.1} parent=5 // pred_region
        // Predicated region
        $region97: #{tpu_custom_call.1} parent=95 // pred_check
          %p610 = pneg %p53
        $region98: #{tpu_custom_call.1} parent=95 // pred_check_branch
          %612 = sbr.rel (%p610) target = $region100
        $region99: #{tpu_custom_call.1} parent=95 // pred_region
          %s613 = smul.u32 5, %s33
          %p614 = scmp.lt.s32.totalorder %s613, 14
          %s615 = scalar_select %p614, %s613, 14
          %s616 = smul.addr %s615, 8
          %s617 = scalar_lea.vmem %s0, %s616
          %s618 = smul.u32 5, %s33
        $region100: #{tpu_custom_call.1} parent=95 // pred_fallthru
          _
        // Predicated region
        $region101: #{tpu_custom_call.1} parent=95 // pred_check
          %p619 = pneg %p79
        $region102: #{tpu_custom_call.1} parent=95 // pred_check_branch
          %621 = sbr.rel (%p619) target = $region104
        $region103: #{tpu_custom_call.1} parent=95 // pred_region
          %p622 = scmp.lt.s32.totalorder %s33, 2
          %s623 = scalar_select %p622, %s33, 2
          %s624 = smul.addr %s623, 8
          %s625 = scalar_lea.vmem %s1, %s624
        $region104: #{tpu_custom_call.1} parent=95 // pred_fallthru
          _
      $region96: #{tpu_custom_call.1} parent=5 // pred_fallthru
        _
      %p626 = scmp.le.s32.totalorder 1, %s33
      %p627 = scmp.lt.s32.totalorder %s33, 4
      %p628 = pnand %p626, %p627
      %p629 = pneg %p628
      // Predicated region
      $region105: #{tpu_custom_call.1} parent=5 // pred_check
        _
      $region106: #{tpu_custom_call.1} parent=5 // pred_check_branch
        %631 = sbr.rel (%p628) target = $region108
      $region107: #{tpu_custom_call.1} parent=5 // pred_region
        %s632 = ssub.s32 %s33, 1
        %s633 = smul.u32 5, %s38
        %p634 = scmp.lt.s32.totalorder %s633, 14
        %s635 = scalar_select %p634, %s633, 14
        %s636 = smul.addr %s635, 8
        %s637 = scalar_lea.vmem %s0, %s636
        %p638 = pneg %p59
        %p639 = pneg %p56
        %p640 = scmp.lt.s32.totalorder %s38, 2
        %s641 = scalar_select %p640, %s38, 2
        %s642 = smul.addr %s641, 8
        %s643 = scalar_lea.vmem %s1, %s642
        %p644 = pneg %p85
        %p645 = pneg %p82
        %p646 = pneg %p106
        %p647 = pneg %p103
        %p648 = pneg %p127
        %p649 = pneg %p124
        %p650 = pneg %p148
        %p651 = pneg %p145
        %p652 = pneg %p169
        %p653 = pneg %p166
        %p654 = pneg %p190
        %p655 = pneg %p187
        %p656 = pneg %p211
        %p657 = pneg %p208
        %p658 = pneg %p232
        %p659 = pneg %p229
        %p660 = pneg %p253
        %p661 = pneg %p250
        %p662 = pneg %p274
        %p663 = pneg %p271
        %p664 = pneg %p295
        %p665 = pneg %p292
        %p666 = pneg %p316
        %p667 = pneg %p313
        %p668 = pneg %p337
        %p669 = pneg %p334
        %p670 = pneg %p358
        %p671 = pneg %p355
        %p672 = pneg %p379
        %p673 = pneg %p376
        %p674 = pneg %p400
        %p675 = pneg %p397
        %p676 = pneg %p421
        %p677 = pneg %p418
        %p678 = pneg %p442
        %p679 = pneg %p439
        %p680 = pneg %p463
        %p681 = pneg %p460
        %p682 = pneg %p484
        %p683 = pneg %p481
        %p684 = pneg %p505
        %p685 = pneg %p502
        %p686 = pneg %p531
        %p687 = pneg %p528
        %s688 = sand.u32 %s518, 1
        %s689 = scalar_lea.sflag [#allocation4], %s688
        %s690 = sand.u32 %s518, 1
        %s691 = smul.addr %s690, 8
        %s692 = scalar_lea.vmem [#allocation3], %s691
        %s693 = smul.u32 5, %s38
        %p694 = scmp.lt.s32.totalorder %s693, 14
        %s695 = scalar_select %p694, %s693, 14
        %s696 = smul.addr %s695, 8
        %s697 = scalar_lea.vmem %s0, %s696
        %s698 = smul.u32 5, %s38
        %p699 = scmp.lt.s32.totalorder %s38, 2
        %s700 = scalar_select %p699, %s38, 2
        %s701 = smul.addr %s700, 8
        %s702 = scalar_lea.vmem %s1, %s701
        %v703 = vld [vmem:[%s697] sm:$0xff]
        %v704 = vld [vmem:[%s697 + $0x8] sm:$0xff]
        %v705 = vld [vmem:[%s697 + $0x10] sm:$0xff]
        %v706 = vld [vmem:[%s697 + $0x18] sm:$0xff]
        %v707 = vld [vmem:[%s697 + $0x20] sm:$0xff]
        %v708 = vld [vmem:[%s4] sm:$0xff]
        %v709 = vld [vmem:[%s4 + $0x8] sm:$0x1f]
        %v710 = vld [vmem:[%s5] sm:$0x1]
        %v712 = vlaneseq
        %v713 = vshrl.u32 %v712, 7
        %v714 = vsub.s32 0, %v713
        %v715 = vrot.slane %v710, %v714
        %vm717 = vcmask 105472
        %v719 = vsel %vm717, %v703, 0
        %v722 = vsel %vm717, %v704, 0
        %v725 = vsel %vm717, %v705, 0
        %v728 = vsel %vm717, %v706, 0
        %v731 = vsel %vm717, %v707, 0
        %vm733 = vcmask 1044480
        %v735 = vsel %vm733, %v709, 0
        %737 = vmatprep.subr.mxu0 0.0
        %738 = vmatpush1.msra.mxu0 %v708
        %739 = vmatprep.subr.mxu0 0.0
        %740 = vmatpush1.msra.mxu0 %v735
        %741 = vmatprep.subr.mxu0 0.0
        %742 = vmatpush1.msra.mxu0 0.0
        %743 = vmatprep.subr.mxu0 0.0
        %744 = vmatpush1.msra.mxu0 0.0
        %745 = vmatprep.subr.mxu0 0.0
        %746 = vmatpush1.msra.mxu0 0.0
        %747 = vmatprep.subr.mxu0 0.0
        %748 = vmatpush1.msra.mxu0 0.0
        %749 = vmatprep.subr.mxu0 0.0
        %750 = vmatpush1.msra.mxu0 0.0
        %751 = vmatprep.subr.mxu0 0.0
        %752 = vmatpush1.msra.mxu0 0.0
        %753 = vmatprep.subr.mxu0 0.0
        %754 = vmatpush1.msra.mxu0 0.0
        %755 = vmatprep.subr.mxu0 0.0
        %756 = vmatpush1.msra.mxu0 0.0
        %757 = vmatprep.subr.mxu0 0.0
        %758 = vmatpush1.msra.mxu0 0.0
        %759 = vmatprep.subr.mxu0 0.0
        %760 = vmatpush1.msra.mxu0 0.0
        %761 = vmatprep.subr.mxu0 0.0
        %762 = vmatpush1.msra.mxu0 0.0
        %763 = vmatprep.subr.mxu0 0.0
        %764 = vmatpush1.msra.mxu0 0.0
        %765 = vmatprep.subr.mxu0 0.0
        %766 = vmatpush1.msra.mxu0 0.0
        %767 = vmatprep.subr.mxu0 0.0
        %768 = vmatpush1.msra.mxu0 0.0
        %769 = vmatprep.subr.mxu0 0.0
        %770 = vmatpush1.msra.mxu0 0.0
        %771 = vmatprep.subr.mxu0 0.0
        %772 = vmatpush1.msra.mxu0 0.0
        %773 = vmatprep.subr.mxu0 0.0
        %774 = vmatpush1.msra.mxu0 0.0
        %775 = vmatprep.subr.mxu0 0.0
        %776 = vmatpush1.msra.mxu0 0.0
        %777 = vmatprep.subr.mxu0 0.0
        %778 = vmatpush1.msra.mxu0 0.0
        %779 = vmatprep.subr.mxu0 0.0
        %780 = vmatpush1.msra.mxu0 0.0
        %781 = vmatprep.subr.mxu0 0.0
        %782 = vmatpush1.msra.mxu0 0.0
        %783 = vmatprep.subr.mxu0 0.0
        %784 = vmatpush1.msra.mxu0 0.0
        %785 = vmatprep.subr.mxu0 0.0
        %786 = vmatpush1.msra.mxu0 0.0
        %787 = vmatprep.subr.mxu0 0.0
        %788 = vmatpush1.msra.mxu0 0.0
        %789 = vmatprep.subr.mxu0 0.0
        %790 = vmatpush1.msra.mxu0 0.0
        %791 = vmatprep.subr.mxu0 0.0
        %792 = vmatpush1.msra.mxu0 0.0
        %793 = vmatprep.subr.mxu0 0.0
        %794 = vmatpush1.msra.mxu0 0.0
        %795 = vmatprep.subr.mxu0 0.0
        %796 = vmatpush1.msra.mxu0 0.0
        %797 = vmatprep.subr.mxu0 0.0
        %798 = vmatpush1.msra.mxu0 0.0
        %799 = vmatprep.subr.mxu0 0.0
        %800 = vmatpush1.msra.mxu0 0.0
        %801 = vmatprep.mubr.f32.mxu0 0.0
        %802 = vmatmul.mubr.f32.gmra.mrb[0].mxu0 %v719
        %v803 = vpop.f32.mrb[0].mxu0
        %v804 = vadd.f32 %v715, %v803
        %v805 = vpop.f32.mrb[0].mxu0
        %806 = vmatprep.mubr.f32.mxu0 0.0
        %807 = vmatmul.mubr.f32.gmra.mrb[0].mxu0 %v722
        %v808 = vpop.f32.mrb[0].mxu0
        %v809 = vadd.f32 %v715, %v808
        %v810 = vpop.f32.mrb[0].mxu0
        %811 = vmatprep.mubr.f32.mxu0 0.0
        %812 = vmatmul.mubr.f32.gmra.mrb[0].mxu0 %v725
        %v813 = vpop.f32.mrb[0].mxu0
        %v814 = vadd.f32 %v715, %v813
        %v815 = vpop.f32.mrb[0].mxu0
        %816 = vmatprep.mubr.f32.mxu0 0.0
        %817 = vmatmul.mubr.f32.gmra.mrb[0].mxu0 %v728
        %v818 = vpop.f32.mrb[0].mxu0
        %v819 = vadd.f32 %v715, %v818
        %v820 = vpop.f32.mrb[0].mxu0
        %821 = vmatprep.mubr.f32.mxu0 0.0
        %822 = vmatmul.mubr.f32.gmra.mrb[0].mxu0 %v731
        %v823 = vpop.f32.mrb[0].mxu0
        %v824 = vadd.f32 %v715, %v823
        %v825 = vpop.f32.mrb[0].mxu0
        %826 = vdwg.mxu0
        %v827 = vmax.f32 %v804, 0.0
        %v828 = vmax.f32 %v809, 0.0
        %v829 = vmax.f32 %v814, 0.0
        %v830 = vmax.f32 %v819, 0.0
        %v831 = vmax.f32 %v824, 0.0
        %v832 = vld [vmem:[%s6] sm:$0xff]
        %v833 = vld [vmem:[%s6 + $0x8] sm:$0xff]
        %v834 = vld [vmem:[%s6 + $0x10] sm:$0xff]
        %v835 = vld [vmem:[%s6 + $0x18] sm:$0xff]
        %v836 = vld [vmem:[%s7] sm:$0x1]
        %v838 = vlaneseq
        %v839 = vshrl.u32 %v838, 7
        %v840 = vsub.s32 0, %v839
        %v841 = vrot.slane %v836, %v840
        %vm843 = vcmask 261120
        %v845 = vsel %vm843, %v827, 0
        %v848 = vsel %vm843, %v828, 0
        %v851 = vsel %vm843, %v829, 0
        %v854 = vsel %vm843, %v830, 0
        %v857 = vsel %vm843, %v831, 0
        %859 = vmatprep.subr.mxu0 0.0
        %860 = vmatpush1.msra.mxu0 %v832
        %861 = vmatprep.subr.mxu0 0.0
        %862 = vmatpush1.msra.mxu0 %v833
        %863 = vmatprep.subr.mxu0 0.0
        %864 = vmatpush1.msra.mxu0 %v834
        %865 = vmatprep.subr.mxu0 0.0
        %866 = vmatpush1.msra.mxu0 %v835
        %867 = vmatprep.subr.mxu0 0.0
        %868 = vmatpush1.msra.mxu0 0.0
        %869 = vmatprep.subr.mxu0 0.0
        %870 = vmatpush1.msra.mxu0 0.0
        %871 = vmatprep.subr.mxu0 0.0
        %872 = vmatpush1.msra.mxu0 0.0
        %873 = vmatprep.subr.mxu0 0.0
        %874 = vmatpush1.msra.mxu0 0.0
        %875 = vmatprep.subr.mxu0 0.0
        %876 = vmatpush1.msra.mxu0 0.0
        %877 = vmatprep.subr.mxu0 0.0
        %878 = vmatpush1.msra.mxu0 0.0
        %879 = vmatprep.subr.mxu0 0.0
        %880 = vmatpush1.msra.mxu0 0.0
        %881 = vmatprep.subr.mxu0 0.0
        %882 = vmatpush1.msra.mxu0 0.0
        %883 = vmatprep.subr.mxu0 0.0
        %884 = vmatpush1.msra.mxu0 0.0
        %885 = vmatprep.subr.mxu0 0.0
        %886 = vmatpush1.msra.mxu0 0.0
        %887 = vmatprep.subr.mxu0 0.0
        %888 = vmatpush1.msra.mxu0 0.0
        %889 = vmatprep.subr.mxu0 0.0
        %890 = vmatpush1.msra.mxu0 0.0
        %891 = vmatprep.subr.mxu0 0.0
        %892 = vmatpush1.msra.mxu0 0.0
        %893 = vmatprep.subr.mxu0 0.0
        %894 = vmatpush1.msra.mxu0 0.0
        %895 = vmatprep.subr.mxu0 0.0
        %896 = vmatpush1.msra.mxu0 0.0
        %897 = vmatprep.subr.mxu0 0.0
        %898 = vmatpush1.msra.mxu0 0.0
        %899 = vmatprep.subr.mxu0 0.0
        %900 = vmatpush1.msra.mxu0 0.0
        %901 = vmatprep.subr.mxu0 0.0
        %902 = vmatpush1.msra.mxu0 0.0
        %903 = vmatprep.subr.mxu0 0.0
        %904 = vmatpush1.msra.mxu0 0.0
        %905 = vmatprep.subr.mxu0 0.0
        %906 = vmatpush1.msra.mxu0 0.0
        %907 = vmatprep.subr.mxu0 0.0
        %908 = vmatpush1.msra.mxu0 0.0
        %909 = vmatprep.subr.mxu0 0.0
        %910 = vmatpush1.msra.mxu0 0.0
        %911 = vmatprep.subr.mxu0 0.0
        %912 = vmatpush1.msra.mxu0 0.0
        %913 = vmatprep.subr.mxu0 0.0
        %914 = vmatpush1.msra.mxu0 0.0
        %915 = vmatprep.subr.mxu0 0.0
        %916 = vmatpush1.msra.mxu0 0.0
        %917 = vmatprep.subr.mxu0 0.0
        %918 = vmatpush1.msra.mxu0 0.0
        %919 = vmatprep.subr.mxu0 0.0
        %920 = vmatpush1.msra.mxu0 0.0
        %921 = vmatprep.subr.mxu0 0.0
        %922 = vmatpush1.msra.mxu0 0.0
        %923 = vmatprep.mubr.f32.mxu0 0.0
        %924 = vmatmul.mubr.f32.gmra.mrb[0].mxu0 %v845
        %v925 = vpop.f32.mrb[0].mxu0
        %v926 = vadd.f32 %v841, %v925
        %v927 = vpop.f32.mrb[0].mxu0
        %928 = vmatprep.mubr.f32.mxu0 0.0
        %929 = vmatmul.mubr.f32.gmra.mrb[0].mxu0 %v848
        %v930 = vpop.f32.mrb[0].mxu0
        %v931 = vadd.f32 %v841, %v930
        %v932 = vpop.f32.mrb[0].mxu0
        %933 = vmatprep.mubr.f32.mxu0 0.0
        %934 = vmatmul.mubr.f32.gmra.mrb[0].mxu0 %v851
        %v935 = vpop.f32.mrb[0].mxu0
        %v936 = vadd.f32 %v841, %v935
        %v937 = vpop.f32.mrb[0].mxu0
        %938 = vmatprep.mubr.f32.mxu0 0.0
        %939 = vmatmul.mubr.f32.gmra.mrb[0].mxu0 %v854
        %v940 = vpop.f32.mrb[0].mxu0
        %v941 = vadd.f32 %v841, %v940
        %v942 = vpop.f32.mrb[0].mxu0
        %943 = vmatprep.mubr.f32.mxu0 0.0
        %944 = vmatmul.mubr.f32.gmra.mrb[0].mxu0 %v857
        %v945 = vpop.f32.mrb[0].mxu0
        %v946 = vadd.f32 %v841, %v945
        %v947 = vpop.f32.mrb[0].mxu0
        %948 = vdwg.mxu0
        %v949 = vmax.f32 %v926, 0.0
        %v950 = vmax.f32 %v931, 0.0
        %v951 = vmax.f32 %v936, 0.0
        %v952 = vmax.f32 %v941, 0.0
        %v953 = vmax.f32 %v946, 0.0
        %v954 = vld [vmem:[%s8] sm:$0xff]
        %v955 = vld [vmem:[%s8 + $0x8] sm:$0xff]
        %v956 = vld [vmem:[%s8 + $0x10] sm:$0xff]
        %v957 = vld [vmem:[%s8 + $0x18] sm:$0xff]
        %v958 = vld [vmem:[%s9] sm:$0x1]
        %v960 = vlaneseq
        %v961 = vshrl.u32 %v960, 7
        %v962 = vsub.s32 0, %v961
        %v963 = vrot.slane %v958, %v962
        %v966 = vsel %vm843, %v949, 0
        %v969 = vsel %vm843, %v950, 0
        %v972 = vsel %vm843, %v951, 0
        %v975 = vsel %vm843, %v952, 0
        %v978 = vsel %vm843, %v953, 0
        %980 = vmatprep.subr.mxu0 0.0
        %981 = vmatpush1.msra.mxu0 %v954
        %982 = vmatprep.subr.mxu0 0.0
        %983 = vmatpush1.msra.mxu0 %v955
        %984 = vmatprep.subr.mxu0 0.0
        %985 = vmatpush1.msra.mxu0 %v956
        %986 = vmatprep.subr.mxu0 0.0
        %987 = vmatpush1.msra.mxu0 %v957
        %988 = vmatprep.subr.mxu0 0.0
        %989 = vmatpush1.msra.mxu0 0.0
        %990 = vmatprep.subr.mxu0 0.0
        %991 = vmatpush1.msra.mxu0 0.0
        %992 = vmatprep.subr.mxu0 0.0
        %993 = vmatpush1.msra.mxu0 0.0
        %994 = vmatprep.subr.mxu0 0.0
        %995 = vmatpush1.msra.mxu0 0.0
        %996 = vmatprep.subr.mxu0 0.0
        %997 = vmatpush1.msra.mxu0 0.0
        %998 = vmatprep.subr.mxu0 0.0
        %999 = vmatpush1.msra.mxu0 0.0
        %1000 = vmatprep.subr.mxu0 0.0
        %1001 = vmatpush1.msra.mxu0 0.0
        %1002 = vmatprep.subr.mxu0 0.0
        %1003 = vmatpush1.msra.mxu0 0.0
        %1004 = vmatprep.subr.mxu0 0.0
        %1005 = vmatpush1.msra.mxu0 0.0
        %1006 = vmatprep.subr.mxu0 0.0
        %1007 = vmatpush1.msra.mxu0 0.0
        %1008 = vmatprep.subr.mxu0 0.0
        %1009 = vmatpush1.msra.mxu0 0.0
        %1010 = vmatprep.subr.mxu0 0.0
        %1011 = vmatpush1.msra.mxu0 0.0
        %1012 = vmatprep.subr.mxu0 0.0
        %1013 = vmatpush1.msra.mxu0 0.0
        %1014 = vmatprep.subr.mxu0 0.0
        %1015 = vmatpush1.msra.mxu0 0.0
        %1016 = vmatprep.subr.mxu0 0.0
        %1017 = vmatpush1.msra.mxu0 0.0
        %1018 = vmatprep.subr.mxu0 0.0
        %1019 = vmatpush1.msra.mxu0 0.0
        %1020 = vmatprep.subr.mxu0 0.0
        %1021 = vmatpush1.msra.mxu0 0.0
        %1022 = vmatprep.subr.mxu0 0.0
        %1023 = vmatpush1.msra.mxu0 0.0
        %1024 = vmatprep.subr.mxu0 0.0
        %1025 = vmatpush1.msra.mxu0 0.0
        %1026 = vmatprep.subr.mxu0 0.0
        %1027 = vmatpush1.msra.mxu0 0.0
        %1028 = vmatprep.subr.mxu0 0.0
        %1029 = vmatpush1.msra.mxu0 0.0
        %1030 = vmatprep.subr.mxu0 0.0
        %1031 = vmatpush1.msra.mxu0 0.0
        %1032 = vmatprep.subr.mxu0 0.0
        %1033 = vmatpush1.msra.mxu0 0.0
        %1034 = vmatprep.subr.mxu0 0.0
        %1035 = vmatpush1.msra.mxu0 0.0
        %1036 = vmatprep.subr.mxu0 0.0
        %1037 = vmatpush1.msra.mxu0 0.0
        %1038 = vmatprep.subr.mxu0 0.0
        %1039 = vmatpush1.msra.mxu0 0.0
        %1040 = vmatprep.subr.mxu0 0.0
        %1041 = vmatpush1.msra.mxu0 0.0
        %1042 = vmatprep.subr.mxu0 0.0
        %1043 = vmatpush1.msra.mxu0 0.0
        %1044 = vmatprep.mubr.f32.mxu0 0.0
        %1045 = vmatmul.mubr.f32.gmra.mrb[0].mxu0 %v966
        %v1046 = vpop.f32.mrb[0].mxu0
        %v1047 = vadd.f32 %v963, %v1046
        %v1048 = vpop.f32.mrb[0].mxu0
        %1049 = vmatprep.mubr.f32.mxu0 0.0
        %1050 = vmatmul.mubr.f32.gmra.mrb[0].mxu0 %v969
        %v1051 = vpop.f32.mrb[0].mxu0
        %v1052 = vadd.f32 %v963, %v1051
        %v1053 = vpop.f32.mrb[0].mxu0
        %1054 = vmatprep.mubr.f32.mxu0 0.0
        %1055 = vmatmul.mubr.f32.gmra.mrb[0].mxu0 %v972
        %v1056 = vpop.f32.mrb[0].mxu0
        %v1057 = vadd.f32 %v963, %v1056
        %v1058 = vpop.f32.mrb[0].mxu0
        %1059 = vmatprep.mubr.f32.mxu0 0.0
        %1060 = vmatmul.mubr.f32.gmra.mrb[0].mxu0 %v975
        %v1061 = vpop.f32.mrb[0].mxu0
        %v1062 = vadd.f32 %v963, %v1061
        %v1063 = vpop.f32.mrb[0].mxu0
        %1064 = vmatprep.mubr.f32.mxu0 0.0
        %1065 = vmatmul.mubr.f32.gmra.mrb[0].mxu0 %v978
        %v1066 = vpop.f32.mrb[0].mxu0
        %v1067 = vadd.f32 %v963, %v1066
        %v1068 = vpop.f32.mrb[0].mxu0
        %1069 = vdwg.mxu0
        %v1070 = vmax.f32 %v1047, 0.0
        %v1071 = vmax.f32 %v1052, 0.0
        %v1072 = vmax.f32 %v1057, 0.0
        %v1073 = vmax.f32 %v1062, 0.0
        %v1074 = vmax.f32 %v1067, 0.0
        %v1075 = vld [vmem:[%s10] sm:$0xff]
        %v1076 = vld [vmem:[%s10 + $0x8] sm:$0xff]
        %v1077 = vld [vmem:[%s10 + $0x10] sm:$0xff]
        %v1078 = vld [vmem:[%s10 + $0x18] sm:$0xff]
        %v1079 = vld [vmem:[%s11] sm:$0x1]
        %v1081 = vlaneseq
        %v1082 = vshrl.u32 %v1081, 7
        %v1083 = vsub.s32 0, %v1082
        %v1084 = vrot.slane %v1079, %v1083
        %v1087 = vsel %vm843, %v1070, 0
        %v1090 = vsel %vm843, %v1071, 0
        %v1093 = vsel %vm843, %v1072, 0
        %v1096 = vsel %vm843, %v1073, 0
        %v1099 = vsel %vm843, %v1074, 0
        %1101 = vmatprep.subr.mxu0 0.0
        %1102 = vmatpush1.msra.mxu0 %v1075
        %1103 = vmatprep.subr.mxu0 0.0
        %1104 = vmatpush1.msra.mxu0 %v1076
        %1105 = vmatprep.subr.mxu0 0.0
        %1106 = vmatpush1.msra.mxu0 %v1077
        %1107 = vmatprep.subr.mxu0 0.0
        %1108 = vmatpush1.msra.mxu0 %v1078
        %1109 = vmatprep.subr.mxu0 0.0
        %1110 = vmatpush1.msra.mxu0 0.0
        %1111 = vmatprep.subr.mxu0 0.0
        %1112 = vmatpush1.msra.mxu0 0.0
        %1113 = vmatprep.subr.mxu0 0.0
        %1114 = vmatpush1.msra.mxu0 0.0
        %1115 = vmatprep.subr.mxu0 0.0
        %1116 = vmatpush1.msra.mxu0 0.0
        %1117 = vmatprep.subr.mxu0 0.0
        %1118 = vmatpush1.msra.mxu0 0.0
        %1119 = vmatprep.subr.mxu0 0.0
        %1120 = vmatpush1.msra.mxu0 0.0
        %1121 = vmatprep.subr.mxu0 0.0
        %1122 = vmatpush1.msra.mxu0 0.0
        %1123 = vmatprep.subr.mxu0 0.0
        %1124 = vmatpush1.msra.mxu0 0.0
        %1125 = vmatprep.subr.mxu0 0.0
        %1126 = vmatpush1.msra.mxu0 0.0
        %1127 = vmatprep.subr.mxu0 0.0
        %1128 = vmatpush1.msra.mxu0 0.0
        %1129 = vmatprep.subr.mxu0 0.0
        %1130 = vmatpush1.msra.mxu0 0.0
        %1131 = vmatprep.subr.mxu0 0.0
        %1132 = vmatpush1.msra.mxu0 0.0
        %1133 = vmatprep.subr.mxu0 0.0
        %1134 = vmatpush1.msra.mxu0 0.0
        %1135 = vmatprep.subr.mxu0 0.0
        %1136 = vmatpush1.msra.mxu0 0.0
        %1137 = vmatprep.subr.mxu0 0.0
        %1138 = vmatpush1.msra.mxu0 0.0
        %1139 = vmatprep.subr.mxu0 0.0
        %1140 = vmatpush1.msra.mxu0 0.0
        %1141 = vmatprep.subr.mxu0 0.0
        %1142 = vmatpush1.msra.mxu0 0.0
        %1143 = vmatprep.subr.mxu0 0.0
        %1144 = vmatpush1.msra.mxu0 0.0
        %1145 = vmatprep.subr.mxu0 0.0
        %1146 = vmatpush1.msra.mxu0 0.0
        %1147 = vmatprep.subr.mxu0 0.0
        %1148 = vmatpush1.msra.mxu0 0.0
        %1149 = vmatprep.subr.mxu0 0.0
        %1150 = vmatpush1.msra.mxu0 0.0
        %1151 = vmatprep.subr.mxu0 0.0
        %1152 = vmatpush1.msra.mxu0 0.0
        %1153 = vmatprep.subr.mxu0 0.0
        %1154 = vmatpush1.msra.mxu0 0.0
        %1155 = vmatprep.subr.mxu0 0.0
        %1156 = vmatpush1.msra.mxu0 0.0
        %1157 = vmatprep.subr.mxu0 0.0
        %1158 = vmatpush1.msra.mxu0 0.0
        %1159 = vmatprep.subr.mxu0 0.0
        %1160 = vmatpush1.msra.mxu0 0.0
        %1161 = vmatprep.subr.mxu0 0.0
        %1162 = vmatpush1.msra.mxu0 0.0
        %1163 = vmatprep.subr.mxu0 0.0
        %1164 = vmatpush1.msra.mxu0 0.0
        %1165 = vmatprep.mubr.f32.mxu0 0.0
        %1166 = vmatmul.mubr.f32.gmra.mrb[0].mxu0 %v1087
        %v1167 = vpop.f32.mrb[0].mxu0
        %v1168 = vadd.f32 %v1084, %v1167
        %v1169 = vpop.f32.mrb[0].mxu0
        %1170 = vmatprep.mubr.f32.mxu0 0.0
        %1171 = vmatmul.mubr.f32.gmra.mrb[0].mxu0 %v1090
        %v1172 = vpop.f32.mrb[0].mxu0
        %v1173 = vadd.f32 %v1084, %v1172
        %v1174 = vpop.f32.mrb[0].mxu0
        %1175 = vmatprep.mubr.f32.mxu0 0.0
        %1176 = vmatmul.mubr.f32.gmra.mrb[0].mxu0 %v1093
        %v1177 = vpop.f32.mrb[0].mxu0
        %v1178 = vadd.f32 %v1084, %v1177
        %v1179 = vpop.f32.mrb[0].mxu0
        %1180 = vmatprep.mubr.f32.mxu0 0.0
        %1181 = vmatmul.mubr.f32.gmra.mrb[0].mxu0 %v1096
        %v1182 = vpop.f32.mrb[0].mxu0
        %v1183 = vadd.f32 %v1084, %v1182
        %v1184 = vpop.f32.mrb[0].mxu0
        %1185 = vmatprep.mubr.f32.mxu0 0.0
        %1186 = vmatmul.mubr.f32.gmra.mrb[0].mxu0 %v1099
        %v1187 = vpop.f32.mrb[0].mxu0
        %v1188 = vadd.f32 %v1084, %v1187
        %v1189 = vpop.f32.mrb[0].mxu0
        %1190 = vdwg.mxu0
        %v1191 = vld [vmem:[%s2] sm:$0xff]
        %vm1192 = vcmask 326656
        %v1194 = vsel %vm1192, %v1191, 0
        %1196 = vmatprep.subr.mxu0 0.0
        %1197 = vmatpush1.msra.mxu0 %v949
        %1198 = vmatprep.subr.mxu0 0.0
        %1199 = vmatpush1.msra.mxu0 %v950
        %1200 = vmatprep.subr.mxu0 0.0
        %1201 = vmatpush1.msra.mxu0 %v951
        %1202 = vmatprep.subr.mxu0 0.0
        %1203 = vmatpush1.msra.mxu0 %v952
        %1204 = vmatprep.subr.mxu0 0.0
        %1205 = vmatpush1.msra.mxu0 %v953
        %1206 = vmatprep.subr.mxu0 0.0
        %1207 = vmatpush1.msra.mxu0 0.0
        %1208 = vmatprep.subr.mxu0 0.0
        %1209 = vmatpush1.msra.mxu0 0.0
        %1210 = vmatprep.subr.mxu0 0.0
        %1211 = vmatpush1.msra.mxu0 0.0
        %1212 = vmatprep.subr.mxu0 0.0
        %1213 = vmatpush1.msra.mxu0 0.0
        %1214 = vmatprep.subr.mxu0 0.0
        %1215 = vmatpush1.msra.mxu0 0.0
        %1216 = vmatprep.subr.mxu0 0.0
        %1217 = vmatpush1.msra.mxu0 0.0
        %1218 = vmatprep.subr.mxu0 0.0
        %1219 = vmatpush1.msra.mxu0 0.0
        %1220 = vmatprep.subr.mxu0 0.0
        %1221 = vmatpush1.msra.mxu0 0.0
        %1222 = vmatprep.subr.mxu0 0.0
        %1223 = vmatpush1.msra.mxu0 0.0
        %1224 = vmatprep.subr.mxu0 0.0
        %1225 = vmatpush1.msra.mxu0 0.0
        %1226 = vmatprep.subr.mxu0 0.0
        %1227 = vmatpush1.msra.mxu0 0.0
        %1228 = vmatprep.subr.mxu0 0.0
        %1229 = vmatpush1.msra.mxu0 0.0
        %1230 = vmatprep.subr.mxu0 0.0
        %1231 = vmatpush1.msra.mxu0 0.0
        %1232 = vmatprep.subr.mxu0 0.0
        %1233 = vmatpush1.msra.mxu0 0.0
        %1234 = vmatprep.subr.mxu0 0.0
        %1235 = vmatpush1.msra.mxu0 0.0
        %1236 = vmatprep.subr.mxu0 0.0
        %1237 = vmatpush1.msra.mxu0 0.0
        %1238 = vmatprep.subr.mxu0 0.0
        %1239 = vmatpush1.msra.mxu0 0.0
        %1240 = vmatprep.subr.mxu0 0.0
        %1241 = vmatpush1.msra.mxu0 0.0
        %1242 = vmatprep.subr.mxu0 0.0
        %1243 = vmatpush1.msra.mxu0 0.0
        %1244 = vmatprep.subr.mxu0 0.0
        %1245 = vmatpush1.msra.mxu0 0.0
        %1246 = vmatprep.subr.mxu0 0.0
        %1247 = vmatpush1.msra.mxu0 0.0
        %1248 = vmatprep.subr.mxu0 0.0
        %1249 = vmatpush1.msra.mxu0 0.0
        %1250 = vmatprep.subr.mxu0 0.0
        %1251 = vmatpush1.msra.mxu0 0.0
        %1252 = vmatprep.subr.mxu0 0.0
        %1253 = vmatpush1.msra.mxu0 0.0
        %1254 = vmatprep.subr.mxu0 0.0
        %1255 = vmatpush1.msra.mxu0 0.0
        %1256 = vmatprep.subr.mxu0 0.0
        %1257 = vmatpush1.msra.mxu0 0.0
        %1258 = vmatprep.subr.mxu0 0.0
        %1259 = vmatpush1.msra.mxu0 0.0
        %1260 = vmatprep.mubr.f32.mxu0 0.0
        %1261 = vmatmul.mubr.f32.gmra.mrb[0].mxu0 %v1194
        %v1262 = vpop.f32.mrb[0].mxu0
        %v1263 = vadd.f32 0.0, %v1262
        %v1264 = vpop.f32.mrb[0].mxu0
        %1265 = vdwg.mxu0
        %v1266 = vmul.f32 %v1263, 0.2
        %v1267 = vld [vmem:[%s13] sm:$0xff]
        %v1268 = vld [vmem:[%s13 + $0x8] sm:$0xff]
        %v1269 = vld [vmem:[%s13 + $0x10] sm:$0xff]
        %v1270 = vld [vmem:[%s13 + $0x18] sm:$0xff]
        %v1272 = vsel %vm843, %v1266, 0
        %1274 = vmatprep.subr.mxu0 0.0
        %1275 = vmatpush1.msra.mxu0 %v1267
        %1276 = vmatprep.subr.mxu0 0.0
        %1277 = vmatpush1.msra.mxu0 %v1268
        %1278 = vmatprep.subr.mxu0 0.0
        %1279 = vmatpush1.msra.mxu0 %v1269
        %1280 = vmatprep.subr.mxu0 0.0
        %1281 = vmatpush1.msra.mxu0 %v1270
        %1282 = vmatprep.subr.mxu0 0.0
        %1283 = vmatpush1.msra.mxu0 0.0
        %1284 = vmatprep.subr.mxu0 0.0
        %1285 = vmatpush1.msra.mxu0 0.0
        %1286 = vmatprep.subr.mxu0 0.0
        %1287 = vmatpush1.msra.mxu0 0.0
        %1288 = vmatprep.subr.mxu0 0.0
        %1289 = vmatpush1.msra.mxu0 0.0
        %1290 = vmatprep.subr.mxu0 0.0
        %1291 = vmatpush1.msra.mxu0 0.0
        %1292 = vmatprep.subr.mxu0 0.0
        %1293 = vmatpush1.msra.mxu0 0.0
        %1294 = vmatprep.subr.mxu0 0.0
        %1295 = vmatpush1.msra.mxu0 0.0
        %1296 = vmatprep.subr.mxu0 0.0
        %1297 = vmatpush1.msra.mxu0 0.0
        %1298 = vmatprep.subr.mxu0 0.0
        %1299 = vmatpush1.msra.mxu0 0.0
        %1300 = vmatprep.subr.mxu0 0.0
        %1301 = vmatpush1.msra.mxu0 0.0
        %1302 = vmatprep.subr.mxu0 0.0
        %1303 = vmatpush1.msra.mxu0 0.0
        %1304 = vmatprep.subr.mxu0 0.0
        %1305 = vmatpush1.msra.mxu0 0.0
        %1306 = vmatprep.subr.mxu0 0.0
        %1307 = vmatpush1.msra.mxu0 0.0
        %1308 = vmatprep.subr.mxu0 0.0
        %1309 = vmatpush1.msra.mxu0 0.0
        %1310 = vmatprep.subr.mxu0 0.0
        %1311 = vmatpush1.msra.mxu0 0.0
        %1312 = vmatprep.subr.mxu0 0.0
        %1313 = vmatpush1.msra.mxu0 0.0
        %1314 = vmatprep.subr.mxu0 0.0
        %1315 = vmatpush1.msra.mxu0 0.0
        %1316 = vmatprep.subr.mxu0 0.0
        %1317 = vmatpush1.msra.mxu0 0.0
        %1318 = vmatprep.subr.mxu0 0.0
        %1319 = vmatpush1.msra.mxu0 0.0
        %1320 = vmatprep.subr.mxu0 0.0
        %1321 = vmatpush1.msra.mxu0 0.0
        %1322 = vmatprep.subr.mxu0 0.0
        %1323 = vmatpush1.msra.mxu0 0.0
        %1324 = vmatprep.subr.mxu0 0.0
        %1325 = vmatpush1.msra.mxu0 0.0
        %1326 = vmatprep.subr.mxu0 0.0
        %1327 = vmatpush1.msra.mxu0 0.0
        %1328 = vmatprep.subr.mxu0 0.0
        %1329 = vmatpush1.msra.mxu0 0.0
        %1330 = vmatprep.subr.mxu0 0.0
        %1331 = vmatpush1.msra.mxu0 0.0
        %1332 = vmatprep.subr.mxu0 0.0
        %1333 = vmatpush1.msra.mxu0 0.0
        %1334 = vmatprep.subr.mxu0 0.0
        %1335 = vmatpush1.msra.mxu0 0.0
        %1336 = vmatprep.subr.mxu0 0.0
        %1337 = vmatpush1.msra.mxu0 0.0
        %1338 = vmatprep.mubr.f32.mxu0 0.0
        %1339 = vmatmul.mubr.f32.gmra.mrb[0].mxu0 %v1272
        %v1340 = vpop.f32.mrb[0].mxu0
        %v1341 = vadd.f32 0.0, %v1340
        %v1342 = vpop.f32.mrb[0].mxu0
        %1343 = vdwg.mxu0
        %v1344 = vld [vmem:[%s3] sm:$0xff]
        %v1345 = vld [vmem:[%s3 + $0x8] sm:$0xff]
        %v1346 = vld [vmem:[%s3 + $0x10] sm:$0xff]
        %v1347 = vld [vmem:[%s3 + $0x18] sm:$0xff]
        %v1348 = vld [vmem:[%s3 + $0x20] sm:$0xff]
        %vm1349 = vcmask 64512
        %v1351 = vsel %vm1349, %v1344, 0
        %v1354 = vsel %vm1349, %v1345, 0
        %v1357 = vsel %vm1349, %v1346, 0
        %v1360 = vsel %vm1349, %v1347, 0
        %v1363 = vsel %vm1349, %v1348, 0
        %1365 = vmatprep.subr.mxu0 0.0
        %1366 = vmatpush1.msra.mxu0 %v1341
        %1367 = vmatprep.subr.mxu0 0.0
        %1368 = vmatpush1.msra.mxu0 0.0
        %1369 = vmatprep.subr.mxu0 0.0
        %1370 = vmatpush1.msra.mxu0 0.0
        %1371 = vmatprep.subr.mxu0 0.0
        %1372 = vmatpush1.msra.mxu0 0.0
        %1373 = vmatprep.subr.mxu0 0.0
        %1374 = vmatpush1.msra.mxu0 0.0
        %1375 = vmatprep.subr.mxu0 0.0
        %1376 = vmatpush1.msra.mxu0 0.0
        %1377 = vmatprep.subr.mxu0 0.0
        %1378 = vmatpush1.msra.mxu0 0.0
        %1379 = vmatprep.subr.mxu0 0.0
        %1380 = vmatpush1.msra.mxu0 0.0
        %1381 = vmatprep.subr.mxu0 0.0
        %1382 = vmatpush1.msra.mxu0 0.0
        %1383 = vmatprep.subr.mxu0 0.0
        %1384 = vmatpush1.msra.mxu0 0.0
        %1385 = vmatprep.subr.mxu0 0.0
        %1386 = vmatpush1.msra.mxu0 0.0
        %1387 = vmatprep.subr.mxu0 0.0
        %1388 = vmatpush1.msra.mxu0 0.0
        %1389 = vmatprep.subr.mxu0 0.0
        %1390 = vmatpush1.msra.mxu0 0.0
        %1391 = vmatprep.subr.mxu0 0.0
        %1392 = vmatpush1.msra.mxu0 0.0
        %1393 = vmatprep.subr.mxu0 0.0
        %1394 = vmatpush1.msra.mxu0 0.0
        %1395 = vmatprep.subr.mxu0 0.0
        %1396 = vmatpush1.msra.mxu0 0.0
        %1397 = vmatprep.subr.mxu0 0.0
        %1398 = vmatpush1.msra.mxu0 0.0
        %1399 = vmatprep.subr.mxu0 0.0
        %1400 = vmatpush1.msra.mxu0 0.0
        %1401 = vmatprep.subr.mxu0 0.0
        %1402 = vmatpush1.msra.mxu0 0.0
        %1403 = vmatprep.subr.mxu0 0.0
        %1404 = vmatpush1.msra.mxu0 0.0
        %1405 = vmatprep.subr.mxu0 0.0
        %1406 = vmatpush1.msra.mxu0 0.0
        %1407 = vmatprep.subr.mxu0 0.0
        %1408 = vmatpush1.msra.mxu0 0.0
        %1409 = vmatprep.subr.mxu0 0.0
        %1410 = vmatpush1.msra.mxu0 0.0
        %1411 = vmatprep.subr.mxu0 0.0
        %1412 = vmatpush1.msra.mxu0 0.0
        %1413 = vmatprep.subr.mxu0 0.0
        %1414 = vmatpush1.msra.mxu0 0.0
        %1415 = vmatprep.subr.mxu0 0.0
        %1416 = vmatpush1.msra.mxu0 0.0
        %1417 = vmatprep.subr.mxu0 0.0
        %1418 = vmatpush1.msra.mxu0 0.0
        %1419 = vmatprep.subr.mxu0 0.0
        %1420 = vmatpush1.msra.mxu0 0.0
        %1421 = vmatprep.subr.mxu0 0.0
        %1422 = vmatpush1.msra.mxu0 0.0
        %1423 = vmatprep.subr.mxu0 0.0
        %1424 = vmatpush1.msra.mxu0 0.0
        %1425 = vmatprep.subr.mxu0 0.0
        %1426 = vmatpush1.msra.mxu0 0.0
        %1427 = vmatprep.subr.mxu0 0.0
        %1428 = vmatpush1.msra.mxu0 0.0
        %1429 = vmatprep.mubr.f32.mxu0 0.0
        %1430 = vmatmul.mubr.f32.gmra.mrb[0].mxu0 %v1351
        %v1431 = vpop.f32.mrb[0].mxu0
        %v1432 = vadd.f32 0.0, %v1431
        %v1433 = vpop.f32.mrb[0].mxu0
        %1434 = vmatprep.mubr.f32.mxu0 0.0
        %1435 = vmatmul.mubr.f32.gmra.mrb[0].mxu0 %v1354
        %v1436 = vpop.f32.mrb[0].mxu0
        %v1437 = vadd.f32 0.0, %v1436
        %v1438 = vpop.f32.mrb[0].mxu0
        %1439 = vmatprep.mubr.f32.mxu0 0.0
        %1440 = vmatmul.mubr.f32.gmra.mrb[0].mxu0 %v1357
        %v1441 = vpop.f32.mrb[0].mxu0
        %v1442 = vadd.f32 0.0, %v1441
        %v1443 = vpop.f32.mrb[0].mxu0
        %1444 = vmatprep.mubr.f32.mxu0 0.0
        %1445 = vmatmul.mubr.f32.gmra.mrb[0].mxu0 %v1360
        %v1446 = vpop.f32.mrb[0].mxu0
        %v1447 = vadd.f32 0.0, %v1446
        %v1448 = vpop.f32.mrb[0].mxu0
        %1449 = vmatprep.mubr.f32.mxu0 0.0
        %1450 = vmatmul.mubr.f32.gmra.mrb[0].mxu0 %v1363
        %v1451 = vpop.f32.mrb[0].mxu0
        %v1452 = vadd.f32 0.0, %v1451
        %v1453 = vpop.f32.mrb[0].mxu0
        %1454 = vdwg.mxu0
        %v1455 = vld [vmem:[%s12] sm:$0xff]
        %v1456 = vld [vmem:[%s12 + $0x8] sm:$0xff]
        %v1457 = vld [vmem:[%s12 + $0x10] sm:$0xff]
        %v1458 = vld [vmem:[%s12 + $0x18] sm:$0xff]
        %1459 = vmatprep.subr.mxu0 0.0
        %1460 = vmatpush1.msra.mxu0 %v1455
        %1461 = vmatprep.subr.mxu0 0.0
        %1462 = vmatpush1.msra.mxu0 %v1456
        %1463 = vmatprep.subr.mxu0 0.0
        %1464 = vmatpush1.msra.mxu0 %v1457
        %1465 = vmatprep.subr.mxu0 0.0
        %1466 = vmatpush1.msra.mxu0 %v1458
        %1467 = vmatprep.subr.mxu0 0.0
        %1468 = vmatpush1.msra.mxu0 0.0
        %1469 = vmatprep.subr.mxu0 0.0
        %1470 = vmatpush1.msra.mxu0 0.0
        %1471 = vmatprep.subr.mxu0 0.0
        %1472 = vmatpush1.msra.mxu0 0.0
        %1473 = vmatprep.subr.mxu0 0.0
        %1474 = vmatpush1.msra.mxu0 0.0
        %1475 = vmatprep.subr.mxu0 0.0
        %1476 = vmatpush1.msra.mxu0 0.0
        %1477 = vmatprep.subr.mxu0 0.0
        %1478 = vmatpush1.msra.mxu0 0.0
        %1479 = vmatprep.subr.mxu0 0.0
        %1480 = vmatpush1.msra.mxu0 0.0
        %1481 = vmatprep.subr.mxu0 0.0
        %1482 = vmatpush1.msra.mxu0 0.0
        %1483 = vmatprep.subr.mxu0 0.0
        %1484 = vmatpush1.msra.mxu0 0.0
        %1485 = vmatprep.subr.mxu0 0.0
        %1486 = vmatpush1.msra.mxu0 0.0
        %1487 = vmatprep.subr.mxu0 0.0
        %1488 = vmatpush1.msra.mxu0 0.0
        %1489 = vmatprep.subr.mxu0 0.0
        %1490 = vmatpush1.msra.mxu0 0.0
        %1491 = vmatprep.subr.mxu0 0.0
        %1492 = vmatpush1.msra.mxu0 0.0
        %1493 = vmatprep.subr.mxu0 0.0
        %1494 = vmatpush1.msra.mxu0 0.0
        %1495 = vmatprep.subr.mxu0 0.0
        %1496 = vmatpush1.msra.mxu0 0.0
        %1497 = vmatprep.subr.mxu0 0.0
        %1498 = vmatpush1.msra.mxu0 0.0
        %1499 = vmatprep.subr.mxu0 0.0
        %1500 = vmatpush1.msra.mxu0 0.0
        %1501 = vmatprep.subr.mxu0 0.0
        %1502 = vmatpush1.msra.mxu0 0.0
        %1503 = vmatprep.subr.mxu0 0.0
        %1504 = vmatpush1.msra.mxu0 0.0
        %1505 = vmatprep.subr.mxu0 0.0
        %1506 = vmatpush1.msra.mxu0 0.0
        %1507 = vmatprep.subr.mxu0 0.0
        %1508 = vmatpush1.msra.mxu0 0.0
        %1509 = vmatprep.subr.mxu0 0.0
        %1510 = vmatpush1.msra.mxu0 0.0
        %1511 = vmatprep.subr.mxu0 0.0
        %1512 = vmatpush1.msra.mxu0 0.0
        %1513 = vmatprep.subr.mxu0 0.0
        %1514 = vmatpush1.msra.mxu0 0.0
        %1515 = vmatprep.subr.mxu0 0.0
        %1516 = vmatpush1.msra.mxu0 0.0
        %1517 = vmatprep.subr.mxu0 0.0
        %1518 = vmatpush1.msra.mxu0 0.0
        %1519 = vmatprep.subr.mxu0 0.0
        %1520 = vmatpush1.msra.mxu0 0.0
        %1521 = vmatprep.subr.mxu0 0.0
        %1522 = vmatpush1.msra.mxu0 0.0
        %1523 = vmatprep.mubr.f32.mxu0 0.0
        %1524 = vmatmul.mubr.f32.gmra.mrb[0].mxu0 %v966
        %v1525 = vpop.f32.mrb[0].mxu0
        %v1526 = vadd.f32 %v1432, %v1525
        %v1527 = vpop.f32.mrb[0].mxu0
        %1528 = vmatprep.mubr.f32.mxu0 0.0
        %1529 = vmatmul.mubr.f32.gmra.mrb[0].mxu0 %v969
        %v1530 = vpop.f32.mrb[0].mxu0
        %v1531 = vadd.f32 %v1437, %v1530
        %v1532 = vpop.f32.mrb[0].mxu0
        %1533 = vmatprep.mubr.f32.mxu0 0.0
        %1534 = vmatmul.mubr.f32.gmra.mrb[0].mxu0 %v972
        %v1535 = vpop.f32.mrb[0].mxu0
        %v1536 = vadd.f32 %v1442, %v1535
        %v1537 = vpop.f32.mrb[0].mxu0
        %1538 = vmatprep.mubr.f32.mxu0 0.0
        %1539 = vmatmul.mubr.f32.gmra.mrb[0].mxu0 %v975
        %v1540 = vpop.f32.mrb[0].mxu0
        %v1541 = vadd.f32 %v1447, %v1540
        %v1542 = vpop.f32.mrb[0].mxu0
        %1543 = vmatprep.mubr.f32.mxu0 0.0
        %1544 = vmatmul.mubr.f32.gmra.mrb[0].mxu0 %v978
        %v1545 = vpop.f32.mrb[0].mxu0
        %v1546 = vadd.f32 %v1452, %v1545
        %v1547 = vpop.f32.mrb[0].mxu0
        %1548 = vdwg.mxu0
        %v1549 = vld [vmem:[%s14] sm:$0x1]
        %v1551 = vlaneseq
        %v1552 = vshrl.u32 %v1551, 7
        %v1553 = vsub.s32 0, %v1552
        %v1554 = vrot.slane %v1549, %v1553
        %v1556 = vadd.f32 %v1526, %v1554
        %v1557 = vadd.f32 %v1531, %v1554
        %v1558 = vadd.f32 %v1536, %v1554
        %v1559 = vadd.f32 %v1541, %v1554
        %v1560 = vadd.f32 %v1546, %v1554
        %v1561 = vmax.f32 %v1556, 0.0
        %v1562 = vmax.f32 %v1557, 0.0
        %v1563 = vmax.f32 %v1558, 0.0
        %v1564 = vmax.f32 %v1559, 0.0
        %v1565 = vmax.f32 %v1560, 0.0
        %v1566 = vld [vmem:[%s15] sm:$0xff]
        %v1567 = vld [vmem:[%s15 + $0x8] sm:$0xff]
        %v1568 = vld [vmem:[%s15 + $0x10] sm:$0xff]
        %v1569 = vld [vmem:[%s15 + $0x18] sm:$0xff]
        %v1570 = vld [vmem:[#allocation2] sm:$0x1]
        %v1572 = vlaneseq
        %v1573 = vshrl.u32 %v1572, 7
        %v1574 = vsub.s32 0, %v1573
        %v1575 = vrot.slane %v1570, %v1574
        %v1578 = vsel %vm843, %v1561, 0
        %v1581 = vsel %vm843, %v1562, 0
        %v1584 = vsel %vm843, %v1563, 0
        %v1587 = vsel %vm843, %v1564, 0
        %v1590 = vsel %vm843, %v1565, 0
        %1592 = vmatprep.subr.mxu0 0.0
        %1593 = vmatpush1.msra.mxu0 %v1566
        %1594 = vmatprep.subr.mxu0 0.0
        %1595 = vmatpush1.msra.mxu0 %v1567
        %1596 = vmatprep.subr.mxu0 0.0
        %1597 = vmatpush1.msra.mxu0 %v1568
        %1598 = vmatprep.subr.mxu0 0.0
        %1599 = vmatpush1.msra.mxu0 %v1569
        %1600 = vmatprep.subr.mxu0 0.0
        %1601 = vmatpush1.msra.mxu0 0.0
        %1602 = vmatprep.subr.mxu0 0.0
        %1603 = vmatpush1.msra.mxu0 0.0
        %1604 = vmatprep.subr.mxu0 0.0
        %1605 = vmatpush1.msra.mxu0 0.0
        %1606 = vmatprep.subr.mxu0 0.0
        %1607 = vmatpush1.msra.mxu0 0.0
        %1608 = vmatprep.subr.mxu0 0.0
        %1609 = vmatpush1.msra.mxu0 0.0
        %1610 = vmatprep.subr.mxu0 0.0
        %1611 = vmatpush1.msra.mxu0 0.0
        %1612 = vmatprep.subr.mxu0 0.0
        %1613 = vmatpush1.msra.mxu0 0.0
        %1614 = vmatprep.subr.mxu0 0.0
        %1615 = vmatpush1.msra.mxu0 0.0
        %1616 = vmatprep.subr.mxu0 0.0
        %1617 = vmatpush1.msra.mxu0 0.0
        %1618 = vmatprep.subr.mxu0 0.0
        %1619 = vmatpush1.msra.mxu0 0.0
        %1620 = vmatprep.subr.mxu0 0.0
        %1621 = vmatpush1.msra.mxu0 0.0
        %1622 = vmatprep.subr.mxu0 0.0
        %1623 = vmatpush1.msra.mxu0 0.0
        %1624 = vmatprep.subr.mxu0 0.0
        %1625 = vmatpush1.msra.mxu0 0.0
        %1626 = vmatprep.subr.mxu0 0.0
        %1627 = vmatpush1.msra.mxu0 0.0
        %1628 = vmatprep.subr.mxu0 0.0
        %1629 = vmatpush1.msra.mxu0 0.0
        %1630 = vmatprep.subr.mxu0 0.0
        %1631 = vmatpush1.msra.mxu0 0.0
        %1632 = vmatprep.subr.mxu0 0.0
        %1633 = vmatpush1.msra.mxu0 0.0
        %1634 = vmatprep.subr.mxu0 0.0
        %1635 = vmatpush1.msra.mxu0 0.0
        %1636 = vmatprep.subr.mxu0 0.0
        %1637 = vmatpush1.msra.mxu0 0.0
        %1638 = vmatprep.subr.mxu0 0.0
        %1639 = vmatpush1.msra.mxu0 0.0
        %1640 = vmatprep.subr.mxu0 0.0
        %1641 = vmatpush1.msra.mxu0 0.0
        %1642 = vmatprep.subr.mxu0 0.0
        %1643 = vmatpush1.msra.mxu0 0.0
        %1644 = vmatprep.subr.mxu0 0.0
        %1645 = vmatpush1.msra.mxu0 0.0
        %1646 = vmatprep.subr.mxu0 0.0
        %1647 = vmatpush1.msra.mxu0 0.0
        %1648 = vmatprep.subr.mxu0 0.0
        %1649 = vmatpush1.msra.mxu0 0.0
        %1650 = vmatprep.subr.mxu0 0.0
        %1651 = vmatpush1.msra.mxu0 0.0
        %1652 = vmatprep.subr.mxu0 0.0
        %1653 = vmatpush1.msra.mxu0 0.0
        %1654 = vmatprep.subr.mxu0 0.0
        %1655 = vmatpush1.msra.mxu0 0.0
        %1656 = vmatprep.mubr.f32.mxu0 0.0
        %1657 = vmatmul.mubr.f32.gmra.mrb[0].mxu0 %v1578
        %v1658 = vpop.f32.mrb[0].mxu0
        %v1659 = vadd.f32 %v1575, %v1658
        %v1660 = vpop.f32.mrb[0].mxu0
        %1661 = vmatprep.mubr.f32.mxu0 0.0
        %1662 = vmatmul.mubr.f32.gmra.mrb[0].mxu0 %v1581
        %v1663 = vpop.f32.mrb[0].mxu0
        %v1664 = vadd.f32 %v1575, %v1663
        %v1665 = vpop.f32.mrb[0].mxu0
        %1666 = vmatprep.mubr.f32.mxu0 0.0
        %1667 = vmatmul.mubr.f32.gmra.mrb[0].mxu0 %v1584
        %v1668 = vpop.f32.mrb[0].mxu0
        %v1669 = vadd.f32 %v1575, %v1668
        %v1670 = vpop.f32.mrb[0].mxu0
        %1671 = vmatprep.mubr.f32.mxu0 0.0
        %1672 = vmatmul.mubr.f32.gmra.mrb[0].mxu0 %v1587
        %v1673 = vpop.f32.mrb[0].mxu0
        %v1674 = vadd.f32 %v1575, %v1673
        %v1675 = vpop.f32.mrb[0].mxu0
        %1676 = vmatprep.mubr.f32.mxu0 0.0
        %1677 = vmatmul.mubr.f32.gmra.mrb[0].mxu0 %v1590
        %v1678 = vpop.f32.mrb[0].mxu0
        %v1679 = vadd.f32 %v1575, %v1678
        %v1680 = vpop.f32.mrb[0].mxu0
        %1681 = vdwg.mxu0
        %v1687 = vcombine.high %v1659, %v1659
        %v1689 = vunpack.c.l.s4 1966171168
        %v1690 = vunpack.c.0.s8 %v1689
        %v1691 = vlaneseq
        %v1692 = vshrl.u32 %v1691, 7
        %v1693 = vsub.s32 %v1690, %v1692
        %v1694 = vrot.slane %v1659, %v1693
        %v1696 = vunpack.c.l.s4 1966171168
        %v1697 = vunpack.c.0.s8 %v1696
        %v1698 = vlaneseq
        %v1699 = vshrl.u32 %v1698, 7
        %v1700 = vsub.s32 %v1697, %v1699
        %v1701 = vrot.slane %v1687, %v1700
        %v1702 = vcombine.high %v1694, %v1694
        %v1703 = vcombine.high %v1701, %v1701
        %v1705 = vunpack.c.l.s4 1966171168
        %v1706 = vunpack.c.0.s8 %v1705
        %v1707 = vlaneseq
        %v1708 = vshrl.u32 %v1707, 7
        %v1709 = vsub.s32 %v1706, %v1708
        %v1710 = vrot.slane %v1694, %v1709
        %v1712 = vunpack.c.l.s4 1966171168
        %v1713 = vunpack.c.0.s8 %v1712
        %v1714 = vlaneseq
        %v1715 = vshrl.u32 %v1714, 7
        %v1716 = vsub.s32 %v1713, %v1715
        %v1717 = vrot.slane %v1701, %v1716
        %v1719 = vunpack.c.l.s4 1966171168
        %v1720 = vunpack.c.0.s8 %v1719
        %v1721 = vlaneseq
        %v1722 = vshrl.u32 %v1721, 7
        %v1723 = vsub.s32 %v1720, %v1722
        %v1724 = vrot.slane %v1702, %v1723
        %v1726 = vunpack.c.l.s4 1966171168
        %v1727 = vunpack.c.0.s8 %v1726
        %v1728 = vlaneseq
        %v1729 = vshrl.u32 %v1728, 7
        %v1730 = vsub.s32 %v1727, %v1729
        %v1731 = vrot.slane %v1703, %v1730
        %v1732 = vcombine.high %v1710, %v1710
        %v1733 = vcombine.high %v1717, %v1717
        %v1734 = vcombine.high %v1724, %v1724
        %v1735 = vcombine.high %v1731, %v1731
        %v1736 = vcombine.high %v1664, %v1664
        %v1738 = vunpack.c.l.s4 1966171168
        %v1739 = vunpack.c.0.s8 %v1738
        %v1740 = vlaneseq
        %v1741 = vshrl.u32 %v1740, 7
        %v1742 = vsub.s32 %v1739, %v1741
        %v1743 = vrot.slane %v1664, %v1742
        %v1745 = vunpack.c.l.s4 1966171168
        %v1746 = vunpack.c.0.s8 %v1745
        %v1747 = vlaneseq
        %v1748 = vshrl.u32 %v1747, 7
        %v1749 = vsub.s32 %v1746, %v1748
        %v1750 = vrot.slane %v1736, %v1749
        %v1751 = vcombine.high %v1743, %v1743
        %v1752 = vcombine.high %v1750, %v1750
        %v1754 = vunpack.c.l.s4 1966171168
        %v1755 = vunpack.c.0.s8 %v1754
        %v1756 = vlaneseq
        %v1757 = vshrl.u32 %v1756, 7
        %v1758 = vsub.s32 %v1755, %v1757
        %v1759 = vrot.slane %v1743, %v1758
        %v1761 = vunpack.c.l.s4 1966171168
        %v1762 = vunpack.c.0.s8 %v1761
        %v1763 = vlaneseq
        %v1764 = vshrl.u32 %v1763, 7
        %v1765 = vsub.s32 %v1762, %v1764
        %v1766 = vrot.slane %v1750, %v1765
        %v1768 = vunpack.c.l.s4 1966171168
        %v1769 = vunpack.c.0.s8 %v1768
        %v1770 = vlaneseq
        %v1771 = vshrl.u32 %v1770, 7
        %v1772 = vsub.s32 %v1769, %v1771
        %v1773 = vrot.slane %v1751, %v1772
        %v1775 = vunpack.c.l.s4 1966171168
        %v1776 = vunpack.c.0.s8 %v1775
        %v1777 = vlaneseq
        %v1778 = vshrl.u32 %v1777, 7
        %v1779 = vsub.s32 %v1776, %v1778
        %v1780 = vrot.slane %v1752, %v1779
        %v1781 = vcombine.high %v1759, %v1759
        %v1782 = vcombine.high %v1766, %v1766
        %v1783 = vcombine.high %v1773, %v1773
        %v1784 = vcombine.high %v1780, %v1780
        %v1785 = vcombine.high %v1669, %v1669
        %v1787 = vunpack.c.l.s4 1966171168
        %v1788 = vunpack.c.0.s8 %v1787
        %v1789 = vlaneseq
        %v1790 = vshrl.u32 %v1789, 7
        %v1791 = vsub.s32 %v1788, %v1790
        %v1792 = vrot.slane %v1669, %v1791
        %v1794 = vunpack.c.l.s4 1966171168
        %v1795 = vunpack.c.0.s8 %v1794
        %v1796 = vlaneseq
        %v1797 = vshrl.u32 %v1796, 7
        %v1798 = vsub.s32 %v1795, %v1797
        %v1799 = vrot.slane %v1785, %v1798
        %v1800 = vcombine.high %v1792, %v1792
        %v1801 = vcombine.high %v1799, %v1799
        %v1803 = vunpack.c.l.s4 1966171168
        %v1804 = vunpack.c.0.s8 %v1803
        %v1805 = vlaneseq
        %v1806 = vshrl.u32 %v1805, 7
        %v1807 = vsub.s32 %v1804, %v1806
        %v1808 = vrot.slane %v1792, %v1807
        %v1810 = vunpack.c.l.s4 1966171168
        %v1811 = vunpack.c.0.s8 %v1810
        %v1812 = vlaneseq
        %v1813 = vshrl.u32 %v1812, 7
        %v1814 = vsub.s32 %v1811, %v1813
        %v1815 = vrot.slane %v1799, %v1814
        %v1817 = vunpack.c.l.s4 1966171168
        %v1818 = vunpack.c.0.s8 %v1817
        %v1819 = vlaneseq
        %v1820 = vshrl.u32 %v1819, 7
        %v1821 = vsub.s32 %v1818, %v1820
        %v1822 = vrot.slane %v1800, %v1821
        %v1824 = vunpack.c.l.s4 1966171168
        %v1825 = vunpack.c.0.s8 %v1824
        %v1826 = vlaneseq
        %v1827 = vshrl.u32 %v1826, 7
        %v1828 = vsub.s32 %v1825, %v1827
        %v1829 = vrot.slane %v1801, %v1828
        %v1830 = vcombine.high %v1808, %v1808
        %v1831 = vcombine.high %v1815, %v1815
        %v1832 = vcombine.high %v1822, %v1822
        %v1833 = vcombine.high %v1829, %v1829
        %v1834 = vcombine.high %v1674, %v1674
        %v1836 = vunpack.c.l.s4 1966171168
        %v1837 = vunpack.c.0.s8 %v1836
        %v1838 = vlaneseq
        %v1839 = vshrl.u32 %v1838, 7
        %v1840 = vsub.s32 %v1837, %v1839
        %v1841 = vrot.slane %v1674, %v1840
        %v1843 = vunpack.c.l.s4 1966171168
        %v1844 = vunpack.c.0.s8 %v1843
        %v1845 = vlaneseq
        %v1846 = vshrl.u32 %v1845, 7
        %v1847 = vsub.s32 %v1844, %v1846
        %v1848 = vrot.slane %v1834, %v1847
        %v1849 = vcombine.high %v1841, %v1841
        %v1850 = vcombine.high %v1848, %v1848
        %v1852 = vunpack.c.l.s4 1966171168
        %v1853 = vunpack.c.0.s8 %v1852
        %v1854 = vlaneseq
        %v1855 = vshrl.u32 %v1854, 7
        %v1856 = vsub.s32 %v1853, %v1855
        %v1857 = vrot.slane %v1841, %v1856
        %v1859 = vunpack.c.l.s4 1966171168
        %v1860 = vunpack.c.0.s8 %v1859
        %v1861 = vlaneseq
        %v1862 = vshrl.u32 %v1861, 7
        %v1863 = vsub.s32 %v1860, %v1862
        %v1864 = vrot.slane %v1848, %v1863
        %v1866 = vunpack.c.l.s4 1966171168
        %v1867 = vunpack.c.0.s8 %v1866
        %v1868 = vlaneseq
        %v1869 = vshrl.u32 %v1868, 7
        %v1870 = vsub.s32 %v1867, %v1869
        %v1871 = vrot.slane %v1849, %v1870
        %v1873 = vunpack.c.l.s4 1966171168
        %v1874 = vunpack.c.0.s8 %v1873
        %v1875 = vlaneseq
        %v1876 = vshrl.u32 %v1875, 7
        %v1877 = vsub.s32 %v1874, %v1876
        %v1878 = vrot.slane %v1850, %v1877
        %v1879 = vcombine.high %v1857, %v1857
        %v1880 = vcombine.high %v1864, %v1864
        %v1881 = vcombine.high %v1871, %v1871
        %v1882 = vcombine.high %v1878, %v1878
        %v1883 = vcombine.high %v1679, %v1679
        %v1885 = vunpack.c.l.s4 1966171168
        %v1886 = vunpack.c.0.s8 %v1885
        %v1887 = vlaneseq
        %v1888 = vshrl.u32 %v1887, 7
        %v1889 = vsub.s32 %v1886, %v1888
        %v1890 = vrot.slane %v1679, %v1889
        %v1892 = vunpack.c.l.s4 1966171168
        %v1893 = vunpack.c.0.s8 %v1892
        %v1894 = vlaneseq
        %v1895 = vshrl.u32 %v1894, 7
        %v1896 = vsub.s32 %v1893, %v1895
        %v1897 = vrot.slane %v1883, %v1896
        %v1898 = vcombine.high %v1890, %v1890
        %v1899 = vcombine.high %v1897, %v1897
        %v1901 = vunpack.c.l.s4 1966171168
        %v1902 = vunpack.c.0.s8 %v1901
        %v1903 = vlaneseq
        %v1904 = vshrl.u32 %v1903, 7
        %v1905 = vsub.s32 %v1902, %v1904
        %v1906 = vrot.slane %v1890, %v1905
        %v1908 = vunpack.c.l.s4 1966171168
        %v1909 = vunpack.c.0.s8 %v1908
        %v1910 = vlaneseq
        %v1911 = vshrl.u32 %v1910, 7
        %v1912 = vsub.s32 %v1909, %v1911
        %v1913 = vrot.slane %v1897, %v1912
        %v1915 = vunpack.c.l.s4 1966171168
        %v1916 = vunpack.c.0.s8 %v1915
        %v1917 = vlaneseq
        %v1918 = vshrl.u32 %v1917, 7
        %v1919 = vsub.s32 %v1916, %v1918
        %v1920 = vrot.slane %v1898, %v1919
        %v1922 = vunpack.c.l.s4 1966171168
        %v1923 = vunpack.c.0.s8 %v1922
        %v1924 = vlaneseq
        %v1925 = vshrl.u32 %v1924, 7
        %v1926 = vsub.s32 %v1923, %v1925
        %v1927 = vrot.slane %v1899, %v1926
        %v1928 = vcombine.high %v1906, %v1906
        %v1929 = vcombine.high %v1913, %v1913
        %v1930 = vcombine.high %v1920, %v1920
        %v1931 = vcombine.high %v1927, %v1927
        %v1972 = vcombine.low %v1710, %v1724
        %v1973 = vcombine.low %v1732, %v1734
        %v1975 = vunpack.c.l.s4 1966171168
        %v1976 = vunpack.c.0.s8 %v1975
        %v1977 = vlaneseq
        %v1978 = vshrl.u32 %v1977, 7
        %v1979 = vsub.s32 %v1976, %v1978
        %v1980 = vrot.slane %v1972, %v1979
        %v1982 = vunpack.c.l.s4 1966171168
        %v1983 = vunpack.c.0.s8 %v1982
        %v1984 = vlaneseq
        %v1985 = vshrl.u32 %v1984, 7
        %v1986 = vsub.s32 %v1983, %v1985
        %v1987 = vrot.slane %v1973, %v1986
        %v1989 = vunpack.c.l.s4 1966171168
        %v1990 = vunpack.c.0.s8 %v1989
        %v1991 = vlaneseq
        %v1992 = vshrl.u32 %v1991, 7
        %v1993 = vsub.s32 %v1990, %v1992
        %v1994 = vrot.slane %v1717, %v1993
        %v1995 = vcombine.low %v1980, %v1987
        %v1997 = vunpack.c.l.s4 1966171168
        %v1998 = vunpack.c.0.s8 %v1997
        %v1999 = vlaneseq
        %v2000 = vshrl.u32 %v1999, 7
        %v2001 = vsub.s32 %v1998, %v2000
        %v2002 = vrot.slane %v1995, %v2001
        %v2004 = vunpack.c.l.s4 1966171168
        %v2005 = vunpack.c.0.s8 %v2004
        %v2006 = vlaneseq
        %v2007 = vshrl.u32 %v2006, 7
        %v2008 = vsub.s32 %v2005, %v2007
        %v2009 = vrot.slane %v1994, %v2008
        %v2010 = vcombine.low %v2002, %v2009
        %v2011 = vcombine.low %v1731, %v1733
        %v2012 = vcombine.low %v1735, %v1759
        %v2014 = vunpack.c.l.s4 1966171168
        %v2015 = vunpack.c.0.s8 %v2014
        %v2016 = vlaneseq
        %v2017 = vshrl.u32 %v2016, 7
        %v2018 = vsub.s32 %v2015, %v2017
        %v2019 = vrot.slane %v2011, %v2018
        %v2021 = vunpack.c.l.s4 1966171168
        %v2022 = vunpack.c.0.s8 %v2021
        %v2023 = vlaneseq
        %v2024 = vshrl.u32 %v2023, 7
        %v2025 = vsub.s32 %v2022, %v2024
        %v2026 = vrot.slane %v2012, %v2025
        %v2028 = vunpack.c.l.s4 1966171168
        %v2029 = vunpack.c.0.s8 %v2028
        %v2030 = vlaneseq
        %v2031 = vshrl.u32 %v2030, 7
        %v2032 = vsub.s32 %v2029, %v2031
        %v2033 = vrot.slane %v1773, %v2032
        %v2034 = vcombine.low %v2019, %v2026
        %v2036 = vunpack.c.l.s4 1966171168
        %v2037 = vunpack.c.0.s8 %v2036
        %v2038 = vlaneseq
        %v2039 = vshrl.u32 %v2038, 7
        %v2040 = vsub.s32 %v2037, %v2039
        %v2041 = vrot.slane %v2034, %v2040
        %v2043 = vunpack.c.l.s4 1966171168
        %v2044 = vunpack.c.0.s8 %v2043
        %v2045 = vlaneseq
        %v2046 = vshrl.u32 %v2045, 7
        %v2047 = vsub.s32 %v2044, %v2046
        %v2048 = vrot.slane %v2033, %v2047
        %v2049 = vcombine.low %v2041, %v2048
        %v2050 = vcombine.low %v1781, %v1783
        %v2051 = vcombine.low %v1766, %v1780
        %v2053 = vunpack.c.l.s4 1966171168
        %v2054 = vunpack.c.0.s8 %v2053
        %v2055 = vlaneseq
        %v2056 = vshrl.u32 %v2055, 7
        %v2057 = vsub.s32 %v2054, %v2056
        %v2058 = vrot.slane %v2050, %v2057
        %v2060 = vunpack.c.l.s4 1966171168
        %v2061 = vunpack.c.0.s8 %v2060
        %v2062 = vlaneseq
        %v2063 = vshrl.u32 %v2062, 7
        %v2064 = vsub.s32 %v2061, %v2063
        %v2065 = vrot.slane %v2051, %v2064
        %v2067 = vunpack.c.l.s4 1966171168
        %v2068 = vunpack.c.0.s8 %v2067
        %v2069 = vlaneseq
        %v2070 = vshrl.u32 %v2069, 7
        %v2071 = vsub.s32 %v2068, %v2070
        %v2072 = vrot.slane %v1782, %v2071
        %v2073 = vcombine.low %v2058, %v2065
        %v2075 = vunpack.c.l.s4 1966171168
        %v2076 = vunpack.c.0.s8 %v2075
        %v2077 = vlaneseq
        %v2078 = vshrl.u32 %v2077, 7
        %v2079 = vsub.s32 %v2076, %v2078
        %v2080 = vrot.slane %v2073, %v2079
        %v2082 = vunpack.c.l.s4 1966171168
        %v2083 = vunpack.c.0.s8 %v2082
        %v2084 = vlaneseq
        %v2085 = vshrl.u32 %v2084, 7
        %v2086 = vsub.s32 %v2083, %v2085
        %v2087 = vrot.slane %v2072, %v2086
        %v2088 = vcombine.low %v2080, %v2087
        %v2089 = vcombine.low %v1784, %v1808
        %v2090 = vcombine.low %v1822, %v1830
        %v2092 = vunpack.c.l.s4 1966171168
        %v2093 = vunpack.c.0.s8 %v2092
        %v2094 = vlaneseq
        %v2095 = vshrl.u32 %v2094, 7
        %v2096 = vsub.s32 %v2093, %v2095
        %v2097 = vrot.slane %v2089, %v2096
        %v2099 = vunpack.c.l.s4 1966171168
        %v2100 = vunpack.c.0.s8 %v2099
        %v2101 = vlaneseq
        %v2102 = vshrl.u32 %v2101, 7
        %v2103 = vsub.s32 %v2100, %v2102
        %v2104 = vrot.slane %v2090, %v2103
        %v2106 = vunpack.c.l.s4 1966171168
        %v2107 = vunpack.c.0.s8 %v2106
        %v2108 = vlaneseq
        %v2109 = vshrl.u32 %v2108, 7
        %v2110 = vsub.s32 %v2107, %v2109
        %v2111 = vrot.slane %v1832, %v2110
        %v2112 = vcombine.low %v2097, %v2104
        %v2114 = vunpack.c.l.s4 1966171168
        %v2115 = vunpack.c.0.s8 %v2114
        %v2116 = vlaneseq
        %v2117 = vshrl.u32 %v2116, 7
        %v2118 = vsub.s32 %v2115, %v2117
        %v2119 = vrot.slane %v2112, %v2118
        %v2121 = vunpack.c.l.s4 1966171168
        %v2122 = vunpack.c.0.s8 %v2121
        %v2123 = vlaneseq
        %v2124 = vshrl.u32 %v2123, 7
        %v2125 = vsub.s32 %v2122, %v2124
        %v2126 = vrot.slane %v2111, %v2125
        %v2127 = vcombine.low %v2119, %v2126
        %v2128 = vcombine.low %v1815, %v1829
        %v2129 = vcombine.low %v1831, %v1833
        %v2131 = vunpack.c.l.s4 1966171168
        %v2132 = vunpack.c.0.s8 %v2131
        %v2133 = vlaneseq
        %v2134 = vshrl.u32 %v2133, 7
        %v2135 = vsub.s32 %v2132, %v2134
        %v2136 = vrot.slane %v2128, %v2135
        %v2138 = vunpack.c.l.s4 1966171168
        %v2139 = vunpack.c.0.s8 %v2138
        %v2140 = vlaneseq
        %v2141 = vshrl.u32 %v2140, 7
        %v2142 = vsub.s32 %v2139, %v2141
        %v2143 = vrot.slane %v2129, %v2142
        %v2145 = vunpack.c.l.s4 1966171168
        %v2146 = vunpack.c.0.s8 %v2145
        %v2147 = vlaneseq
        %v2148 = vshrl.u32 %v2147, 7
        %v2149 = vsub.s32 %v2146, %v2148
        %v2150 = vrot.slane %v1857, %v2149
        %v2151 = vcombine.low %v2136, %v2143
        %v2153 = vunpack.c.l.s4 1966171168
        %v2154 = vunpack.c.0.s8 %v2153
        %v2155 = vlaneseq
        %v2156 = vshrl.u32 %v2155, 7
        %v2157 = vsub.s32 %v2154, %v2156
        %v2158 = vrot.slane %v2151, %v2157
        %v2160 = vunpack.c.l.s4 1966171168
        %v2161 = vunpack.c.0.s8 %v2160
        %v2162 = vlaneseq
        %v2163 = vshrl.u32 %v2162, 7
        %v2164 = vsub.s32 %v2161, %v2163
        %v2165 = vrot.slane %v2150, %v2164
        %v2166 = vcombine.low %v2158, %v2165
        %v2167 = vcombine.low %v1871, %v1879
        %v2168 = vcombine.low %v1881, %v1864
        %v2170 = vunpack.c.l.s4 1966171168
        %v2171 = vunpack.c.0.s8 %v2170
        %v2172 = vlaneseq
        %v2173 = vshrl.u32 %v2172, 7
        %v2174 = vsub.s32 %v2171, %v2173
        %v2175 = vrot.slane %v2167, %v2174
        %v2177 = vunpack.c.l.s4 1966171168
        %v2178 = vunpack.c.0.s8 %v2177
        %v2179 = vlaneseq
        %v2180 = vshrl.u32 %v2179, 7
        %v2181 = vsub.s32 %v2178, %v2180
        %v2182 = vrot.slane %v2168, %v2181
        %v2184 = vunpack.c.l.s4 1966171168
        %v2185 = vunpack.c.0.s8 %v2184
        %v2186 = vlaneseq
        %v2187 = vshrl.u32 %v2186, 7
        %v2188 = vsub.s32 %v2185, %v2187
        %v2189 = vrot.slane %v1878, %v2188
        %v2190 = vcombine.low %v2175, %v2182
        %v2192 = vunpack.c.l.s4 1966171168
        %v2193 = vunpack.c.0.s8 %v2192
        %v2194 = vlaneseq
        %v2195 = vshrl.u32 %v2194, 7
        %v2196 = vsub.s32 %v2193, %v2195
        %v2197 = vrot.slane %v2190, %v2196
        %v2199 = vunpack.c.l.s4 1966171168
        %v2200 = vunpack.c.0.s8 %v2199
        %v2201 = vlaneseq
        %v2202 = vshrl.u32 %v2201, 7
        %v2203 = vsub.s32 %v2200, %v2202
        %v2204 = vrot.slane %v2189, %v2203
        %v2205 = vcombine.low %v2197, %v2204
        %v2206 = vcombine.low %v1880, %v1882
        %v2207 = vcombine.low %v1906, %v1920
        %v2209 = vunpack.c.l.s4 1966171168
        %v2210 = vunpack.c.0.s8 %v2209
        %v2211 = vlaneseq
        %v2212 = vshrl.u32 %v2211, 7
        %v2213 = vsub.s32 %v2210, %v2212
        %v2214 = vrot.slane %v2206, %v2213
        %v2216 = vunpack.c.l.s4 1966171168
        %v2217 = vunpack.c.0.s8 %v2216
        %v2218 = vlaneseq
        %v2219 = vshrl.u32 %v2218, 7
        %v2220 = vsub.s32 %v2217, %v2219
        %v2221 = vrot.slane %v2207, %v2220
        %v2223 = vunpack.c.l.s4 1966171168
        %v2224 = vunpack.c.0.s8 %v2223
        %v2225 = vlaneseq
        %v2226 = vshrl.u32 %v2225, 7
        %v2227 = vsub.s32 %v2224, %v2226
        %v2228 = vrot.slane %v1928, %v2227
        %v2229 = vcombine.low %v2214, %v2221
        %v2231 = vunpack.c.l.s4 1966171168
        %v2232 = vunpack.c.0.s8 %v2231
        %v2233 = vlaneseq
        %v2234 = vshrl.u32 %v2233, 7
        %v2235 = vsub.s32 %v2232, %v2234
        %v2236 = vrot.slane %v2229, %v2235
        %v2238 = vunpack.c.l.s4 1966171168
        %v2239 = vunpack.c.0.s8 %v2238
        %v2240 = vlaneseq
        %v2241 = vshrl.u32 %v2240, 7
        %v2242 = vsub.s32 %v2239, %v2241
        %v2243 = vrot.slane %v2228, %v2242
        %v2244 = vcombine.low %v2236, %v2243
        %v2245 = vcombine.low %v1930, %v1913
        %v2246 = vcombine.low %v1927, %v1929
        %v2248 = vunpack.c.l.s4 1966171168
        %v2249 = vunpack.c.0.s8 %v2248
        %v2250 = vlaneseq
        %v2251 = vshrl.u32 %v2250, 7
        %v2252 = vsub.s32 %v2249, %v2251
        %v2253 = vrot.slane %v2245, %v2252
        %v2255 = vunpack.c.l.s4 1966171168
        %v2256 = vunpack.c.0.s8 %v2255
        %v2257 = vlaneseq
        %v2258 = vshrl.u32 %v2257, 7
        %v2259 = vsub.s32 %v2256, %v2258
        %v2260 = vrot.slane %v2246, %v2259
        %v2262 = vunpack.c.l.s4 1966171168
        %v2263 = vunpack.c.0.s8 %v2262
        %v2264 = vlaneseq
        %v2265 = vshrl.u32 %v2264, 7
        %v2266 = vsub.s32 %v2263, %v2265
        %v2267 = vrot.slane %v1931, %v2266
        %v2268 = vcombine.low %v2253, %v2260
        %v2270 = vunpack.c.l.s4 1966171168
        %v2271 = vunpack.c.0.s8 %v2270
        %v2272 = vlaneseq
        %v2273 = vshrl.u32 %v2272, 7
        %v2274 = vsub.s32 %v2271, %v2273
        %v2275 = vrot.slane %v2268, %v2274
        %v2277 = vunpack.c.l.s4 1966171168
        %v2278 = vunpack.c.0.s8 %v2277
        %v2279 = vlaneseq
        %v2280 = vshrl.u32 %v2279, 7
        %v2281 = vsub.s32 %v2278, %v2280
        %v2282 = vrot.slane %v2267, %v2281
        %v2283 = vcombine.low %v2275, %v2282
        %2284 = vset.pattern.permute.xlu0 0
        %2285 = vperm.xlu0 %2284, %v2010
        %v2286 = vpop.permute.xlu0 %2285
        %2287 = vset.pattern.permute.xlu0 0
        %2288 = vperm.xlu0 %2287, %v2049
        %v2289 = vpop.permute.xlu0 %2288
        %2290 = vset.pattern.permute.xlu0 0
        %2291 = vperm.xlu0 %2290, %v2088
        %v2292 = vpop.permute.xlu0 %2291
        %2293 = vset.pattern.permute.xlu0 0
        %2294 = vperm.xlu0 %2293, %v2127
        %v2295 = vpop.permute.xlu0 %2294
        %2296 = vset.pattern.permute.xlu0 0
        %2297 = vperm.xlu0 %2296, %v2166
        %v2298 = vpop.permute.xlu0 %2297
        %2299 = vset.pattern.permute.xlu0 0
        %2300 = vperm.xlu0 %2299, %v2205
        %v2301 = vpop.permute.xlu0 %2300
        %2302 = vset.pattern.permute.xlu0 0
        %2303 = vperm.xlu0 %2302, %v2244
        %v2304 = vpop.permute.xlu0 %2303
        %2305 = vset.pattern.permute.xlu0 0
        %2306 = vperm.xlu0 %2305, %v2283
        %v2307 = vpop.permute.xlu0 %2306
        %v2308 = vlaneseq
        %v2309 = vand.u32 %v2308, 127
        %v2310 = vlaneseq
        %v2311 = vshrl.u32 %v2310, 7
        %v2312 = vsub.s32 %v2309, %v2311
        %v2313 = vrot.slane %v2286, %v2312
        %v2314 = vlaneseq
        %v2315 = vshrl.u32 %v2314, 7
        %v2316 = vsub.s32 %v2309, %v2315
        %v2317 = vrot.slane %v2289, %v2316
        %v2318 = vlaneseq
        %v2319 = vshrl.u32 %v2318, 7
        %v2320 = vsub.s32 %v2309, %v2319
        %v2321 = vrot.slane %v2292, %v2320
        %v2322 = vlaneseq
        %v2323 = vshrl.u32 %v2322, 7
        %v2324 = vsub.s32 %v2309, %v2323
        %v2325 = vrot.slane %v2295, %v2324
        %v2326 = vlaneseq
        %v2327 = vshrl.u32 %v2326, 7
        %v2328 = vsub.s32 %v2309, %v2327
        %v2329 = vrot.slane %v2298, %v2328
        %v2330 = vlaneseq
        %v2331 = vshrl.u32 %v2330, 7
        %v2332 = vsub.s32 %v2309, %v2331
        %v2333 = vrot.slane %v2301, %v2332
        %v2334 = vlaneseq
        %v2335 = vshrl.u32 %v2334, 7
        %v2336 = vsub.s32 %v2309, %v2335
        %v2337 = vrot.slane %v2304, %v2336
        %v2338 = vlaneseq
        %v2339 = vshrl.u32 %v2338, 7
        %v2340 = vsub.s32 %v2309, %v2339
        %v2341 = vrot.slane %v2307, %v2340
        %vm2342 = vcmask 1041409
        %v2343 = vsel %vm2342, %v2317, %v2313
        %vm2344 = vcmask 1042434
        %v2345 = vsel %vm2344, %v2321, %v2343
        %vm2346 = vcmask 1043459
        %v2347 = vsel %vm2346, %v2325, %v2345
        %vm2348 = vcmask 1044484
        %v2349 = vsel %vm2348, %v2329, %v2347
        %vm2350 = vcmask 1045509
        %v2351 = vsel %vm2350, %v2333, %v2349
        %vm2352 = vcmask 1046534
        %v2353 = vsel %vm2352, %v2337, %v2351
        %vm2354 = vcmask 1047559
        %v2355 = vsel %vm2354, %v2341, %v2353
        %vm2357 = vcmask 39936
        %v2358 = vsel %vm2357, %v2355, -inf
        %2359 = vmax.xlane.f32.xlu0 %v2358
        %v2360 = vpop.xlane.xlu0 %2359
        %v2362 = vlaneseq
        %v2363 = vshrl.u32 %v2362, 7
        %v2364 = vsub.s32 0, %v2363
        %v2365 = vrot.slane %v2360, %v2364
        %v2366 = vlaneseq
        %v2367 = vshrl.u32 %v2366, 7
        %v2368 = vsub.s32 1, %v2367
        %v2369 = vrot.slane %v2360, %v2368
        %v2370 = vlaneseq
        %v2371 = vshrl.u32 %v2370, 7
        %v2372 = vsub.s32 2, %v2371
        %v2373 = vrot.slane %v2360, %v2372
        %v2374 = vlaneseq
        %v2375 = vshrl.u32 %v2374, 7
        %v2376 = vsub.s32 3, %v2375
        %v2377 = vrot.slane %v2360, %v2376
        %v2378 = vlaneseq
        %v2379 = vshrl.u32 %v2378, 7
        %v2380 = vsub.s32 4, %v2379
        %v2381 = vrot.slane %v2360, %v2380
        %v2382 = vlaneseq
        %v2383 = vshrl.u32 %v2382, 7
        %v2384 = vsub.s32 5, %v2383
        %v2385 = vrot.slane %v2360, %v2384
        %v2386 = vlaneseq
        %v2387 = vshrl.u32 %v2386, 7
        %v2388 = vsub.s32 6, %v2387
        %v2389 = vrot.slane %v2360, %v2388
        %v2390 = vlaneseq
        %v2391 = vshrl.u32 %v2390, 7
        %v2392 = vsub.s32 7, %v2391
        %v2393 = vrot.slane %v2360, %v2392
        %v2394 = vcombine.low %v2365, %v2369
        %v2395 = vcombine.low %v2373, %v2377
        %v2396 = vcombine.low %v2381, %v2385
        %v2397 = vcombine.low %v2389, %v2393
        %v2399 = vunpack.c.l.s4 1966171168
        %v2400 = vunpack.c.0.s8 %v2399
        %v2401 = vlaneseq
        %v2402 = vshrl.u32 %v2401, 7
        %v2403 = vsub.s32 %v2400, %v2402
        %v2404 = vrot.slane %v2394, %v2403
        %v2406 = vunpack.c.l.s4 1966171168
        %v2407 = vunpack.c.0.s8 %v2406
        %v2408 = vlaneseq
        %v2409 = vshrl.u32 %v2408, 7
        %v2410 = vsub.s32 %v2407, %v2409
        %v2411 = vrot.slane %v2395, %v2410
        %v2413 = vunpack.c.l.s4 1966171168
        %v2414 = vunpack.c.0.s8 %v2413
        %v2415 = vlaneseq
        %v2416 = vshrl.u32 %v2415, 7
        %v2417 = vsub.s32 %v2414, %v2416
        %v2418 = vrot.slane %v2396, %v2417
        %v2420 = vunpack.c.l.s4 1966171168
        %v2421 = vunpack.c.0.s8 %v2420
        %v2422 = vlaneseq
        %v2423 = vshrl.u32 %v2422, 7
        %v2424 = vsub.s32 %v2421, %v2423
        %v2425 = vrot.slane %v2397, %v2424
        %v2426 = vcombine.low %v2404, %v2411
        %v2427 = vcombine.low %v2418, %v2425
        %v2429 = vunpack.c.l.s4 1966171168
        %v2430 = vunpack.c.0.s8 %v2429
        %v2431 = vlaneseq
        %v2432 = vshrl.u32 %v2431, 7
        %v2433 = vsub.s32 %v2430, %v2432
        %v2434 = vrot.slane %v2426, %v2433
        %v2436 = vunpack.c.l.s4 1966171168
        %v2437 = vunpack.c.0.s8 %v2436
        %v2438 = vlaneseq
        %v2439 = vshrl.u32 %v2438, 7
        %v2440 = vsub.s32 %v2437, %v2439
        %v2441 = vrot.slane %v2427, %v2440
        %v2442 = vcombine.low %v2434, %v2441
        %v2443 = vlaneseq
        %v2444 = vshrl.u32 %v2443, 7
        %v2445 = vsub.s32 0, %v2444
        %v2446 = vrot.slane %v2442, %v2445
        %2448 = vbcast.lane.b32.xlu0 %v2446, 256
        %v2449 = vpop.permute.xlu0 %2448
        %v2450 = vlaneseq
        %v2451 = vshrl.u32 %v2450, 7
        %v2452 = vsub.s32 1, %v2451
        %v2453 = vrot.slane %v2442, %v2452
        %2455 = vbcast.lane.b32.xlu0 %v2453, 256
        %v2456 = vpop.permute.xlu0 %2455
        %v2457 = vlaneseq
        %v2458 = vshrl.u32 %v2457, 7
        %v2459 = vsub.s32 2, %v2458
        %v2460 = vrot.slane %v2442, %v2459
        %2462 = vbcast.lane.b32.xlu0 %v2460, 256
        %v2463 = vpop.permute.xlu0 %2462
        %v2464 = vlaneseq
        %v2465 = vshrl.u32 %v2464, 7
        %v2466 = vsub.s32 3, %v2465
        %v2467 = vrot.slane %v2442, %v2466
        %2469 = vbcast.lane.b32.xlu0 %v2467, 256
        %v2470 = vpop.permute.xlu0 %2469
        %v2471 = vlaneseq
        %v2472 = vshrl.u32 %v2471, 7
        %v2473 = vsub.s32 4, %v2472
        %v2474 = vrot.slane %v2442, %v2473
        %2476 = vbcast.lane.b32.xlu0 %v2474, 256
        %v2477 = vpop.permute.xlu0 %2476
        %v2478 = vlaneseq
        %v2479 = vshrl.u32 %v2478, 7
        %v2480 = vsub.s32 5, %v2479
        %v2481 = vrot.slane %v2442, %v2480
        %2483 = vbcast.lane.b32.xlu0 %v2481, 256
        %v2484 = vpop.permute.xlu0 %2483
        %v2485 = vlaneseq
        %v2486 = vshrl.u32 %v2485, 7
        %v2487 = vsub.s32 6, %v2486
        %v2488 = vrot.slane %v2442, %v2487
        %2490 = vbcast.lane.b32.xlu0 %v2488, 256
        %v2491 = vpop.permute.xlu0 %2490
        %v2492 = vlaneseq
        %v2493 = vshrl.u32 %v2492, 7
        %v2494 = vsub.s32 7, %v2493
        %v2495 = vrot.slane %v2442, %v2494
        %2497 = vbcast.lane.b32.xlu0 %v2495, 256
        %v2498 = vpop.permute.xlu0 %2497
        %v2499 = vcombine.high %v2449, %v2449
        %v2501 = vunpack.c.l.s4 1966171168
        %v2502 = vunpack.c.0.s8 %v2501
        %v2503 = vlaneseq
        %v2504 = vshrl.u32 %v2503, 7
        %v2505 = vsub.s32 %v2502, %v2504
        %v2506 = vrot.slane %v2449, %v2505
        %v2508 = vunpack.c.l.s4 1966171168
        %v2509 = vunpack.c.0.s8 %v2508
        %v2510 = vlaneseq
        %v2511 = vshrl.u32 %v2510, 7
        %v2512 = vsub.s32 %v2509, %v2511
        %v2513 = vrot.slane %v2499, %v2512
        %v2514 = vcombine.high %v2506, %v2506
        %v2516 = vunpack.c.l.s4 1966171168
        %v2517 = vunpack.c.0.s8 %v2516
        %v2518 = vlaneseq
        %v2519 = vshrl.u32 %v2518, 7
        %v2520 = vsub.s32 %v2517, %v2519
        %v2521 = vrot.slane %v2506, %v2520
        %v2523 = vunpack.c.l.s4 1966171168
        %v2524 = vunpack.c.0.s8 %v2523
        %v2525 = vlaneseq
        %v2526 = vshrl.u32 %v2525, 7
        %v2527 = vsub.s32 %v2524, %v2526
        %v2528 = vrot.slane %v2513, %v2527
        %v2530 = vunpack.c.l.s4 1966171168
        %v2531 = vunpack.c.0.s8 %v2530
        %v2532 = vlaneseq
        %v2533 = vshrl.u32 %v2532, 7
        %v2534 = vsub.s32 %v2531, %v2533
        %v2535 = vrot.slane %v2514, %v2534
        %v2536 = vcombine.high %v2521, %v2521
        %v2537 = vcombine.high %v2535, %v2535
        %v2538 = vcombine.high %v2456, %v2456
        %v2540 = vunpack.c.l.s4 1966171168
        %v2541 = vunpack.c.0.s8 %v2540
        %v2542 = vlaneseq
        %v2543 = vshrl.u32 %v2542, 7
        %v2544 = vsub.s32 %v2541, %v2543
        %v2545 = vrot.slane %v2456, %v2544
        %v2547 = vunpack.c.l.s4 1966171168
        %v2548 = vunpack.c.0.s8 %v2547
        %v2549 = vlaneseq
        %v2550 = vshrl.u32 %v2549, 7
        %v2551 = vsub.s32 %v2548, %v2550
        %v2552 = vrot.slane %v2538, %v2551
        %v2553 = vcombine.high %v2545, %v2545
        %v2555 = vunpack.c.l.s4 1966171168
        %v2556 = vunpack.c.0.s8 %v2555
        %v2557 = vlaneseq
        %v2558 = vshrl.u32 %v2557, 7
        %v2559 = vsub.s32 %v2556, %v2558
        %v2560 = vrot.slane %v2545, %v2559
        %v2562 = vunpack.c.l.s4 1966171168
        %v2563 = vunpack.c.0.s8 %v2562
        %v2564 = vlaneseq
        %v2565 = vshrl.u32 %v2564, 7
        %v2566 = vsub.s32 %v2563, %v2565
        %v2567 = vrot.slane %v2552, %v2566
        %v2569 = vunpack.c.l.s4 1966171168
        %v2570 = vunpack.c.0.s8 %v2569
        %v2571 = vlaneseq
        %v2572 = vshrl.u32 %v2571, 7
        %v2573 = vsub.s32 %v2570, %v2572
        %v2574 = vrot.slane %v2553, %v2573
        %v2575 = vcombine.high %v2560, %v2560
        %v2576 = vcombine.high %v2574, %v2574
        %v2577 = vcombine.high %v2463, %v2463
        %v2579 = vunpack.c.l.s4 1966171168
        %v2580 = vunpack.c.0.s8 %v2579
        %v2581 = vlaneseq
        %v2582 = vshrl.u32 %v2581, 7
        %v2583 = vsub.s32 %v2580, %v2582
        %v2584 = vrot.slane %v2463, %v2583
        %v2586 = vunpack.c.l.s4 1966171168
        %v2587 = vunpack.c.0.s8 %v2586
        %v2588 = vlaneseq
        %v2589 = vshrl.u32 %v2588, 7
        %v2590 = vsub.s32 %v2587, %v2589
        %v2591 = vrot.slane %v2577, %v2590
        %v2592 = vcombine.high %v2584, %v2584
        %v2594 = vunpack.c.l.s4 1966171168
        %v2595 = vunpack.c.0.s8 %v2594
        %v2596 = vlaneseq
        %v2597 = vshrl.u32 %v2596, 7
        %v2598 = vsub.s32 %v2595, %v2597
        %v2599 = vrot.slane %v2584, %v2598
        %v2601 = vunpack.c.l.s4 1966171168
        %v2602 = vunpack.c.0.s8 %v2601
        %v2603 = vlaneseq
        %v2604 = vshrl.u32 %v2603, 7
        %v2605 = vsub.s32 %v2602, %v2604
        %v2606 = vrot.slane %v2591, %v2605
        %v2608 = vunpack.c.l.s4 1966171168
        %v2609 = vunpack.c.0.s8 %v2608
        %v2610 = vlaneseq
        %v2611 = vshrl.u32 %v2610, 7
        %v2612 = vsub.s32 %v2609, %v2611
        %v2613 = vrot.slane %v2592, %v2612
        %v2614 = vcombine.high %v2599, %v2599
        %v2615 = vcombine.high %v2613, %v2613
        %v2616 = vcombine.high %v2470, %v2470
        %v2618 = vunpack.c.l.s4 1966171168
        %v2619 = vunpack.c.0.s8 %v2618
        %v2620 = vlaneseq
        %v2621 = vshrl.u32 %v2620, 7
        %v2622 = vsub.s32 %v2619, %v2621
        %v2623 = vrot.slane %v2470, %v2622
        %v2625 = vunpack.c.l.s4 1966171168
        %v2626 = vunpack.c.0.s8 %v2625
        %v2627 = vlaneseq
        %v2628 = vshrl.u32 %v2627, 7
        %v2629 = vsub.s32 %v2626, %v2628
        %v2630 = vrot.slane %v2616, %v2629
        %v2631 = vcombine.high %v2623, %v2623
        %v2633 = vunpack.c.l.s4 1966171168
        %v2634 = vunpack.c.0.s8 %v2633
        %v2635 = vlaneseq
        %v2636 = vshrl.u32 %v2635, 7
        %v2637 = vsub.s32 %v2634, %v2636
        %v2638 = vrot.slane %v2623, %v2637
        %v2640 = vunpack.c.l.s4 1966171168
        %v2641 = vunpack.c.0.s8 %v2640
        %v2642 = vlaneseq
        %v2643 = vshrl.u32 %v2642, 7
        %v2644 = vsub.s32 %v2641, %v2643
        %v2645 = vrot.slane %v2630, %v2644
        %v2647 = vunpack.c.l.s4 1966171168
        %v2648 = vunpack.c.0.s8 %v2647
        %v2649 = vlaneseq
        %v2650 = vshrl.u32 %v2649, 7
        %v2651 = vsub.s32 %v2648, %v2650
        %v2652 = vrot.slane %v2631, %v2651
        %v2653 = vcombine.high %v2638, %v2638
        %v2654 = vcombine.high %v2652, %v2652
        %v2655 = vcombine.high %v2477, %v2477
        %v2657 = vunpack.c.l.s4 1966171168
        %v2658 = vunpack.c.0.s8 %v2657
        %v2659 = vlaneseq
        %v2660 = vshrl.u32 %v2659, 7
        %v2661 = vsub.s32 %v2658, %v2660
        %v2662 = vrot.slane %v2477, %v2661
        %v2664 = vunpack.c.l.s4 1966171168
        %v2665 = vunpack.c.0.s8 %v2664
        %v2666 = vlaneseq
        %v2667 = vshrl.u32 %v2666, 7
        %v2668 = vsub.s32 %v2665, %v2667
        %v2669 = vrot.slane %v2655, %v2668
        %v2670 = vcombine.high %v2662, %v2662
        %v2672 = vunpack.c.l.s4 1966171168
        %v2673 = vunpack.c.0.s8 %v2672
        %v2674 = vlaneseq
        %v2675 = vshrl.u32 %v2674, 7
        %v2676 = vsub.s32 %v2673, %v2675
        %v2677 = vrot.slane %v2662, %v2676
        %v2679 = vunpack.c.l.s4 1966171168
        %v2680 = vunpack.c.0.s8 %v2679
        %v2681 = vlaneseq
        %v2682 = vshrl.u32 %v2681, 7
        %v2683 = vsub.s32 %v2680, %v2682
        %v2684 = vrot.slane %v2669, %v2683
        %v2686 = vunpack.c.l.s4 1966171168
        %v2687 = vunpack.c.0.s8 %v2686
        %v2688 = vlaneseq
        %v2689 = vshrl.u32 %v2688, 7
        %v2690 = vsub.s32 %v2687, %v2689
        %v2691 = vrot.slane %v2670, %v2690
        %v2692 = vcombine.high %v2677, %v2677
        %v2693 = vcombine.high %v2691, %v2691
        %v2694 = vcombine.high %v2484, %v2484
        %v2696 = vunpack.c.l.s4 1966171168
        %v2697 = vunpack.c.0.s8 %v2696
        %v2698 = vlaneseq
        %v2699 = vshrl.u32 %v2698, 7
        %v2700 = vsub.s32 %v2697, %v2699
        %v2701 = vrot.slane %v2484, %v2700
        %v2703 = vunpack.c.l.s4 1966171168
        %v2704 = vunpack.c.0.s8 %v2703
        %v2705 = vlaneseq
        %v2706 = vshrl.u32 %v2705, 7
        %v2707 = vsub.s32 %v2704, %v2706
        %v2708 = vrot.slane %v2694, %v2707
        %v2709 = vcombine.high %v2701, %v2701
        %v2711 = vunpack.c.l.s4 1966171168
        %v2712 = vunpack.c.0.s8 %v2711
        %v2713 = vlaneseq
        %v2714 = vshrl.u32 %v2713, 7
        %v2715 = vsub.s32 %v2712, %v2714
        %v2716 = vrot.slane %v2701, %v2715
        %v2718 = vunpack.c.l.s4 1966171168
        %v2719 = vunpack.c.0.s8 %v2718
        %v2720 = vlaneseq
        %v2721 = vshrl.u32 %v2720, 7
        %v2722 = vsub.s32 %v2719, %v2721
        %v2723 = vrot.slane %v2708, %v2722
        %v2725 = vunpack.c.l.s4 1966171168
        %v2726 = vunpack.c.0.s8 %v2725
        %v2727 = vlaneseq
        %v2728 = vshrl.u32 %v2727, 7
        %v2729 = vsub.s32 %v2726, %v2728
        %v2730 = vrot.slane %v2709, %v2729
        %v2731 = vcombine.high %v2716, %v2716
        %v2732 = vcombine.high %v2730, %v2730
        %v2733 = vcombine.high %v2491, %v2491
        %v2735 = vunpack.c.l.s4 1966171168
        %v2736 = vunpack.c.0.s8 %v2735
        %v2737 = vlaneseq
        %v2738 = vshrl.u32 %v2737, 7
        %v2739 = vsub.s32 %v2736, %v2738
        %v2740 = vrot.slane %v2491, %v2739
        %v2742 = vunpack.c.l.s4 1966171168
        %v2743 = vunpack.c.0.s8 %v2742
        %v2744 = vlaneseq
        %v2745 = vshrl.u32 %v2744, 7
        %v2746 = vsub.s32 %v2743, %v2745
        %v2747 = vrot.slane %v2733, %v2746
        %v2748 = vcombine.high %v2740, %v2740
        %v2750 = vunpack.c.l.s4 1966171168
        %v2751 = vunpack.c.0.s8 %v2750
        %v2752 = vlaneseq
        %v2753 = vshrl.u32 %v2752, 7
        %v2754 = vsub.s32 %v2751, %v2753
        %v2755 = vrot.slane %v2740, %v2754
        %v2757 = vunpack.c.l.s4 1966171168
        %v2758 = vunpack.c.0.s8 %v2757
        %v2759 = vlaneseq
        %v2760 = vshrl.u32 %v2759, 7
        %v2761 = vsub.s32 %v2758, %v2760
        %v2762 = vrot.slane %v2747, %v2761
        %v2764 = vunpack.c.l.s4 1966171168
        %v2765 = vunpack.c.0.s8 %v2764
        %v2766 = vlaneseq
        %v2767 = vshrl.u32 %v2766, 7
        %v2768 = vsub.s32 %v2765, %v2767
        %v2769 = vrot.slane %v2748, %v2768
        %v2770 = vcombine.high %v2755, %v2755
        %v2771 = vcombine.high %v2769, %v2769
        %v2772 = vcombine.high %v2498, %v2498
        %v2774 = vunpack.c.l.s4 1966171168
        %v2775 = vunpack.c.0.s8 %v2774
        %v2776 = vlaneseq
        %v2777 = vshrl.u32 %v2776, 7
        %v2778 = vsub.s32 %v2775, %v2777
        %v2779 = vrot.slane %v2498, %v2778
        %v2781 = vunpack.c.l.s4 1966171168
        %v2782 = vunpack.c.0.s8 %v2781
        %v2783 = vlaneseq
        %v2784 = vshrl.u32 %v2783, 7
        %v2785 = vsub.s32 %v2782, %v2784
        %v2786 = vrot.slane %v2772, %v2785
        %v2787 = vcombine.high %v2779, %v2779
        %v2789 = vunpack.c.l.s4 1966171168
        %v2790 = vunpack.c.0.s8 %v2789
        %v2791 = vlaneseq
        %v2792 = vshrl.u32 %v2791, 7
        %v2793 = vsub.s32 %v2790, %v2792
        %v2794 = vrot.slane %v2779, %v2793
        %v2796 = vunpack.c.l.s4 1966171168
        %v2797 = vunpack.c.0.s8 %v2796
        %v2798 = vlaneseq
        %v2799 = vshrl.u32 %v2798, 7
        %v2800 = vsub.s32 %v2797, %v2799
        %v2801 = vrot.slane %v2786, %v2800
        %v2803 = vunpack.c.l.s4 1966171168
        %v2804 = vunpack.c.0.s8 %v2803
        %v2805 = vlaneseq
        %v2806 = vshrl.u32 %v2805, 7
        %v2807 = vsub.s32 %v2804, %v2806
        %v2808 = vrot.slane %v2787, %v2807
        %v2809 = vcombine.high %v2794, %v2794
        %v2810 = vcombine.high %v2808, %v2808
        %v2851 = vsub.f32 %v1710, %v2521
        %v2852 = vsub.f32 %v1724, %v2535
        %v2853 = vsub.f32 %v1732, %v2536
        %v2854 = vsub.f32 %v1734, %v2537
        %v2855 = vsub.f32 %v1717, %v2528
        %v2856 = vsub.f32 %v1731, %v2560
        %v2857 = vsub.f32 %v1733, %v2574
        %v2858 = vsub.f32 %v1735, %v2575
        %v2859 = vsub.f32 %v1759, %v2576
        %v2860 = vsub.f32 %v1773, %v2567
        %v2861 = vsub.f32 %v1781, %v2599
        %v2862 = vsub.f32 %v1783, %v2613
        %v2863 = vsub.f32 %v1766, %v2614
        %v2864 = vsub.f32 %v1780, %v2615
        %v2865 = vsub.f32 %v1782, %v2606
        %v2866 = vsub.f32 %v1784, %v2638
        %v2867 = vsub.f32 %v1808, %v2652
        %v2868 = vsub.f32 %v1822, %v2653
        %v2869 = vsub.f32 %v1830, %v2654
        %v2870 = vsub.f32 %v1832, %v2645
        %v2871 = vsub.f32 %v1815, %v2677
        %v2872 = vsub.f32 %v1829, %v2691
        %v2873 = vsub.f32 %v1831, %v2692
        %v2874 = vsub.f32 %v1833, %v2693
        %v2875 = vsub.f32 %v1857, %v2684
        %v2876 = vsub.f32 %v1871, %v2716
        %v2877 = vsub.f32 %v1879, %v2730
        %v2878 = vsub.f32 %v1881, %v2731
        %v2879 = vsub.f32 %v1864, %v2732
        %v2880 = vsub.f32 %v1878, %v2723
        %v2881 = vsub.f32 %v1880, %v2755
        %v2882 = vsub.f32 %v1882, %v2769
        %v2883 = vsub.f32 %v1906, %v2770
        %v2884 = vsub.f32 %v1920, %v2771
        %v2885 = vsub.f32 %v1928, %v2762
        %v2886 = vsub.f32 %v1930, %v2794
        %v2887 = vsub.f32 %v1913, %v2808
        %v2888 = vsub.f32 %v1927, %v2809
        %v2889 = vsub.f32 %v1929, %v2810
        %v2890 = vsub.f32 %v1931, %v2801
        %v2891 = vmul.f32 %v2851, 1.442695
        %v2892 = vpow.pop %v2891
        %v2893 = vmul.f32 %v2852, 1.442695
        %v2894 = vpow.pop %v2893
        %v2895 = vmul.f32 %v2853, 1.442695
        %v2896 = vpow.pop %v2895
        %v2897 = vmul.f32 %v2854, 1.442695
        %v2898 = vpow.pop %v2897
        %v2899 = vmul.f32 %v2855, 1.442695
        %v2900 = vpow.pop %v2899
        %v2901 = vmul.f32 %v2856, 1.442695
        %v2902 = vpow.pop %v2901
        %v2903 = vmul.f32 %v2857, 1.442695
        %v2904 = vpow.pop %v2903
        %v2905 = vmul.f32 %v2858, 1.442695
        %v2906 = vpow.pop %v2905
        %v2907 = vmul.f32 %v2859, 1.442695
        %v2908 = vpow.pop %v2907
        %v2909 = vmul.f32 %v2860, 1.442695
        %v2910 = vpow.pop %v2909
        %v2911 = vmul.f32 %v2861, 1.442695
        %v2912 = vpow.pop %v2911
        %v2913 = vmul.f32 %v2862, 1.442695
        %v2914 = vpow.pop %v2913
        %v2915 = vmul.f32 %v2863, 1.442695
        %v2916 = vpow.pop %v2915
        %v2917 = vmul.f32 %v2864, 1.442695
        %v2918 = vpow.pop %v2917
        %v2919 = vmul.f32 %v2865, 1.442695
        %v2920 = vpow.pop %v2919
        %v2921 = vmul.f32 %v2866, 1.442695
        %v2922 = vpow.pop %v2921
        %v2923 = vmul.f32 %v2867, 1.442695
        %v2924 = vpow.pop %v2923
        %v2925 = vmul.f32 %v2868, 1.442695
        %v2926 = vpow.pop %v2925
        %v2927 = vmul.f32 %v2869, 1.442695
        %v2928 = vpow.pop %v2927
        %v2929 = vmul.f32 %v2870, 1.442695
        %v2930 = vpow.pop %v2929
        %v2931 = vmul.f32 %v2871, 1.442695
        %v2932 = vpow.pop %v2931
        %v2933 = vmul.f32 %v2872, 1.442695
        %v2934 = vpow.pop %v2933
        %v2935 = vmul.f32 %v2873, 1.442695
        %v2936 = vpow.pop %v2935
        %v2937 = vmul.f32 %v2874, 1.442695
        %v2938 = vpow.pop %v2937
        %v2939 = vmul.f32 %v2875, 1.442695
        %v2940 = vpow.pop %v2939
        %v2941 = vmul.f32 %v2876, 1.442695
        %v2942 = vpow.pop %v2941
        %v2943 = vmul.f32 %v2877, 1.442695
        %v2944 = vpow.pop %v2943
        %v2945 = vmul.f32 %v2878, 1.442695
        %v2946 = vpow.pop %v2945
        %v2947 = vmul.f32 %v2879, 1.442695
        %v2948 = vpow.pop %v2947
        %v2949 = vmul.f32 %v2880, 1.442695
        %v2950 = vpow.pop %v2949
        %v2951 = vmul.f32 %v2881, 1.442695
        %v2952 = vpow.pop %v2951
        %v2953 = vmul.f32 %v2882, 1.442695
        %v2954 = vpow.pop %v2953
        %v2955 = vmul.f32 %v2883, 1.442695
        %v2956 = vpow.pop %v2955
        %v2957 = vmul.f32 %v2884, 1.442695
        %v2958 = vpow.pop %v2957
        %v2959 = vmul.f32 %v2885, 1.442695
        %v2960 = vpow.pop %v2959
        %v2961 = vmul.f32 %v2886, 1.442695
        %v2962 = vpow.pop %v2961
        %v2963 = vmul.f32 %v2887, 1.442695
        %v2964 = vpow.pop %v2963
        %v2965 = vmul.f32 %v2888, 1.442695
        %v2966 = vpow.pop %v2965
        %v2967 = vmul.f32 %v2889, 1.442695
        %v2968 = vpow.pop %v2967
        %v2969 = vmul.f32 %v2890, 1.442695
        %v2970 = vpow.pop %v2969
        %v3011 = vcombine.low %v2892, %v2894
        %v3012 = vcombine.low %v2896, %v2898
        %v3014 = vunpack.c.l.s4 1966171168
        %v3015 = vunpack.c.0.s8 %v3014
        %v3016 = vlaneseq
        %v3017 = vshrl.u32 %v3016, 7
        %v3018 = vsub.s32 %v3015, %v3017
        %v3019 = vrot.slane %v3011, %v3018
        %v3021 = vunpack.c.l.s4 1966171168
        %v3022 = vunpack.c.0.s8 %v3021
        %v3023 = vlaneseq
        %v3024 = vshrl.u32 %v3023, 7
        %v3025 = vsub.s32 %v3022, %v3024
        %v3026 = vrot.slane %v3012, %v3025
        %v3028 = vunpack.c.l.s4 1966171168
        %v3029 = vunpack.c.0.s8 %v3028
        %v3030 = vlaneseq
        %v3031 = vshrl.u32 %v3030, 7
        %v3032 = vsub.s32 %v3029, %v3031
        %v3033 = vrot.slane %v2900, %v3032
        %v3034 = vcombine.low %v3019, %v3026
        %v3036 = vunpack.c.l.s4 1966171168
        %v3037 = vunpack.c.0.s8 %v3036
        %v3038 = vlaneseq
        %v3039 = vshrl.u32 %v3038, 7
        %v3040 = vsub.s32 %v3037, %v3039
        %v3041 = vrot.slane %v3034, %v3040
        %v3043 = vunpack.c.l.s4 1966171168
        %v3044 = vunpack.c.0.s8 %v3043
        %v3045 = vlaneseq
        %v3046 = vshrl.u32 %v3045, 7
        %v3047 = vsub.s32 %v3044, %v3046
        %v3048 = vrot.slane %v3033, %v3047
        %v3049 = vcombine.low %v3041, %v3048
        %v3050 = vcombine.low %v2902, %v2904
        %v3051 = vcombine.low %v2906, %v2908
        %v3053 = vunpack.c.l.s4 1966171168
        %v3054 = vunpack.c.0.s8 %v3053
        %v3055 = vlaneseq
        %v3056 = vshrl.u32 %v3055, 7
        %v3057 = vsub.s32 %v3054, %v3056
        %v3058 = vrot.slane %v3050, %v3057
        %v3060 = vunpack.c.l.s4 1966171168
        %v3061 = vunpack.c.0.s8 %v3060
        %v3062 = vlaneseq
        %v3063 = vshrl.u32 %v3062, 7
        %v3064 = vsub.s32 %v3061, %v3063
        %v3065 = vrot.slane %v3051, %v3064
        %v3067 = vunpack.c.l.s4 1966171168
        %v3068 = vunpack.c.0.s8 %v3067
        %v3069 = vlaneseq
        %v3070 = vshrl.u32 %v3069, 7
        %v3071 = vsub.s32 %v3068, %v3070
        %v3072 = vrot.slane %v2910, %v3071
        %v3073 = vcombine.low %v3058, %v3065
        %v3075 = vunpack.c.l.s4 1966171168
        %v3076 = vunpack.c.0.s8 %v3075
        %v3077 = vlaneseq
        %v3078 = vshrl.u32 %v3077, 7
        %v3079 = vsub.s32 %v3076, %v3078
        %v3080 = vrot.slane %v3073, %v3079
        %v3082 = vunpack.c.l.s4 1966171168
        %v3083 = vunpack.c.0.s8 %v3082
        %v3084 = vlaneseq
        %v3085 = vshrl.u32 %v3084, 7
        %v3086 = vsub.s32 %v3083, %v3085
        %v3087 = vrot.slane %v3072, %v3086
        %v3088 = vcombine.low %v3080, %v3087
        %v3089 = vcombine.low %v2912, %v2914
        %v3090 = vcombine.low %v2916, %v2918
        %v3092 = vunpack.c.l.s4 1966171168
        %v3093 = vunpack.c.0.s8 %v3092
        %v3094 = vlaneseq
        %v3095 = vshrl.u32 %v3094, 7
        %v3096 = vsub.s32 %v3093, %v3095
        %v3097 = vrot.slane %v3089, %v3096
        %v3099 = vunpack.c.l.s4 1966171168
        %v3100 = vunpack.c.0.s8 %v3099
        %v3101 = vlaneseq
        %v3102 = vshrl.u32 %v3101, 7
        %v3103 = vsub.s32 %v3100, %v3102
        %v3104 = vrot.slane %v3090, %v3103
        %v3106 = vunpack.c.l.s4 1966171168
        %v3107 = vunpack.c.0.s8 %v3106
        %v3108 = vlaneseq
        %v3109 = vshrl.u32 %v3108, 7
        %v3110 = vsub.s32 %v3107, %v3109
        %v3111 = vrot.slane %v2920, %v3110
        %v3112 = vcombine.low %v3097, %v3104
        %v3114 = vunpack.c.l.s4 1966171168
        %v3115 = vunpack.c.0.s8 %v3114
        %v3116 = vlaneseq
        %v3117 = vshrl.u32 %v3116, 7
        %v3118 = vsub.s32 %v3115, %v3117
        %v3119 = vrot.slane %v3112, %v3118
        %v3121 = vunpack.c.l.s4 1966171168
        %v3122 = vunpack.c.0.s8 %v3121
        %v3123 = vlaneseq
        %v3124 = vshrl.u32 %v3123, 7
        %v3125 = vsub.s32 %v3122, %v3124
        %v3126 = vrot.slane %v3111, %v3125
        %v3127 = vcombine.low %v3119, %v3126
        %v3128 = vcombine.low %v2922, %v2924
        %v3129 = vcombine.low %v2926, %v2928
        %v3131 = vunpack.c.l.s4 1966171168
        %v3132 = vunpack.c.0.s8 %v3131
        %v3133 = vlaneseq
        %v3134 = vshrl.u32 %v3133, 7
        %v3135 = vsub.s32 %v3132, %v3134
        %v3136 = vrot.slane %v3128, %v3135
        %v3138 = vunpack.c.l.s4 1966171168
        %v3139 = vunpack.c.0.s8 %v3138
        %v3140 = vlaneseq
        %v3141 = vshrl.u32 %v3140, 7
        %v3142 = vsub.s32 %v3139, %v3141
        %v3143 = vrot.slane %v3129, %v3142
        %v3145 = vunpack.c.l.s4 1966171168
        %v3146 = vunpack.c.0.s8 %v3145
        %v3147 = vlaneseq
        %v3148 = vshrl.u32 %v3147, 7
        %v3149 = vsub.s32 %v3146, %v3148
        %v3150 = vrot.slane %v2930, %v3149
        %v3151 = vcombine.low %v3136, %v3143
        %v3153 = vunpack.c.l.s4 1966171168
        %v3154 = vunpack.c.0.s8 %v3153
        %v3155 = vlaneseq
        %v3156 = vshrl.u32 %v3155, 7
        %v3157 = vsub.s32 %v3154, %v3156
        %v3158 = vrot.slane %v3151, %v3157
        %v3160 = vunpack.c.l.s4 1966171168
        %v3161 = vunpack.c.0.s8 %v3160
        %v3162 = vlaneseq
        %v3163 = vshrl.u32 %v3162, 7
        %v3164 = vsub.s32 %v3161, %v3163
        %v3165 = vrot.slane %v3150, %v3164
        %v3166 = vcombine.low %v3158, %v3165
        %v3167 = vcombine.low %v2932, %v2934
        %v3168 = vcombine.low %v2936, %v2938
        %v3170 = vunpack.c.l.s4 1966171168
        %v3171 = vunpack.c.0.s8 %v3170
        %v3172 = vlaneseq
        %v3173 = vshrl.u32 %v3172, 7
        %v3174 = vsub.s32 %v3171, %v3173
        %v3175 = vrot.slane %v3167, %v3174
        %v3177 = vunpack.c.l.s4 1966171168
        %v3178 = vunpack.c.0.s8 %v3177
        %v3179 = vlaneseq
        %v3180 = vshrl.u32 %v3179, 7
        %v3181 = vsub.s32 %v3178, %v3180
        %v3182 = vrot.slane %v3168, %v3181
        %v3184 = vunpack.c.l.s4 1966171168
        %v3185 = vunpack.c.0.s8 %v3184
        %v3186 = vlaneseq
        %v3187 = vshrl.u32 %v3186, 7
        %v3188 = vsub.s32 %v3185, %v3187
        %v3189 = vrot.slane %v2940, %v3188
        %v3190 = vcombine.low %v3175, %v3182
        %v3192 = vunpack.c.l.s4 1966171168
        %v3193 = vunpack.c.0.s8 %v3192
        %v3194 = vlaneseq
        %v3195 = vshrl.u32 %v3194, 7
        %v3196 = vsub.s32 %v3193, %v3195
        %v3197 = vrot.slane %v3190, %v3196
        %v3199 = vunpack.c.l.s4 1966171168
        %v3200 = vunpack.c.0.s8 %v3199
        %v3201 = vlaneseq
        %v3202 = vshrl.u32 %v3201, 7
        %v3203 = vsub.s32 %v3200, %v3202
        %v3204 = vrot.slane %v3189, %v3203
        %v3205 = vcombine.low %v3197, %v3204
        %v3206 = vcombine.low %v2942, %v2944
        %v3207 = vcombine.low %v2946, %v2948
        %v3209 = vunpack.c.l.s4 1966171168
        %v3210 = vunpack.c.0.s8 %v3209
        %v3211 = vlaneseq
        %v3212 = vshrl.u32 %v3211, 7
        %v3213 = vsub.s32 %v3210, %v3212
        %v3214 = vrot.slane %v3206, %v3213
        %v3216 = vunpack.c.l.s4 1966171168
        %v3217 = vunpack.c.0.s8 %v3216
        %v3218 = vlaneseq
        %v3219 = vshrl.u32 %v3218, 7
        %v3220 = vsub.s32 %v3217, %v3219
        %v3221 = vrot.slane %v3207, %v3220
        %v3223 = vunpack.c.l.s4 1966171168
        %v3224 = vunpack.c.0.s8 %v3223
        %v3225 = vlaneseq
        %v3226 = vshrl.u32 %v3225, 7
        %v3227 = vsub.s32 %v3224, %v3226
        %v3228 = vrot.slane %v2950, %v3227
        %v3229 = vcombine.low %v3214, %v3221
        %v3231 = vunpack.c.l.s4 1966171168
        %v3232 = vunpack.c.0.s8 %v3231
        %v3233 = vlaneseq
        %v3234 = vshrl.u32 %v3233, 7
        %v3235 = vsub.s32 %v3232, %v3234
        %v3236 = vrot.slane %v3229, %v3235
        %v3238 = vunpack.c.l.s4 1966171168
        %v3239 = vunpack.c.0.s8 %v3238
        %v3240 = vlaneseq
        %v3241 = vshrl.u32 %v3240, 7
        %v3242 = vsub.s32 %v3239, %v3241
        %v3243 = vrot.slane %v3228, %v3242
        %v3244 = vcombine.low %v3236, %v3243
        %v3245 = vcombine.low %v2952, %v2954
        %v3246 = vcombine.low %v2956, %v2958
        %v3248 = vunpack.c.l.s4 1966171168
        %v3249 = vunpack.c.0.s8 %v3248
        %v3250 = vlaneseq
        %v3251 = vshrl.u32 %v3250, 7
        %v3252 = vsub.s32 %v3249, %v3251
        %v3253 = vrot.slane %v3245, %v3252
        %v3255 = vunpack.c.l.s4 1966171168
        %v3256 = vunpack.c.0.s8 %v3255
        %v3257 = vlaneseq
        %v3258 = vshrl.u32 %v3257, 7
        %v3259 = vsub.s32 %v3256, %v3258
        %v3260 = vrot.slane %v3246, %v3259
        %v3262 = vunpack.c.l.s4 1966171168
        %v3263 = vunpack.c.0.s8 %v3262
        %v3264 = vlaneseq
        %v3265 = vshrl.u32 %v3264, 7
        %v3266 = vsub.s32 %v3263, %v3265
        %v3267 = vrot.slane %v2960, %v3266
        %v3268 = vcombine.low %v3253, %v3260
        %v3270 = vunpack.c.l.s4 1966171168
        %v3271 = vunpack.c.0.s8 %v3270
        %v3272 = vlaneseq
        %v3273 = vshrl.u32 %v3272, 7
        %v3274 = vsub.s32 %v3271, %v3273
        %v3275 = vrot.slane %v3268, %v3274
        %v3277 = vunpack.c.l.s4 1966171168
        %v3278 = vunpack.c.0.s8 %v3277
        %v3279 = vlaneseq
        %v3280 = vshrl.u32 %v3279, 7
        %v3281 = vsub.s32 %v3278, %v3280
        %v3282 = vrot.slane %v3267, %v3281
        %v3283 = vcombine.low %v3275, %v3282
        %v3284 = vcombine.low %v2962, %v2964
        %v3285 = vcombine.low %v2966, %v2968
        %v3287 = vunpack.c.l.s4 1966171168
        %v3288 = vunpack.c.0.s8 %v3287
        %v3289 = vlaneseq
        %v3290 = vshrl.u32 %v3289, 7
        %v3291 = vsub.s32 %v3288, %v3290
        %v3292 = vrot.slane %v3284, %v3291
        %v3294 = vunpack.c.l.s4 1966171168
        %v3295 = vunpack.c.0.s8 %v3294
        %v3296 = vlaneseq
        %v3297 = vshrl.u32 %v3296, 7
        %v3298 = vsub.s32 %v3295, %v3297
        %v3299 = vrot.slane %v3285, %v3298
        %v3301 = vunpack.c.l.s4 1966171168
        %v3302 = vunpack.c.0.s8 %v3301
        %v3303 = vlaneseq
        %v3304 = vshrl.u32 %v3303, 7
        %v3305 = vsub.s32 %v3302, %v3304
        %v3306 = vrot.slane %v2970, %v3305
        %v3307 = vcombine.low %v3292, %v3299
        %v3309 = vunpack.c.l.s4 1966171168
        %v3310 = vunpack.c.0.s8 %v3309
        %v3311 = vlaneseq
        %v3312 = vshrl.u32 %v3311, 7
        %v3313 = vsub.s32 %v3310, %v3312
        %v3314 = vrot.slane %v3307, %v3313
        %v3316 = vunpack.c.l.s4 1966171168
        %v3317 = vunpack.c.0.s8 %v3316
        %v3318 = vlaneseq
        %v3319 = vshrl.u32 %v3318, 7
        %v3320 = vsub.s32 %v3317, %v3319
        %v3321 = vrot.slane %v3306, %v3320
        %v3322 = vcombine.low %v3314, %v3321
        %3323 = vset.pattern.permute.xlu0 0
        %3324 = vperm.xlu0 %3323, %v3049
        %v3325 = vpop.permute.xlu0 %3324
        %3326 = vset.pattern.permute.xlu0 0
        %3327 = vperm.xlu0 %3326, %v3088
        %v3328 = vpop.permute.xlu0 %3327
        %3329 = vset.pattern.permute.xlu0 0
        %3330 = vperm.xlu0 %3329, %v3127
        %v3331 = vpop.permute.xlu0 %3330
        %3332 = vset.pattern.permute.xlu0 0
        %3333 = vperm.xlu0 %3332, %v3166
        %v3334 = vpop.permute.xlu0 %3333
        %3335 = vset.pattern.permute.xlu0 0
        %3336 = vperm.xlu0 %3335, %v3205
        %v3337 = vpop.permute.xlu0 %3336
        %3338 = vset.pattern.permute.xlu0 0
        %3339 = vperm.xlu0 %3338, %v3244
        %v3340 = vpop.permute.xlu0 %3339
        %3341 = vset.pattern.permute.xlu0 0
        %3342 = vperm.xlu0 %3341, %v3283
        %v3343 = vpop.permute.xlu0 %3342
        %3344 = vset.pattern.permute.xlu0 0
        %3345 = vperm.xlu0 %3344, %v3322
        %v3346 = vpop.permute.xlu0 %3345
        %v3347 = vlaneseq
        %v3348 = vshrl.u32 %v3347, 7
        %v3349 = vsub.s32 %v2309, %v3348
        %v3350 = vrot.slane %v3325, %v3349
        %v3351 = vlaneseq
        %v3352 = vshrl.u32 %v3351, 7
        %v3353 = vsub.s32 %v2309, %v3352
        %v3354 = vrot.slane %v3328, %v3353
        %v3355 = vlaneseq
        %v3356 = vshrl.u32 %v3355, 7
        %v3357 = vsub.s32 %v2309, %v3356
        %v3358 = vrot.slane %v3331, %v3357
        %v3359 = vlaneseq
        %v3360 = vshrl.u32 %v3359, 7
        %v3361 = vsub.s32 %v2309, %v3360
        %v3362 = vrot.slane %v3334, %v3361
        %v3363 = vlaneseq
        %v3364 = vshrl.u32 %v3363, 7
        %v3365 = vsub.s32 %v2309, %v3364
        %v3366 = vrot.slane %v3337, %v3365
        %v3367 = vlaneseq
        %v3368 = vshrl.u32 %v3367, 7
        %v3369 = vsub.s32 %v2309, %v3368
        %v3370 = vrot.slane %v3340, %v3369
        %v3371 = vlaneseq
        %v3372 = vshrl.u32 %v3371, 7
        %v3373 = vsub.s32 %v2309, %v3372
        %v3374 = vrot.slane %v3343, %v3373
        %v3375 = vlaneseq
        %v3376 = vshrl.u32 %v3375, 7
        %v3377 = vsub.s32 %v2309, %v3376
        %v3378 = vrot.slane %v3346, %v3377
        %v3379 = vsel %vm2342, %v3354, %v3350
        %v3380 = vsel %vm2344, %v3358, %v3379
        %v3381 = vsel %vm2346, %v3362, %v3380
        %v3382 = vsel %vm2348, %v3366, %v3381
        %v3383 = vsel %vm2350, %v3370, %v3382
        %v3384 = vsel %vm2352, %v3374, %v3383
        %v3385 = vsel %vm2354, %v3378, %v3384
        %v3387 = vsel %vm2357, %v3385, 0.0
        %3388 = vadd.xlane.f32.xlu0 %v3387
        %v3389 = vpop.xlane.xlu0 %3388
        %v3390 = vrcp.pop %v3389
        %v3392 = vlaneseq
        %v3393 = vshrl.u32 %v3392, 7
        %v3394 = vsub.s32 0, %v3393
        %v3395 = vrot.slane %v3390, %v3394
        %v3396 = vlaneseq
        %v3397 = vshrl.u32 %v3396, 7
        %v3398 = vsub.s32 1, %v3397
        %v3399 = vrot.slane %v3390, %v3398
        %v3400 = vlaneseq
        %v3401 = vshrl.u32 %v3400, 7
        %v3402 = vsub.s32 2, %v3401
        %v3403 = vrot.slane %v3390, %v3402
        %v3404 = vlaneseq
        %v3405 = vshrl.u32 %v3404, 7
        %v3406 = vsub.s32 3, %v3405
        %v3407 = vrot.slane %v3390, %v3406
        %v3408 = vlaneseq
        %v3409 = vshrl.u32 %v3408, 7
        %v3410 = vsub.s32 4, %v3409
        %v3411 = vrot.slane %v3390, %v3410
        %v3412 = vlaneseq
        %v3413 = vshrl.u32 %v3412, 7
        %v3414 = vsub.s32 5, %v3413
        %v3415 = vrot.slane %v3390, %v3414
        %v3416 = vlaneseq
        %v3417 = vshrl.u32 %v3416, 7
        %v3418 = vsub.s32 6, %v3417
        %v3419 = vrot.slane %v3390, %v3418
        %v3420 = vlaneseq
        %v3421 = vshrl.u32 %v3420, 7
        %v3422 = vsub.s32 7, %v3421
        %v3423 = vrot.slane %v3390, %v3422
        %v3424 = vcombine.low %v3395, %v3399
        %v3425 = vcombine.low %v3403, %v3407
        %v3426 = vcombine.low %v3411, %v3415
        %v3427 = vcombine.low %v3419, %v3423
        %v3429 = vunpack.c.l.s4 1966171168
        %v3430 = vunpack.c.0.s8 %v3429
        %v3431 = vlaneseq
        %v3432 = vshrl.u32 %v3431, 7
        %v3433 = vsub.s32 %v3430, %v3432
        %v3434 = vrot.slane %v3424, %v3433
        %v3436 = vunpack.c.l.s4 1966171168
        %v3437 = vunpack.c.0.s8 %v3436
        %v3438 = vlaneseq
        %v3439 = vshrl.u32 %v3438, 7
        %v3440 = vsub.s32 %v3437, %v3439
        %v3441 = vrot.slane %v3425, %v3440
        %v3443 = vunpack.c.l.s4 1966171168
        %v3444 = vunpack.c.0.s8 %v3443
        %v3445 = vlaneseq
        %v3446 = vshrl.u32 %v3445, 7
        %v3447 = vsub.s32 %v3444, %v3446
        %v3448 = vrot.slane %v3426, %v3447
        %v3450 = vunpack.c.l.s4 1966171168
        %v3451 = vunpack.c.0.s8 %v3450
        %v3452 = vlaneseq
        %v3453 = vshrl.u32 %v3452, 7
        %v3454 = vsub.s32 %v3451, %v3453
        %v3455 = vrot.slane %v3427, %v3454
        %v3456 = vcombine.low %v3434, %v3441
        %v3457 = vcombine.low %v3448, %v3455
        %v3459 = vunpack.c.l.s4 1966171168
        %v3460 = vunpack.c.0.s8 %v3459
        %v3461 = vlaneseq
        %v3462 = vshrl.u32 %v3461, 7
        %v3463 = vsub.s32 %v3460, %v3462
        %v3464 = vrot.slane %v3456, %v3463
        %v3466 = vunpack.c.l.s4 1966171168
        %v3467 = vunpack.c.0.s8 %v3466
        %v3468 = vlaneseq
        %v3469 = vshrl.u32 %v3468, 7
        %v3470 = vsub.s32 %v3467, %v3469
        %v3471 = vrot.slane %v3457, %v3470
        %v3472 = vcombine.low %v3464, %v3471
        %v3473 = vlaneseq
        %v3474 = vshrl.u32 %v3473, 7
        %v3475 = vsub.s32 0, %v3474
        %v3476 = vrot.slane %v3472, %v3475
        %3478 = vbcast.lane.b32.xlu0 %v3476, 256
        %v3479 = vpop.permute.xlu0 %3478
        %v3480 = vlaneseq
        %v3481 = vshrl.u32 %v3480, 7
        %v3482 = vsub.s32 1, %v3481
        %v3483 = vrot.slane %v3472, %v3482
        %3485 = vbcast.lane.b32.xlu0 %v3483, 256
        %v3486 = vpop.permute.xlu0 %3485
        %v3487 = vlaneseq
        %v3488 = vshrl.u32 %v3487, 7
        %v3489 = vsub.s32 2, %v3488
        %v3490 = vrot.slane %v3472, %v3489
        %3492 = vbcast.lane.b32.xlu0 %v3490, 256
        %v3493 = vpop.permute.xlu0 %3492
        %v3494 = vlaneseq
        %v3495 = vshrl.u32 %v3494, 7
        %v3496 = vsub.s32 3, %v3495
        %v3497 = vrot.slane %v3472, %v3496
        %3499 = vbcast.lane.b32.xlu0 %v3497, 256
        %v3500 = vpop.permute.xlu0 %3499
        %v3501 = vlaneseq
        %v3502 = vshrl.u32 %v3501, 7
        %v3503 = vsub.s32 4, %v3502
        %v3504 = vrot.slane %v3472, %v3503
        %3506 = vbcast.lane.b32.xlu0 %v3504, 256
        %v3507 = vpop.permute.xlu0 %3506
        %v3508 = vlaneseq
        %v3509 = vshrl.u32 %v3508, 7
        %v3510 = vsub.s32 5, %v3509
        %v3511 = vrot.slane %v3472, %v3510
        %3513 = vbcast.lane.b32.xlu0 %v3511, 256
        %v3514 = vpop.permute.xlu0 %3513
        %v3515 = vlaneseq
        %v3516 = vshrl.u32 %v3515, 7
        %v3517 = vsub.s32 6, %v3516
        %v3518 = vrot.slane %v3472, %v3517
        %3520 = vbcast.lane.b32.xlu0 %v3518, 256
        %v3521 = vpop.permute.xlu0 %3520
        %v3522 = vlaneseq
        %v3523 = vshrl.u32 %v3522, 7
        %v3524 = vsub.s32 7, %v3523
        %v3525 = vrot.slane %v3472, %v3524
        %3527 = vbcast.lane.b32.xlu0 %v3525, 256
        %v3528 = vpop.permute.xlu0 %3527
        %v3529 = vcombine.high %v3479, %v3479
        %v3531 = vunpack.c.l.s4 1966171168
        %v3532 = vunpack.c.0.s8 %v3531
        %v3533 = vlaneseq
        %v3534 = vshrl.u32 %v3533, 7
        %v3535 = vsub.s32 %v3532, %v3534
        %v3536 = vrot.slane %v3479, %v3535
        %v3538 = vunpack.c.l.s4 1966171168
        %v3539 = vunpack.c.0.s8 %v3538
        %v3540 = vlaneseq
        %v3541 = vshrl.u32 %v3540, 7
        %v3542 = vsub.s32 %v3539, %v3541
        %v3543 = vrot.slane %v3529, %v3542
        %v3544 = vcombine.high %v3536, %v3536
        %v3546 = vunpack.c.l.s4 1966171168
        %v3547 = vunpack.c.0.s8 %v3546
        %v3548 = vlaneseq
        %v3549 = vshrl.u32 %v3548, 7
        %v3550 = vsub.s32 %v3547, %v3549
        %v3551 = vrot.slane %v3536, %v3550
        %v3553 = vunpack.c.l.s4 1966171168
        %v3554 = vunpack.c.0.s8 %v3553
        %v3555 = vlaneseq
        %v3556 = vshrl.u32 %v3555, 7
        %v3557 = vsub.s32 %v3554, %v3556
        %v3558 = vrot.slane %v3543, %v3557
        %v3560 = vunpack.c.l.s4 1966171168
        %v3561 = vunpack.c.0.s8 %v3560
        %v3562 = vlaneseq
        %v3563 = vshrl.u32 %v3562, 7
        %v3564 = vsub.s32 %v3561, %v3563
        %v3565 = vrot.slane %v3544, %v3564
        %v3566 = vcombine.high %v3551, %v3551
        %v3567 = vcombine.high %v3565, %v3565
        %v3568 = vcombine.high %v3486, %v3486
        %v3570 = vunpack.c.l.s4 1966171168
        %v3571 = vunpack.c.0.s8 %v3570
        %v3572 = vlaneseq
        %v3573 = vshrl.u32 %v3572, 7
        %v3574 = vsub.s32 %v3571, %v3573
        %v3575 = vrot.slane %v3486, %v3574
        %v3577 = vunpack.c.l.s4 1966171168
        %v3578 = vunpack.c.0.s8 %v3577
        %v3579 = vlaneseq
        %v3580 = vshrl.u32 %v3579, 7
        %v3581 = vsub.s32 %v3578, %v3580
        %v3582 = vrot.slane %v3568, %v3581
        %v3583 = vcombine.high %v3575, %v3575
        %v3585 = vunpack.c.l.s4 1966171168
        %v3586 = vunpack.c.0.s8 %v3585
        %v3587 = vlaneseq
        %v3588 = vshrl.u32 %v3587, 7
        %v3589 = vsub.s32 %v3586, %v3588
        %v3590 = vrot.slane %v3575, %v3589
        %v3592 = vunpack.c.l.s4 1966171168
        %v3593 = vunpack.c.0.s8 %v3592
        %v3594 = vlaneseq
        %v3595 = vshrl.u32 %v3594, 7
        %v3596 = vsub.s32 %v3593, %v3595
        %v3597 = vrot.slane %v3582, %v3596
        %v3599 = vunpack.c.l.s4 1966171168
        %v3600 = vunpack.c.0.s8 %v3599
        %v3601 = vlaneseq
        %v3602 = vshrl.u32 %v3601, 7
        %v3603 = vsub.s32 %v3600, %v3602
        %v3604 = vrot.slane %v3583, %v3603
        %v3605 = vcombine.high %v3590, %v3590
        %v3606 = vcombine.high %v3604, %v3604
        %v3607 = vcombine.high %v3493, %v3493
        %v3609 = vunpack.c.l.s4 1966171168
        %v3610 = vunpack.c.0.s8 %v3609
        %v3611 = vlaneseq
        %v3612 = vshrl.u32 %v3611, 7
        %v3613 = vsub.s32 %v3610, %v3612
        %v3614 = vrot.slane %v3493, %v3613
        %v3616 = vunpack.c.l.s4 1966171168
        %v3617 = vunpack.c.0.s8 %v3616
        %v3618 = vlaneseq
        %v3619 = vshrl.u32 %v3618, 7
        %v3620 = vsub.s32 %v3617, %v3619
        %v3621 = vrot.slane %v3607, %v3620
        %v3622 = vcombine.high %v3614, %v3614
        %v3624 = vunpack.c.l.s4 1966171168
        %v3625 = vunpack.c.0.s8 %v3624
        %v3626 = vlaneseq
        %v3627 = vshrl.u32 %v3626, 7
        %v3628 = vsub.s32 %v3625, %v3627
        %v3629 = vrot.slane %v3614, %v3628
        %v3631 = vunpack.c.l.s4 1966171168
        %v3632 = vunpack.c.0.s8 %v3631
        %v3633 = vlaneseq
        %v3634 = vshrl.u32 %v3633, 7
        %v3635 = vsub.s32 %v3632, %v3634
        %v3636 = vrot.slane %v3621, %v3635
        %v3638 = vunpack.c.l.s4 1966171168
        %v3639 = vunpack.c.0.s8 %v3638
        %v3640 = vlaneseq
        %v3641 = vshrl.u32 %v3640, 7
        %v3642 = vsub.s32 %v3639, %v3641
        %v3643 = vrot.slane %v3622, %v3642
        %v3644 = vcombine.high %v3629, %v3629
        %v3645 = vcombine.high %v3643, %v3643
        %v3646 = vcombine.high %v3500, %v3500
        %v3648 = vunpack.c.l.s4 1966171168
        %v3649 = vunpack.c.0.s8 %v3648
        %v3650 = vlaneseq
        %v3651 = vshrl.u32 %v3650, 7
        %v3652 = vsub.s32 %v3649, %v3651
        %v3653 = vrot.slane %v3500, %v3652
        %v3655 = vunpack.c.l.s4 1966171168
        %v3656 = vunpack.c.0.s8 %v3655
        %v3657 = vlaneseq
        %v3658 = vshrl.u32 %v3657, 7
        %v3659 = vsub.s32 %v3656, %v3658
        %v3660 = vrot.slane %v3646, %v3659
        %v3661 = vcombine.high %v3653, %v3653
        %v3663 = vunpack.c.l.s4 1966171168
        %v3664 = vunpack.c.0.s8 %v3663
        %v3665 = vlaneseq
        %v3666 = vshrl.u32 %v3665, 7
        %v3667 = vsub.s32 %v3664, %v3666
        %v3668 = vrot.slane %v3653, %v3667
        %v3670 = vunpack.c.l.s4 1966171168
        %v3671 = vunpack.c.0.s8 %v3670
        %v3672 = vlaneseq
        %v3673 = vshrl.u32 %v3672, 7
        %v3674 = vsub.s32 %v3671, %v3673
        %v3675 = vrot.slane %v3660, %v3674
        %v3677 = vunpack.c.l.s4 1966171168
        %v3678 = vunpack.c.0.s8 %v3677
        %v3679 = vlaneseq
        %v3680 = vshrl.u32 %v3679, 7
        %v3681 = vsub.s32 %v3678, %v3680
        %v3682 = vrot.slane %v3661, %v3681
        %v3683 = vcombine.high %v3668, %v3668
        %v3684 = vcombine.high %v3682, %v3682
        %v3685 = vcombine.high %v3507, %v3507
        %v3687 = vunpack.c.l.s4 1966171168
        %v3688 = vunpack.c.0.s8 %v3687
        %v3689 = vlaneseq
        %v3690 = vshrl.u32 %v3689, 7
        %v3691 = vsub.s32 %v3688, %v3690
        %v3692 = vrot.slane %v3507, %v3691
        %v3694 = vunpack.c.l.s4 1966171168
        %v3695 = vunpack.c.0.s8 %v3694
        %v3696 = vlaneseq
        %v3697 = vshrl.u32 %v3696, 7
        %v3698 = vsub.s32 %v3695, %v3697
        %v3699 = vrot.slane %v3685, %v3698
        %v3700 = vcombine.high %v3692, %v3692
        %v3702 = vunpack.c.l.s4 1966171168
        %v3703 = vunpack.c.0.s8 %v3702
        %v3704 = vlaneseq
        %v3705 = vshrl.u32 %v3704, 7
        %v3706 = vsub.s32 %v3703, %v3705
        %v3707 = vrot.slane %v3692, %v3706
        %v3709 = vunpack.c.l.s4 1966171168
        %v3710 = vunpack.c.0.s8 %v3709
        %v3711 = vlaneseq
        %v3712 = vshrl.u32 %v3711, 7
        %v3713 = vsub.s32 %v3710, %v3712
        %v3714 = vrot.slane %v3699, %v3713
        %v3716 = vunpack.c.l.s4 1966171168
        %v3717 = vunpack.c.0.s8 %v3716
        %v3718 = vlaneseq
        %v3719 = vshrl.u32 %v3718, 7
        %v3720 = vsub.s32 %v3717, %v3719
        %v3721 = vrot.slane %v3700, %v3720
        %v3722 = vcombine.high %v3707, %v3707
        %v3723 = vcombine.high %v3721, %v3721
        %v3724 = vcombine.high %v3514, %v3514
        %v3726 = vunpack.c.l.s4 1966171168
        %v3727 = vunpack.c.0.s8 %v3726
        %v3728 = vlaneseq
        %v3729 = vshrl.u32 %v3728, 7
        %v3730 = vsub.s32 %v3727, %v3729
        %v3731 = vrot.slane %v3514, %v3730
        %v3733 = vunpack.c.l.s4 1966171168
        %v3734 = vunpack.c.0.s8 %v3733
        %v3735 = vlaneseq
        %v3736 = vshrl.u32 %v3735, 7
        %v3737 = vsub.s32 %v3734, %v3736
        %v3738 = vrot.slane %v3724, %v3737
        %v3739 = vcombine.high %v3731, %v3731
        %v3741 = vunpack.c.l.s4 1966171168
        %v3742 = vunpack.c.0.s8 %v3741
        %v3743 = vlaneseq
        %v3744 = vshrl.u32 %v3743, 7
        %v3745 = vsub.s32 %v3742, %v3744
        %v3746 = vrot.slane %v3731, %v3745
        %v3748 = vunpack.c.l.s4 1966171168
        %v3749 = vunpack.c.0.s8 %v3748
        %v3750 = vlaneseq
        %v3751 = vshrl.u32 %v3750, 7
        %v3752 = vsub.s32 %v3749, %v3751
        %v3753 = vrot.slane %v3738, %v3752
        %v3755 = vunpack.c.l.s4 1966171168
        %v3756 = vunpack.c.0.s8 %v3755
        %v3757 = vlaneseq
        %v3758 = vshrl.u32 %v3757, 7
        %v3759 = vsub.s32 %v3756, %v3758
        %v3760 = vrot.slane %v3739, %v3759
        %v3761 = vcombine.high %v3746, %v3746
        %v3762 = vcombine.high %v3760, %v3760
        %v3763 = vcombine.high %v3521, %v3521
        %v3765 = vunpack.c.l.s4 1966171168
        %v3766 = vunpack.c.0.s8 %v3765
        %v3767 = vlaneseq
        %v3768 = vshrl.u32 %v3767, 7
        %v3769 = vsub.s32 %v3766, %v3768
        %v3770 = vrot.slane %v3521, %v3769
        %v3772 = vunpack.c.l.s4 1966171168
        %v3773 = vunpack.c.0.s8 %v3772
        %v3774 = vlaneseq
        %v3775 = vshrl.u32 %v3774, 7
        %v3776 = vsub.s32 %v3773, %v3775
        %v3777 = vrot.slane %v3763, %v3776
        %v3778 = vcombine.high %v3770, %v3770
        %v3780 = vunpack.c.l.s4 1966171168
        %v3781 = vunpack.c.0.s8 %v3780
        %v3782 = vlaneseq
        %v3783 = vshrl.u32 %v3782, 7
        %v3784 = vsub.s32 %v3781, %v3783
        %v3785 = vrot.slane %v3770, %v3784
        %v3787 = vunpack.c.l.s4 1966171168
        %v3788 = vunpack.c.0.s8 %v3787
        %v3789 = vlaneseq
        %v3790 = vshrl.u32 %v3789, 7
        %v3791 = vsub.s32 %v3788, %v3790
        %v3792 = vrot.slane %v3777, %v3791
        %v3794 = vunpack.c.l.s4 1966171168
        %v3795 = vunpack.c.0.s8 %v3794
        %v3796 = vlaneseq
        %v3797 = vshrl.u32 %v3796, 7
        %v3798 = vsub.s32 %v3795, %v3797
        %v3799 = vrot.slane %v3778, %v3798
        %v3800 = vcombine.high %v3785, %v3785
        %v3801 = vcombine.high %v3799, %v3799
        %v3802 = vcombine.high %v3528, %v3528
        %v3804 = vunpack.c.l.s4 1966171168
        %v3805 = vunpack.c.0.s8 %v3804
        %v3806 = vlaneseq
        %v3807 = vshrl.u32 %v3806, 7
        %v3808 = vsub.s32 %v3805, %v3807
        %v3809 = vrot.slane %v3528, %v3808
        %v3811 = vunpack.c.l.s4 1966171168
        %v3812 = vunpack.c.0.s8 %v3811
        %v3813 = vlaneseq
        %v3814 = vshrl.u32 %v3813, 7
        %v3815 = vsub.s32 %v3812, %v3814
        %v3816 = vrot.slane %v3802, %v3815
        %v3817 = vcombine.high %v3809, %v3809
        %v3819 = vunpack.c.l.s4 1966171168
        %v3820 = vunpack.c.0.s8 %v3819
        %v3821 = vlaneseq
        %v3822 = vshrl.u32 %v3821, 7
        %v3823 = vsub.s32 %v3820, %v3822
        %v3824 = vrot.slane %v3809, %v3823
        %v3826 = vunpack.c.l.s4 1966171168
        %v3827 = vunpack.c.0.s8 %v3826
        %v3828 = vlaneseq
        %v3829 = vshrl.u32 %v3828, 7
        %v3830 = vsub.s32 %v3827, %v3829
        %v3831 = vrot.slane %v3816, %v3830
        %v3833 = vunpack.c.l.s4 1966171168
        %v3834 = vunpack.c.0.s8 %v3833
        %v3835 = vlaneseq
        %v3836 = vshrl.u32 %v3835, 7
        %v3837 = vsub.s32 %v3834, %v3836
        %v3838 = vrot.slane %v3817, %v3837
        %v3839 = vcombine.high %v3824, %v3824
        %v3840 = vcombine.high %v3838, %v3838
        %v3881 = vmul.f32 %v2892, %v3551
        %v3882 = vmul.f32 %v2894, %v3565
        %v3883 = vmul.f32 %v2896, %v3566
        %v3884 = vmul.f32 %v2898, %v3567
        %v3885 = vmul.f32 %v2900, %v3558
        %v3886 = vmul.f32 %v2902, %v3590
        %v3887 = vmul.f32 %v2904, %v3604
        %v3888 = vmul.f32 %v2906, %v3605
        %v3889 = vmul.f32 %v2908, %v3606
        %v3890 = vmul.f32 %v2910, %v3597
        %v3891 = vmul.f32 %v2912, %v3629
        %v3892 = vmul.f32 %v2914, %v3643
        %v3893 = vmul.f32 %v2916, %v3644
        %v3894 = vmul.f32 %v2918, %v3645
        %v3895 = vmul.f32 %v2920, %v3636
        %v3896 = vmul.f32 %v2922, %v3668
        %v3897 = vmul.f32 %v2924, %v3682
        %v3898 = vmul.f32 %v2926, %v3683
        %v3899 = vmul.f32 %v2928, %v3684
        %v3900 = vmul.f32 %v2930, %v3675
        %v3901 = vmul.f32 %v2932, %v3707
        %v3902 = vmul.f32 %v2934, %v3721
        %v3903 = vmul.f32 %v2936, %v3722
        %v3904 = vmul.f32 %v2938, %v3723
        %v3905 = vmul.f32 %v2940, %v3714
        %v3906 = vmul.f32 %v2942, %v3746
        %v3907 = vmul.f32 %v2944, %v3760
        %v3908 = vmul.f32 %v2946, %v3761
        %v3909 = vmul.f32 %v2948, %v3762
        %v3910 = vmul.f32 %v2950, %v3753
        %v3911 = vmul.f32 %v2952, %v3785
        %v3912 = vmul.f32 %v2954, %v3799
        %v3913 = vmul.f32 %v2956, %v3800
        %v3914 = vmul.f32 %v2958, %v3801
        %v3915 = vmul.f32 %v2960, %v3792
        %v3916 = vmul.f32 %v2962, %v3824
        %v3917 = vmul.f32 %v2964, %v3838
        %v3918 = vmul.f32 %v2966, %v3839
        %v3919 = vmul.f32 %v2968, %v3840
        %v3920 = vmul.f32 %v2970, %v3831
        %3922 = vset.pattern.permute.xlu0 0
        %3923 = vperm.xlu0 %3922, %v3881
        %v3924 = vpop.permute.xlu0 %3923
        %v3926 = vlaneseq
        %v3927 = vshrl.u32 %v3926, 7
        %v3928 = vsub.s32 0, %v3927
        %v3929 = vrot.slane %v3924, %v3928
        %3931 = vset.pattern.permute.xlu0 0
        %3932 = vperm.xlu0 %3931, %v3882
        %v3933 = vpop.permute.xlu0 %3932
        %v3935 = vlaneseq
        %v3936 = vshrl.u32 %v3935, 7
        %v3937 = vsub.s32 0, %v3936
        %v3938 = vrot.slane %v3933, %v3937
        %3940 = vset.pattern.permute.xlu0 0
        %3941 = vperm.xlu0 %3940, %v3883
        %v3942 = vpop.permute.xlu0 %3941
        %v3944 = vlaneseq
        %v3945 = vshrl.u32 %v3944, 7
        %v3946 = vsub.s32 0, %v3945
        %v3947 = vrot.slane %v3942, %v3946
        %3949 = vset.pattern.permute.xlu0 0
        %3950 = vperm.xlu0 %3949, %v3884
        %v3951 = vpop.permute.xlu0 %3950
        %v3953 = vlaneseq
        %v3954 = vshrl.u32 %v3953, 7
        %v3955 = vsub.s32 0, %v3954
        %v3956 = vrot.slane %v3951, %v3955
        %3958 = vset.pattern.permute.xlu0 0
        %3959 = vperm.xlu0 %3958, %v3885
        %v3960 = vpop.permute.xlu0 %3959
        %v3962 = vlaneseq
        %v3963 = vshrl.u32 %v3962, 7
        %v3964 = vsub.s32 0, %v3963
        %v3965 = vrot.slane %v3960, %v3964
        %3967 = vset.pattern.permute.xlu0 0
        %3968 = vperm.xlu0 %3967, %v3886
        %v3969 = vpop.permute.xlu0 %3968
        %v3971 = vlaneseq
        %v3972 = vshrl.u32 %v3971, 7
        %v3973 = vsub.s32 0, %v3972
        %v3974 = vrot.slane %v3969, %v3973
        %3976 = vset.pattern.permute.xlu0 0
        %3977 = vperm.xlu0 %3976, %v3887
        %v3978 = vpop.permute.xlu0 %3977
        %v3980 = vlaneseq
        %v3981 = vshrl.u32 %v3980, 7
        %v3982 = vsub.s32 0, %v3981
        %v3983 = vrot.slane %v3978, %v3982
        %3985 = vset.pattern.permute.xlu0 0
        %3986 = vperm.xlu0 %3985, %v3888
        %v3987 = vpop.permute.xlu0 %3986
        %v3989 = vlaneseq
        %v3990 = vshrl.u32 %v3989, 7
        %v3991 = vsub.s32 0, %v3990
        %v3992 = vrot.slane %v3987, %v3991
        %3994 = vset.pattern.permute.xlu0 0
        %3995 = vperm.xlu0 %3994, %v3889
        %v3996 = vpop.permute.xlu0 %3995
        %v3998 = vlaneseq
        %v3999 = vshrl.u32 %v3998, 7
        %v4000 = vsub.s32 0, %v3999
        %v4001 = vrot.slane %v3996, %v4000
        %4003 = vset.pattern.permute.xlu0 0
        %4004 = vperm.xlu0 %4003, %v3890
        %v4005 = vpop.permute.xlu0 %4004
        %v4007 = vlaneseq
        %v4008 = vshrl.u32 %v4007, 7
        %v4009 = vsub.s32 0, %v4008
        %v4010 = vrot.slane %v4005, %v4009
        %4012 = vset.pattern.permute.xlu0 0
        %4013 = vperm.xlu0 %4012, %v3891
        %v4014 = vpop.permute.xlu0 %4013
        %v4016 = vlaneseq
        %v4017 = vshrl.u32 %v4016, 7
        %v4018 = vsub.s32 0, %v4017
        %v4019 = vrot.slane %v4014, %v4018
        %4021 = vset.pattern.permute.xlu0 0
        %4022 = vperm.xlu0 %4021, %v3892
        %v4023 = vpop.permute.xlu0 %4022
        %v4025 = vlaneseq
        %v4026 = vshrl.u32 %v4025, 7
        %v4027 = vsub.s32 0, %v4026
        %v4028 = vrot.slane %v4023, %v4027
        %4030 = vset.pattern.permute.xlu0 0
        %4031 = vperm.xlu0 %4030, %v3893
        %v4032 = vpop.permute.xlu0 %4031
        %v4034 = vlaneseq
        %v4035 = vshrl.u32 %v4034, 7
        %v4036 = vsub.s32 0, %v4035
        %v4037 = vrot.slane %v4032, %v4036
        %4039 = vset.pattern.permute.xlu0 0
        %4040 = vperm.xlu0 %4039, %v3894
        %v4041 = vpop.permute.xlu0 %4040
        %v4043 = vlaneseq
        %v4044 = vshrl.u32 %v4043, 7
        %v4045 = vsub.s32 0, %v4044
        %v4046 = vrot.slane %v4041, %v4045
        %4048 = vset.pattern.permute.xlu0 0
        %4049 = vperm.xlu0 %4048, %v3895
        %v4050 = vpop.permute.xlu0 %4049
        %v4052 = vlaneseq
        %v4053 = vshrl.u32 %v4052, 7
        %v4054 = vsub.s32 0, %v4053
        %v4055 = vrot.slane %v4050, %v4054
        %4057 = vset.pattern.permute.xlu0 0
        %4058 = vperm.xlu0 %4057, %v3896
        %v4059 = vpop.permute.xlu0 %4058
        %v4061 = vlaneseq
        %v4062 = vshrl.u32 %v4061, 7
        %v4063 = vsub.s32 0, %v4062
        %v4064 = vrot.slane %v4059, %v4063
        %4066 = vset.pattern.permute.xlu0 0
        %4067 = vperm.xlu0 %4066, %v3897
        %v4068 = vpop.permute.xlu0 %4067
        %v4070 = vlaneseq
        %v4071 = vshrl.u32 %v4070, 7
        %v4072 = vsub.s32 0, %v4071
        %v4073 = vrot.slane %v4068, %v4072
        %4075 = vset.pattern.permute.xlu0 0
        %4076 = vperm.xlu0 %4075, %v3898
        %v4077 = vpop.permute.xlu0 %4076
        %v4079 = vlaneseq
        %v4080 = vshrl.u32 %v4079, 7
        %v4081 = vsub.s32 0, %v4080
        %v4082 = vrot.slane %v4077, %v4081
        %4084 = vset.pattern.permute.xlu0 0
        %4085 = vperm.xlu0 %4084, %v3899
        %v4086 = vpop.permute.xlu0 %4085
        %v4088 = vlaneseq
        %v4089 = vshrl.u32 %v4088, 7
        %v4090 = vsub.s32 0, %v4089
        %v4091 = vrot.slane %v4086, %v4090
        %4093 = vset.pattern.permute.xlu0 0
        %4094 = vperm.xlu0 %4093, %v3900
        %v4095 = vpop.permute.xlu0 %4094
        %v4097 = vlaneseq
        %v4098 = vshrl.u32 %v4097, 7
        %v4099 = vsub.s32 0, %v4098
        %v4100 = vrot.slane %v4095, %v4099
        %4102 = vset.pattern.permute.xlu0 0
        %4103 = vperm.xlu0 %4102, %v3901
        %v4104 = vpop.permute.xlu0 %4103
        %v4106 = vlaneseq
        %v4107 = vshrl.u32 %v4106, 7
        %v4108 = vsub.s32 0, %v4107
        %v4109 = vrot.slane %v4104, %v4108
        %4111 = vset.pattern.permute.xlu0 0
        %4112 = vperm.xlu0 %4111, %v3902
        %v4113 = vpop.permute.xlu0 %4112
        %v4115 = vlaneseq
        %v4116 = vshrl.u32 %v4115, 7
        %v4117 = vsub.s32 0, %v4116
        %v4118 = vrot.slane %v4113, %v4117
        %4120 = vset.pattern.permute.xlu0 0
        %4121 = vperm.xlu0 %4120, %v3903
        %v4122 = vpop.permute.xlu0 %4121
        %v4124 = vlaneseq
        %v4125 = vshrl.u32 %v4124, 7
        %v4126 = vsub.s32 0, %v4125
        %v4127 = vrot.slane %v4122, %v4126
        %4129 = vset.pattern.permute.xlu0 0
        %4130 = vperm.xlu0 %4129, %v3904
        %v4131 = vpop.permute.xlu0 %4130
        %v4133 = vlaneseq
        %v4134 = vshrl.u32 %v4133, 7
        %v4135 = vsub.s32 0, %v4134
        %v4136 = vrot.slane %v4131, %v4135
        %4138 = vset.pattern.permute.xlu0 0
        %4139 = vperm.xlu0 %4138, %v3905
        %v4140 = vpop.permute.xlu0 %4139
        %v4142 = vlaneseq
        %v4143 = vshrl.u32 %v4142, 7
        %v4144 = vsub.s32 0, %v4143
        %v4145 = vrot.slane %v4140, %v4144
        %4147 = vset.pattern.permute.xlu0 0
        %4148 = vperm.xlu0 %4147, %v3906
        %v4149 = vpop.permute.xlu0 %4148
        %v4151 = vlaneseq
        %v4152 = vshrl.u32 %v4151, 7
        %v4153 = vsub.s32 0, %v4152
        %v4154 = vrot.slane %v4149, %v4153
        %4156 = vset.pattern.permute.xlu0 0
        %4157 = vperm.xlu0 %4156, %v3907
        %v4158 = vpop.permute.xlu0 %4157
        %v4160 = vlaneseq
        %v4161 = vshrl.u32 %v4160, 7
        %v4162 = vsub.s32 0, %v4161
        %v4163 = vrot.slane %v4158, %v4162
        %4165 = vset.pattern.permute.xlu0 0
        %4166 = vperm.xlu0 %4165, %v3908
        %v4167 = vpop.permute.xlu0 %4166
        %v4169 = vlaneseq
        %v4170 = vshrl.u32 %v4169, 7
        %v4171 = vsub.s32 0, %v4170
        %v4172 = vrot.slane %v4167, %v4171
        %4174 = vset.pattern.permute.xlu0 0
        %4175 = vperm.xlu0 %4174, %v3909
        %v4176 = vpop.permute.xlu0 %4175
        %v4178 = vlaneseq
        %v4179 = vshrl.u32 %v4178, 7
        %v4180 = vsub.s32 0, %v4179
        %v4181 = vrot.slane %v4176, %v4180
        %4183 = vset.pattern.permute.xlu0 0
        %4184 = vperm.xlu0 %4183, %v3910
        %v4185 = vpop.permute.xlu0 %4184
        %v4187 = vlaneseq
        %v4188 = vshrl.u32 %v4187, 7
        %v4189 = vsub.s32 0, %v4188
        %v4190 = vrot.slane %v4185, %v4189
        %4192 = vset.pattern.permute.xlu0 0
        %4193 = vperm.xlu0 %4192, %v3911
        %v4194 = vpop.permute.xlu0 %4193
        %v4196 = vlaneseq
        %v4197 = vshrl.u32 %v4196, 7
        %v4198 = vsub.s32 0, %v4197
        %v4199 = vrot.slane %v4194, %v4198
        %4201 = vset.pattern.permute.xlu0 0
        %4202 = vperm.xlu0 %4201, %v3912
        %v4203 = vpop.permute.xlu0 %4202
        %v4205 = vlaneseq
        %v4206 = vshrl.u32 %v4205, 7
        %v4207 = vsub.s32 0, %v4206
        %v4208 = vrot.slane %v4203, %v4207
        %4210 = vset.pattern.permute.xlu0 0
        %4211 = vperm.xlu0 %4210, %v3913
        %v4212 = vpop.permute.xlu0 %4211
        %v4214 = vlaneseq
        %v4215 = vshrl.u32 %v4214, 7
        %v4216 = vsub.s32 0, %v4215
        %v4217 = vrot.slane %v4212, %v4216
        %4219 = vset.pattern.permute.xlu0 0
        %4220 = vperm.xlu0 %4219, %v3914
        %v4221 = vpop.permute.xlu0 %4220
        %v4223 = vlaneseq
        %v4224 = vshrl.u32 %v4223, 7
        %v4225 = vsub.s32 0, %v4224
        %v4226 = vrot.slane %v4221, %v4225
        %4228 = vset.pattern.permute.xlu0 0
        %4229 = vperm.xlu0 %4228, %v3915
        %v4230 = vpop.permute.xlu0 %4229
        %v4232 = vlaneseq
        %v4233 = vshrl.u32 %v4232, 7
        %v4234 = vsub.s32 0, %v4233
        %v4235 = vrot.slane %v4230, %v4234
        %4237 = vset.pattern.permute.xlu0 0
        %4238 = vperm.xlu0 %4237, %v3916
        %v4239 = vpop.permute.xlu0 %4238
        %v4241 = vlaneseq
        %v4242 = vshrl.u32 %v4241, 7
        %v4243 = vsub.s32 0, %v4242
        %v4244 = vrot.slane %v4239, %v4243
        %4246 = vset.pattern.permute.xlu0 0
        %4247 = vperm.xlu0 %4246, %v3917
        %v4248 = vpop.permute.xlu0 %4247
        %v4250 = vlaneseq
        %v4251 = vshrl.u32 %v4250, 7
        %v4252 = vsub.s32 0, %v4251
        %v4253 = vrot.slane %v4248, %v4252
        %4255 = vset.pattern.permute.xlu0 0
        %4256 = vperm.xlu0 %4255, %v3918
        %v4257 = vpop.permute.xlu0 %4256
        %v4259 = vlaneseq
        %v4260 = vshrl.u32 %v4259, 7
        %v4261 = vsub.s32 0, %v4260
        %v4262 = vrot.slane %v4257, %v4261
        %4264 = vset.pattern.permute.xlu0 0
        %4265 = vperm.xlu0 %4264, %v3919
        %v4266 = vpop.permute.xlu0 %4265
        %v4268 = vlaneseq
        %v4269 = vshrl.u32 %v4268, 7
        %v4270 = vsub.s32 0, %v4269
        %v4271 = vrot.slane %v4266, %v4270
        %4273 = vset.pattern.permute.xlu0 0
        %4274 = vperm.xlu0 %4273, %v3920
        %v4275 = vpop.permute.xlu0 %4274
        %v4277 = vlaneseq
        %v4278 = vshrl.u32 %v4277, 7
        %v4279 = vsub.s32 0, %v4278
        %v4280 = vrot.slane %v4275, %v4279
        %v4286 = vcombine.high %v1168, %v1168
        %v4288 = vunpack.c.l.s4 1966171168
        %v4289 = vunpack.c.0.s8 %v4288
        %v4290 = vlaneseq
        %v4291 = vshrl.u32 %v4290, 7
        %v4292 = vsub.s32 %v4289, %v4291
        %v4293 = vrot.slane %v1168, %v4292
        %v4295 = vunpack.c.l.s4 1966171168
        %v4296 = vunpack.c.0.s8 %v4295
        %v4297 = vlaneseq
        %v4298 = vshrl.u32 %v4297, 7
        %v4299 = vsub.s32 %v4296, %v4298
        %v4300 = vrot.slane %v4286, %v4299
        %v4301 = vcombine.high %v4293, %v4293
        %v4302 = vcombine.high %v4300, %v4300
        %v4304 = vunpack.c.l.s4 1966171168
        %v4305 = vunpack.c.0.s8 %v4304
        %v4306 = vlaneseq
        %v4307 = vshrl.u32 %v4306, 7
        %v4308 = vsub.s32 %v4305, %v4307
        %v4309 = vrot.slane %v4293, %v4308
        %v4311 = vunpack.c.l.s4 1966171168
        %v4312 = vunpack.c.0.s8 %v4311
        %v4313 = vlaneseq
        %v4314 = vshrl.u32 %v4313, 7
        %v4315 = vsub.s32 %v4312, %v4314
        %v4316 = vrot.slane %v4300, %v4315
        %v4318 = vunpack.c.l.s4 1966171168
        %v4319 = vunpack.c.0.s8 %v4318
        %v4320 = vlaneseq
        %v4321 = vshrl.u32 %v4320, 7
        %v4322 = vsub.s32 %v4319, %v4321
        %v4323 = vrot.slane %v4301, %v4322
        %v4325 = vunpack.c.l.s4 1966171168
        %v4326 = vunpack.c.0.s8 %v4325
        %v4327 = vlaneseq
        %v4328 = vshrl.u32 %v4327, 7
        %v4329 = vsub.s32 %v4326, %v4328
        %v4330 = vrot.slane %v4302, %v4329
        %v4331 = vcombine.high %v4309, %v4309
        %v4332 = vcombine.high %v4316, %v4316
        %v4333 = vcombine.high %v4323, %v4323
        %v4334 = vcombine.high %v4330, %v4330
        %v4335 = vcombine.high %v1173, %v1173
        %v4337 = vunpack.c.l.s4 1966171168
        %v4338 = vunpack.c.0.s8 %v4337
        %v4339 = vlaneseq
        %v4340 = vshrl.u32 %v4339, 7
        %v4341 = vsub.s32 %v4338, %v4340
        %v4342 = vrot.slane %v1173, %v4341
        %v4344 = vunpack.c.l.s4 1966171168
        %v4345 = vunpack.c.0.s8 %v4344
        %v4346 = vlaneseq
        %v4347 = vshrl.u32 %v4346, 7
        %v4348 = vsub.s32 %v4345, %v4347
        %v4349 = vrot.slane %v4335, %v4348
        %v4350 = vcombine.high %v4342, %v4342
        %v4351 = vcombine.high %v4349, %v4349
        %v4353 = vunpack.c.l.s4 1966171168
        %v4354 = vunpack.c.0.s8 %v4353
        %v4355 = vlaneseq
        %v4356 = vshrl.u32 %v4355, 7
        %v4357 = vsub.s32 %v4354, %v4356
        %v4358 = vrot.slane %v4342, %v4357
        %v4360 = vunpack.c.l.s4 1966171168
        %v4361 = vunpack.c.0.s8 %v4360
        %v4362 = vlaneseq
        %v4363 = vshrl.u32 %v4362, 7
        %v4364 = vsub.s32 %v4361, %v4363
        %v4365 = vrot.slane %v4349, %v4364
        %v4367 = vunpack.c.l.s4 1966171168
        %v4368 = vunpack.c.0.s8 %v4367
        %v4369 = vlaneseq
        %v4370 = vshrl.u32 %v4369, 7
        %v4371 = vsub.s32 %v4368, %v4370
        %v4372 = vrot.slane %v4350, %v4371
        %v4374 = vunpack.c.l.s4 1966171168
        %v4375 = vunpack.c.0.s8 %v4374
        %v4376 = vlaneseq
        %v4377 = vshrl.u32 %v4376, 7
        %v4378 = vsub.s32 %v4375, %v4377
        %v4379 = vrot.slane %v4351, %v4378
        %v4380 = vcombine.high %v4358, %v4358
        %v4381 = vcombine.high %v4365, %v4365
        %v4382 = vcombine.high %v4372, %v4372
        %v4383 = vcombine.high %v4379, %v4379
        %v4384 = vcombine.high %v1178, %v1178
        %v4386 = vunpack.c.l.s4 1966171168
        %v4387 = vunpack.c.0.s8 %v4386
        %v4388 = vlaneseq
        %v4389 = vshrl.u32 %v4388, 7
        %v4390 = vsub.s32 %v4387, %v4389
        %v4391 = vrot.slane %v1178, %v4390
        %v4393 = vunpack.c.l.s4 1966171168
        %v4394 = vunpack.c.0.s8 %v4393
        %v4395 = vlaneseq
        %v4396 = vshrl.u32 %v4395, 7
        %v4397 = vsub.s32 %v4394, %v4396
        %v4398 = vrot.slane %v4384, %v4397
        %v4399 = vcombine.high %v4391, %v4391
        %v4400 = vcombine.high %v4398, %v4398
        %v4402 = vunpack.c.l.s4 1966171168
        %v4403 = vunpack.c.0.s8 %v4402
        %v4404 = vlaneseq
        %v4405 = vshrl.u32 %v4404, 7
        %v4406 = vsub.s32 %v4403, %v4405
        %v4407 = vrot.slane %v4391, %v4406
        %v4409 = vunpack.c.l.s4 1966171168
        %v4410 = vunpack.c.0.s8 %v4409
        %v4411 = vlaneseq
        %v4412 = vshrl.u32 %v4411, 7
        %v4413 = vsub.s32 %v4410, %v4412
        %v4414 = vrot.slane %v4398, %v4413
        %v4416 = vunpack.c.l.s4 1966171168
        %v4417 = vunpack.c.0.s8 %v4416
        %v4418 = vlaneseq
        %v4419 = vshrl.u32 %v4418, 7
        %v4420 = vsub.s32 %v4417, %v4419
        %v4421 = vrot.slane %v4399, %v4420
        %v4423 = vunpack.c.l.s4 1966171168
        %v4424 = vunpack.c.0.s8 %v4423
        %v4425 = vlaneseq
        %v4426 = vshrl.u32 %v4425, 7
        %v4427 = vsub.s32 %v4424, %v4426
        %v4428 = vrot.slane %v4400, %v4427
        %v4429 = vcombine.high %v4407, %v4407
        %v4430 = vcombine.high %v4414, %v4414
        %v4431 = vcombine.high %v4421, %v4421
        %v4432 = vcombine.high %v4428, %v4428
        %v4433 = vcombine.high %v1183, %v1183
        %v4435 = vunpack.c.l.s4 1966171168
        %v4436 = vunpack.c.0.s8 %v4435
        %v4437 = vlaneseq
        %v4438 = vshrl.u32 %v4437, 7
        %v4439 = vsub.s32 %v4436, %v4438
        %v4440 = vrot.slane %v1183, %v4439
        %v4442 = vunpack.c.l.s4 1966171168
        %v4443 = vunpack.c.0.s8 %v4442
        %v4444 = vlaneseq
        %v4445 = vshrl.u32 %v4444, 7
        %v4446 = vsub.s32 %v4443, %v4445
        %v4447 = vrot.slane %v4433, %v4446
        %v4448 = vcombine.high %v4440, %v4440
        %v4449 = vcombine.high %v4447, %v4447
        %v4451 = vunpack.c.l.s4 1966171168
        %v4452 = vunpack.c.0.s8 %v4451
        %v4453 = vlaneseq
        %v4454 = vshrl.u32 %v4453, 7
        %v4455 = vsub.s32 %v4452, %v4454
        %v4456 = vrot.slane %v4440, %v4455
        %v4458 = vunpack.c.l.s4 1966171168
        %v4459 = vunpack.c.0.s8 %v4458
        %v4460 = vlaneseq
        %v4461 = vshrl.u32 %v4460, 7
        %v4462 = vsub.s32 %v4459, %v4461
        %v4463 = vrot.slane %v4447, %v4462
        %v4465 = vunpack.c.l.s4 1966171168
        %v4466 = vunpack.c.0.s8 %v4465
        %v4467 = vlaneseq
        %v4468 = vshrl.u32 %v4467, 7
        %v4469 = vsub.s32 %v4466, %v4468
        %v4470 = vrot.slane %v4448, %v4469
        %v4472 = vunpack.c.l.s4 1966171168
        %v4473 = vunpack.c.0.s8 %v4472
        %v4474 = vlaneseq
        %v4475 = vshrl.u32 %v4474, 7
        %v4476 = vsub.s32 %v4473, %v4475
        %v4477 = vrot.slane %v4449, %v4476
        %v4478 = vcombine.high %v4456, %v4456
        %v4479 = vcombine.high %v4463, %v4463
        %v4480 = vcombine.high %v4470, %v4470
        %v4481 = vcombine.high %v4477, %v4477
        %v4482 = vcombine.high %v1188, %v1188
        %v4484 = vunpack.c.l.s4 1966171168
        %v4485 = vunpack.c.0.s8 %v4484
        %v4486 = vlaneseq
        %v4487 = vshrl.u32 %v4486, 7
        %v4488 = vsub.s32 %v4485, %v4487
        %v4489 = vrot.slane %v1188, %v4488
        %v4491 = vunpack.c.l.s4 1966171168
        %v4492 = vunpack.c.0.s8 %v4491
        %v4493 = vlaneseq
        %v4494 = vshrl.u32 %v4493, 7
        %v4495 = vsub.s32 %v4492, %v4494
        %v4496 = vrot.slane %v4482, %v4495
        %v4497 = vcombine.high %v4489, %v4489
        %v4498 = vcombine.high %v4496, %v4496
        %v4500 = vunpack.c.l.s4 1966171168
        %v4501 = vunpack.c.0.s8 %v4500
        %v4502 = vlaneseq
        %v4503 = vshrl.u32 %v4502, 7
        %v4504 = vsub.s32 %v4501, %v4503
        %v4505 = vrot.slane %v4489, %v4504
        %v4507 = vunpack.c.l.s4 1966171168
        %v4508 = vunpack.c.0.s8 %v4507
        %v4509 = vlaneseq
        %v4510 = vshrl.u32 %v4509, 7
        %v4511 = vsub.s32 %v4508, %v4510
        %v4512 = vrot.slane %v4496, %v4511
        %v4514 = vunpack.c.l.s4 1966171168
        %v4515 = vunpack.c.0.s8 %v4514
        %v4516 = vlaneseq
        %v4517 = vshrl.u32 %v4516, 7
        %v4518 = vsub.s32 %v4515, %v4517
        %v4519 = vrot.slane %v4497, %v4518
        %v4521 = vunpack.c.l.s4 1966171168
        %v4522 = vunpack.c.0.s8 %v4521
        %v4523 = vlaneseq
        %v4524 = vshrl.u32 %v4523, 7
        %v4525 = vsub.s32 %v4522, %v4524
        %v4526 = vrot.slane %v4498, %v4525
        %v4527 = vcombine.high %v4505, %v4505
        %v4528 = vcombine.high %v4512, %v4512
        %v4529 = vcombine.high %v4519, %v4519
        %v4530 = vcombine.high %v4526, %v4526
        %v4571 = vmul.f32 %v3929, %v4309
        %v4572 = vmul.f32 %v3938, %v4323
        %v4573 = vmul.f32 %v3947, %v4331
        %v4574 = vmul.f32 %v3956, %v4333
        %v4575 = vmul.f32 %v3965, %v4316
        %v4576 = vmul.f32 %v3974, %v4330
        %v4577 = vmul.f32 %v3983, %v4332
        %v4578 = vmul.f32 %v3992, %v4334
        %v4579 = vmul.f32 %v4001, %v4358
        %v4580 = vmul.f32 %v4010, %v4372
        %v4581 = vmul.f32 %v4019, %v4380
        %v4582 = vmul.f32 %v4028, %v4382
        %v4583 = vmul.f32 %v4037, %v4365
        %v4584 = vmul.f32 %v4046, %v4379
        %v4585 = vmul.f32 %v4055, %v4381
        %v4586 = vmul.f32 %v4064, %v4383
        %v4587 = vmul.f32 %v4073, %v4407
        %v4588 = vmul.f32 %v4082, %v4421
        %v4589 = vmul.f32 %v4091, %v4429
        %v4590 = vmul.f32 %v4100, %v4431
        %v4591 = vmul.f32 %v4109, %v4414
        %v4592 = vmul.f32 %v4118, %v4428
        %v4593 = vmul.f32 %v4127, %v4430
        %v4594 = vmul.f32 %v4136, %v4432
        %v4595 = vmul.f32 %v4145, %v4456
        %v4596 = vmul.f32 %v4154, %v4470
        %v4597 = vmul.f32 %v4163, %v4478
        %v4598 = vmul.f32 %v4172, %v4480
        %v4599 = vmul.f32 %v4181, %v4463
        %v4600 = vmul.f32 %v4190, %v4477
        %v4601 = vmul.f32 %v4199, %v4479
        %v4602 = vmul.f32 %v4208, %v4481
        %v4603 = vmul.f32 %v4217, %v4505
        %v4604 = vmul.f32 %v4226, %v4519
        %v4605 = vmul.f32 %v4235, %v4527
        %v4606 = vmul.f32 %v4244, %v4529
        %v4607 = vmul.f32 %v4253, %v4512
        %v4608 = vmul.f32 %v4262, %v4526
        %v4609 = vmul.f32 %v4271, %v4528
        %v4610 = vmul.f32 %v4280, %v4530
        %v4651 = vcombine.low %v4571, %v4572
        %v4652 = vcombine.low %v4573, %v4574
        %v4653 = vcombine.low %v4575, %v4576
        %v4654 = vcombine.low %v4577, %v4578
        %v4656 = vunpack.c.l.s4 1966171168
        %v4657 = vunpack.c.0.s8 %v4656
        %v4658 = vlaneseq
        %v4659 = vshrl.u32 %v4658, 7
        %v4660 = vsub.s32 %v4657, %v4659
        %v4661 = vrot.slane %v4651, %v4660
        %v4663 = vunpack.c.l.s4 1966171168
        %v4664 = vunpack.c.0.s8 %v4663
        %v4665 = vlaneseq
        %v4666 = vshrl.u32 %v4665, 7
        %v4667 = vsub.s32 %v4664, %v4666
        %v4668 = vrot.slane %v4652, %v4667
        %v4670 = vunpack.c.l.s4 1966171168
        %v4671 = vunpack.c.0.s8 %v4670
        %v4672 = vlaneseq
        %v4673 = vshrl.u32 %v4672, 7
        %v4674 = vsub.s32 %v4671, %v4673
        %v4675 = vrot.slane %v4653, %v4674
        %v4677 = vunpack.c.l.s4 1966171168
        %v4678 = vunpack.c.0.s8 %v4677
        %v4679 = vlaneseq
        %v4680 = vshrl.u32 %v4679, 7
        %v4681 = vsub.s32 %v4678, %v4680
        %v4682 = vrot.slane %v4654, %v4681
        %v4683 = vcombine.low %v4661, %v4668
        %v4684 = vcombine.low %v4675, %v4682
        %v4686 = vunpack.c.l.s4 1966171168
        %v4687 = vunpack.c.0.s8 %v4686
        %v4688 = vlaneseq
        %v4689 = vshrl.u32 %v4688, 7
        %v4690 = vsub.s32 %v4687, %v4689
        %v4691 = vrot.slane %v4683, %v4690
        %v4693 = vunpack.c.l.s4 1966171168
        %v4694 = vunpack.c.0.s8 %v4693
        %v4695 = vlaneseq
        %v4696 = vshrl.u32 %v4695, 7
        %v4697 = vsub.s32 %v4694, %v4696
        %v4698 = vrot.slane %v4684, %v4697
        %v4699 = vcombine.low %v4691, %v4698
        %v4700 = vcombine.low %v4579, %v4580
        %v4701 = vcombine.low %v4581, %v4582
        %v4702 = vcombine.low %v4583, %v4584
        %v4703 = vcombine.low %v4585, %v4586
        %v4705 = vunpack.c.l.s4 1966171168
        %v4706 = vunpack.c.0.s8 %v4705
        %v4707 = vlaneseq
        %v4708 = vshrl.u32 %v4707, 7
        %v4709 = vsub.s32 %v4706, %v4708
        %v4710 = vrot.slane %v4700, %v4709
        %v4712 = vunpack.c.l.s4 1966171168
        %v4713 = vunpack.c.0.s8 %v4712
        %v4714 = vlaneseq
        %v4715 = vshrl.u32 %v4714, 7
        %v4716 = vsub.s32 %v4713, %v4715
        %v4717 = vrot.slane %v4701, %v4716
        %v4719 = vunpack.c.l.s4 1966171168
        %v4720 = vunpack.c.0.s8 %v4719
        %v4721 = vlaneseq
        %v4722 = vshrl.u32 %v4721, 7
        %v4723 = vsub.s32 %v4720, %v4722
        %v4724 = vrot.slane %v4702, %v4723
        %v4726 = vunpack.c.l.s4 1966171168
        %v4727 = vunpack.c.0.s8 %v4726
        %v4728 = vlaneseq
        %v4729 = vshrl.u32 %v4728, 7
        %v4730 = vsub.s32 %v4727, %v4729
        %v4731 = vrot.slane %v4703, %v4730
        %v4732 = vcombine.low %v4710, %v4717
        %v4733 = vcombine.low %v4724, %v4731
        %v4735 = vunpack.c.l.s4 1966171168
        %v4736 = vunpack.c.0.s8 %v4735
        %v4737 = vlaneseq
        %v4738 = vshrl.u32 %v4737, 7
        %v4739 = vsub.s32 %v4736, %v4738
        %v4740 = vrot.slane %v4732, %v4739
        %v4742 = vunpack.c.l.s4 1966171168
        %v4743 = vunpack.c.0.s8 %v4742
        %v4744 = vlaneseq
        %v4745 = vshrl.u32 %v4744, 7
        %v4746 = vsub.s32 %v4743, %v4745
        %v4747 = vrot.slane %v4733, %v4746
        %v4748 = vcombine.low %v4740, %v4747
        %v4749 = vcombine.low %v4587, %v4588
        %v4750 = vcombine.low %v4589, %v4590
        %v4751 = vcombine.low %v4591, %v4592
        %v4752 = vcombine.low %v4593, %v4594
        %v4754 = vunpack.c.l.s4 1966171168
        %v4755 = vunpack.c.0.s8 %v4754
        %v4756 = vlaneseq
        %v4757 = vshrl.u32 %v4756, 7
        %v4758 = vsub.s32 %v4755, %v4757
        %v4759 = vrot.slane %v4749, %v4758
        %v4761 = vunpack.c.l.s4 1966171168
        %v4762 = vunpack.c.0.s8 %v4761
        %v4763 = vlaneseq
        %v4764 = vshrl.u32 %v4763, 7
        %v4765 = vsub.s32 %v4762, %v4764
        %v4766 = vrot.slane %v4750, %v4765
        %v4768 = vunpack.c.l.s4 1966171168
        %v4769 = vunpack.c.0.s8 %v4768
        %v4770 = vlaneseq
        %v4771 = vshrl.u32 %v4770, 7
        %v4772 = vsub.s32 %v4769, %v4771
        %v4773 = vrot.slane %v4751, %v4772
        %v4775 = vunpack.c.l.s4 1966171168
        %v4776 = vunpack.c.0.s8 %v4775
        %v4777 = vlaneseq
        %v4778 = vshrl.u32 %v4777, 7
        %v4779 = vsub.s32 %v4776, %v4778
        %v4780 = vrot.slane %v4752, %v4779
        %v4781 = vcombine.low %v4759, %v4766
        %v4782 = vcombine.low %v4773, %v4780
        %v4784 = vunpack.c.l.s4 1966171168
        %v4785 = vunpack.c.0.s8 %v4784
        %v4786 = vlaneseq
        %v4787 = vshrl.u32 %v4786, 7
        %v4788 = vsub.s32 %v4785, %v4787
        %v4789 = vrot.slane %v4781, %v4788
        %v4791 = vunpack.c.l.s4 1966171168
        %v4792 = vunpack.c.0.s8 %v4791
        %v4793 = vlaneseq
        %v4794 = vshrl.u32 %v4793, 7
        %v4795 = vsub.s32 %v4792, %v4794
        %v4796 = vrot.slane %v4782, %v4795
        %v4797 = vcombine.low %v4789, %v4796
        %v4798 = vcombine.low %v4595, %v4596
        %v4799 = vcombine.low %v4597, %v4598
        %v4800 = vcombine.low %v4599, %v4600
        %v4801 = vcombine.low %v4601, %v4602
        %v4803 = vunpack.c.l.s4 1966171168
        %v4804 = vunpack.c.0.s8 %v4803
        %v4805 = vlaneseq
        %v4806 = vshrl.u32 %v4805, 7
        %v4807 = vsub.s32 %v4804, %v4806
        %v4808 = vrot.slane %v4798, %v4807
        %v4810 = vunpack.c.l.s4 1966171168
        %v4811 = vunpack.c.0.s8 %v4810
        %v4812 = vlaneseq
        %v4813 = vshrl.u32 %v4812, 7
        %v4814 = vsub.s32 %v4811, %v4813
        %v4815 = vrot.slane %v4799, %v4814
        %v4817 = vunpack.c.l.s4 1966171168
        %v4818 = vunpack.c.0.s8 %v4817
        %v4819 = vlaneseq
        %v4820 = vshrl.u32 %v4819, 7
        %v4821 = vsub.s32 %v4818, %v4820
        %v4822 = vrot.slane %v4800, %v4821
        %v4824 = vunpack.c.l.s4 1966171168
        %v4825 = vunpack.c.0.s8 %v4824
        %v4826 = vlaneseq
        %v4827 = vshrl.u32 %v4826, 7
        %v4828 = vsub.s32 %v4825, %v4827
        %v4829 = vrot.slane %v4801, %v4828
        %v4830 = vcombine.low %v4808, %v4815
        %v4831 = vcombine.low %v4822, %v4829
        %v4833 = vunpack.c.l.s4 1966171168
        %v4834 = vunpack.c.0.s8 %v4833
        %v4835 = vlaneseq
        %v4836 = vshrl.u32 %v4835, 7
        %v4837 = vsub.s32 %v4834, %v4836
        %v4838 = vrot.slane %v4830, %v4837
        %v4840 = vunpack.c.l.s4 1966171168
        %v4841 = vunpack.c.0.s8 %v4840
        %v4842 = vlaneseq
        %v4843 = vshrl.u32 %v4842, 7
        %v4844 = vsub.s32 %v4841, %v4843
        %v4845 = vrot.slane %v4831, %v4844
        %v4846 = vcombine.low %v4838, %v4845
        %v4847 = vcombine.low %v4603, %v4604
        %v4848 = vcombine.low %v4605, %v4606
        %v4849 = vcombine.low %v4607, %v4608
        %v4850 = vcombine.low %v4609, %v4610
        %v4852 = vunpack.c.l.s4 1966171168
        %v4853 = vunpack.c.0.s8 %v4852
        %v4854 = vlaneseq
        %v4855 = vshrl.u32 %v4854, 7
        %v4856 = vsub.s32 %v4853, %v4855
        %v4857 = vrot.slane %v4847, %v4856
        %v4859 = vunpack.c.l.s4 1966171168
        %v4860 = vunpack.c.0.s8 %v4859
        %v4861 = vlaneseq
        %v4862 = vshrl.u32 %v4861, 7
        %v4863 = vsub.s32 %v4860, %v4862
        %v4864 = vrot.slane %v4848, %v4863
        %v4866 = vunpack.c.l.s4 1966171168
        %v4867 = vunpack.c.0.s8 %v4866
        %v4868 = vlaneseq
        %v4869 = vshrl.u32 %v4868, 7
        %v4870 = vsub.s32 %v4867, %v4869
        %v4871 = vrot.slane %v4849, %v4870
        %v4873 = vunpack.c.l.s4 1966171168
        %v4874 = vunpack.c.0.s8 %v4873
        %v4875 = vlaneseq
        %v4876 = vshrl.u32 %v4875, 7
        %v4877 = vsub.s32 %v4874, %v4876
        %v4878 = vrot.slane %v4850, %v4877
        %v4879 = vcombine.low %v4857, %v4864
        %v4880 = vcombine.low %v4871, %v4878
        %v4882 = vunpack.c.l.s4 1966171168
        %v4883 = vunpack.c.0.s8 %v4882
        %v4884 = vlaneseq
        %v4885 = vshrl.u32 %v4884, 7
        %v4886 = vsub.s32 %v4883, %v4885
        %v4887 = vrot.slane %v4879, %v4886
        %v4889 = vunpack.c.l.s4 1966171168
        %v4890 = vunpack.c.0.s8 %v4889
        %v4891 = vlaneseq
        %v4892 = vshrl.u32 %v4891, 7
        %v4893 = vsub.s32 %v4890, %v4892
        %v4894 = vrot.slane %v4880, %v4893
        %v4895 = vcombine.low %v4887, %v4894
        %4901 = vmatprep.subr.mxu0 0.0
        %4902 = vmatpush1.msra.mxu0 %v4699
        %4903 = vmatprep.subr.mxu0 0.0
        %4904 = vmatpush1.msra.mxu0 %v4748
        %4905 = vmatprep.subr.mxu0 0.0
        %4906 = vmatpush1.msra.mxu0 %v4797
        %4907 = vmatprep.subr.mxu0 0.0
        %4908 = vmatpush1.msra.mxu0 %v4846
        %4909 = vmatprep.subr.mxu0 0.0
        %4910 = vmatpush1.msra.mxu0 %v4895
        %4911 = vmatprep.subr.mxu0 0.0
        %4912 = vmatpush1.msra.mxu0 0.0
        %4913 = vmatprep.subr.mxu0 0.0
        %4914 = vmatpush1.msra.mxu0 0.0
        %4915 = vmatprep.subr.mxu0 0.0
        %4916 = vmatpush1.msra.mxu0 0.0
        %4917 = vmatprep.subr.mxu0 0.0
        %4918 = vmatpush1.msra.mxu0 0.0
        %4919 = vmatprep.subr.mxu0 0.0
        %4920 = vmatpush1.msra.mxu0 0.0
        %4921 = vmatprep.subr.mxu0 0.0
        %4922 = vmatpush1.msra.mxu0 0.0
        %4923 = vmatprep.subr.mxu0 0.0
        %4924 = vmatpush1.msra.mxu0 0.0
        %4925 = vmatprep.subr.mxu0 0.0
        %4926 = vmatpush1.msra.mxu0 0.0
        %4927 = vmatprep.subr.mxu0 0.0
        %4928 = vmatpush1.msra.mxu0 0.0
        %4929 = vmatprep.subr.mxu0 0.0
        %4930 = vmatpush1.msra.mxu0 0.0
        %4931 = vmatprep.subr.mxu0 0.0
        %4932 = vmatpush1.msra.mxu0 0.0
        %4933 = vmatprep.subr.mxu0 0.0
        %4934 = vmatpush1.msra.mxu0 0.0
        %4935 = vmatprep.subr.mxu0 0.0
        %4936 = vmatpush1.msra.mxu0 0.0
        %4937 = vmatprep.subr.mxu0 0.0
        %4938 = vmatpush1.msra.mxu0 0.0
        %4939 = vmatprep.subr.mxu0 0.0
        %4940 = vmatpush1.msra.mxu0 0.0
        %4941 = vmatprep.subr.mxu0 0.0
        %4942 = vmatpush1.msra.mxu0 0.0
        %4943 = vmatprep.subr.mxu0 0.0
        %4944 = vmatpush1.msra.mxu0 0.0
        %4945 = vmatprep.subr.mxu0 0.0
        %4946 = vmatpush1.msra.mxu0 0.0
        %4947 = vmatprep.subr.mxu0 0.0
        %4948 = vmatpush1.msra.mxu0 0.0
        %4949 = vmatprep.subr.mxu0 0.0
        %4950 = vmatpush1.msra.mxu0 0.0
        %4951 = vmatprep.subr.mxu0 0.0
        %4952 = vmatpush1.msra.mxu0 0.0
        %4953 = vmatprep.subr.mxu0 0.0
        %4954 = vmatpush1.msra.mxu0 0.0
        %4955 = vmatprep.subr.mxu0 0.0
        %4956 = vmatpush1.msra.mxu0 0.0
        %4957 = vmatprep.subr.mxu0 0.0
        %4958 = vmatpush1.msra.mxu0 0.0
        %4959 = vmatprep.subr.mxu0 0.0
        %4960 = vmatpush1.msra.mxu0 0.0
        %4961 = vmatprep.subr.mxu0 0.0
        %4962 = vmatpush1.msra.mxu0 0.0
        %4963 = vmatprep.subr.mxu0 0.0
        %4964 = vmatpush1.msra.mxu0 0.0
        %4965 = vmatprep.mubr.f32.mxu0 0.0
        %4966 = vmatmul.mubr.f32.gmra.mrb[0].mxu0 %v1194
        %v4967 = vpop.f32.mrb[0].mxu0
        %v4968 = vadd.f32 0.0, %v4967
        %v4969 = vpop.f32.mrb[0].mxu0
        %4970 = vdwg.mxu0
        %v4971 = vld [vmem:[%s702] sm:$0xff]
        %v4972 = vld [vmem:[%s17] sm:$0x3f]
        %v4973 = vld [vmem:[%s18] sm:$0xff]
        %v4974 = vld [vmem:[%s18 + $0x8] sm:$0xff]
        %v4975 = vld [vmem:[%s18 + $0x10] sm:$0xff]
        %v4976 = vld [vmem:[%s18 + $0x18] sm:$0xff]
        %v4978 = vsel %vm843, %v4968, 0
        %4980 = vmatprep.subr.mxu0 0.0
        %4981 = vmatpush1.msra.mxu0 %v4973
        %4982 = vmatprep.subr.mxu0 0.0
        %4983 = vmatpush1.msra.mxu0 %v4974
        %4984 = vmatprep.subr.mxu0 0.0
        %4985 = vmatpush1.msra.mxu0 %v4975
        %4986 = vmatprep.subr.mxu0 0.0
        %4987 = vmatpush1.msra.mxu0 %v4976
        %4988 = vmatprep.subr.mxu0 0.0
        %4989 = vmatpush1.msra.mxu0 0.0
        %4990 = vmatprep.subr.mxu0 0.0
        %4991 = vmatpush1.msra.mxu0 0.0
        %4992 = vmatprep.subr.mxu0 0.0
        %4993 = vmatpush1.msra.mxu0 0.0
        %4994 = vmatprep.subr.mxu0 0.0
        %4995 = vmatpush1.msra.mxu0 0.0
        %4996 = vmatprep.subr.mxu0 0.0
        %4997 = vmatpush1.msra.mxu0 0.0
        %4998 = vmatprep.subr.mxu0 0.0
        %4999 = vmatpush1.msra.mxu0 0.0
        %5000 = vmatprep.subr.mxu0 0.0
        %5001 = vmatpush1.msra.mxu0 0.0
        %5002 = vmatprep.subr.mxu0 0.0
        %5003 = vmatpush1.msra.mxu0 0.0
        %5004 = vmatprep.subr.mxu0 0.0
        %5005 = vmatpush1.msra.mxu0 0.0
        %5006 = vmatprep.subr.mxu0 0.0
        %5007 = vmatpush1.msra.mxu0 0.0
        %5008 = vmatprep.subr.mxu0 0.0
        %5009 = vmatpush1.msra.mxu0 0.0
        %5010 = vmatprep.subr.mxu0 0.0
        %5011 = vmatpush1.msra.mxu0 0.0
        %5012 = vmatprep.subr.mxu0 0.0
        %5013 = vmatpush1.msra.mxu0 0.0
        %5014 = vmatprep.subr.mxu0 0.0
        %5015 = vmatpush1.msra.mxu0 0.0
        %5016 = vmatprep.subr.mxu0 0.0
        %5017 = vmatpush1.msra.mxu0 0.0
        %5018 = vmatprep.subr.mxu0 0.0
        %5019 = vmatpush1.msra.mxu0 0.0
        %5020 = vmatprep.subr.mxu0 0.0
        %5021 = vmatpush1.msra.mxu0 0.0
        %5022 = vmatprep.subr.mxu0 0.0
        %5023 = vmatpush1.msra.mxu0 0.0
        %5024 = vmatprep.subr.mxu0 0.0
        %5025 = vmatpush1.msra.mxu0 0.0
        %5026 = vmatprep.subr.mxu0 0.0
        %5027 = vmatpush1.msra.mxu0 0.0
        %5028 = vmatprep.subr.mxu0 0.0
        %5029 = vmatpush1.msra.mxu0 0.0
        %5030 = vmatprep.subr.mxu0 0.0
        %5031 = vmatpush1.msra.mxu0 0.0
        %5032 = vmatprep.subr.mxu0 0.0
        %5033 = vmatpush1.msra.mxu0 0.0
        %5034 = vmatprep.subr.mxu0 0.0
        %5035 = vmatpush1.msra.mxu0 0.0
        %5036 = vmatprep.subr.mxu0 0.0
        %5037 = vmatpush1.msra.mxu0 0.0
        %5038 = vmatprep.subr.mxu0 0.0
        %5039 = vmatpush1.msra.mxu0 0.0
        %5040 = vmatprep.subr.mxu0 0.0
        %5041 = vmatpush1.msra.mxu0 0.0
        %5042 = vmatprep.subr.mxu0 0.0
        %5043 = vmatpush1.msra.mxu0 0.0
        %5044 = vmatprep.mubr.f32.mxu0 0.0
        %5045 = vmatmul.mubr.f32.gmra.mrb[0].mxu0 %v4978
        %v5046 = vpop.f32.mrb[0].mxu0
        %v5047 = vadd.f32 0.0, %v5046
        %v5048 = vpop.f32.mrb[0].mxu0
        %5049 = vdwg.mxu0
        %vm5050 = vcmask 48128
        %v5052 = vsel %vm5050, %v4971, 0
        %vm5054 = vcmask 1045504
        %v5056 = vsel %vm5054, %v4972, 0
        %5058 = vmatprep.subr.mxu0 0.0
        %5059 = vmatpush1.msra.mxu0 %v5056
        %5060 = vmatprep.subr.mxu0 0.0
        %5061 = vmatpush1.msra.mxu0 0.0
        %5062 = vmatprep.subr.mxu0 0.0
        %5063 = vmatpush1.msra.mxu0 0.0
        %5064 = vmatprep.subr.mxu0 0.0
        %5065 = vmatpush1.msra.mxu0 0.0
        %5066 = vmatprep.subr.mxu0 0.0
        %5067 = vmatpush1.msra.mxu0 0.0
        %5068 = vmatprep.subr.mxu0 0.0
        %5069 = vmatpush1.msra.mxu0 0.0
        %5070 = vmatprep.subr.mxu0 0.0
        %5071 = vmatpush1.msra.mxu0 0.0
        %5072 = vmatprep.subr.mxu0 0.0
        %5073 = vmatpush1.msra.mxu0 0.0
        %5074 = vmatprep.subr.mxu0 0.0
        %5075 = vmatpush1.msra.mxu0 0.0
        %5076 = vmatprep.subr.mxu0 0.0
        %5077 = vmatpush1.msra.mxu0 0.0
        %5078 = vmatprep.subr.mxu0 0.0
        %5079 = vmatpush1.msra.mxu0 0.0
        %5080 = vmatprep.subr.mxu0 0.0
        %5081 = vmatpush1.msra.mxu0 0.0
        %5082 = vmatprep.subr.mxu0 0.0
        %5083 = vmatpush1.msra.mxu0 0.0
        %5084 = vmatprep.subr.mxu0 0.0
        %5085 = vmatpush1.msra.mxu0 0.0
        %5086 = vmatprep.subr.mxu0 0.0
        %5087 = vmatpush1.msra.mxu0 0.0
        %5088 = vmatprep.subr.mxu0 0.0
        %5089 = vmatpush1.msra.mxu0 0.0
        %5090 = vmatprep.subr.mxu0 0.0
        %5091 = vmatpush1.msra.mxu0 0.0
        %5092 = vmatprep.subr.mxu0 0.0
        %5093 = vmatpush1.msra.mxu0 0.0
        %5094 = vmatprep.subr.mxu0 0.0
        %5095 = vmatpush1.msra.mxu0 0.0
        %5096 = vmatprep.subr.mxu0 0.0
        %5097 = vmatpush1.msra.mxu0 0.0
        %5098 = vmatprep.subr.mxu0 0.0
        %5099 = vmatpush1.msra.mxu0 0.0
        %5100 = vmatprep.subr.mxu0 0.0
        %5101 = vmatpush1.msra.mxu0 0.0
        %5102 = vmatprep.subr.mxu0 0.0
        %5103 = vmatpush1.msra.mxu0 0.0
        %5104 = vmatprep.subr.mxu0 0.0
        %5105 = vmatpush1.msra.mxu0 0.0
        %5106 = vmatprep.subr.mxu0 0.0
        %5107 = vmatpush1.msra.mxu0 0.0
        %5108 = vmatprep.subr.mxu0 0.0
        %5109 = vmatpush1.msra.mxu0 0.0
        %5110 = vmatprep.subr.mxu0 0.0
        %5111 = vmatpush1.msra.mxu0 0.0
        %5112 = vmatprep.subr.mxu0 0.0
        %5113 = vmatpush1.msra.mxu0 0.0
        %5114 = vmatprep.subr.mxu0 0.0
        %5115 = vmatpush1.msra.mxu0 0.0
        %5116 = vmatprep.subr.mxu0 0.0
        %5117 = vmatpush1.msra.mxu0 0.0
        %5118 = vmatprep.subr.mxu0 0.0
        %5119 = vmatpush1.msra.mxu0 0.0
        %5120 = vmatprep.subr.mxu0 0.0
        %5121 = vmatpush1.msra.mxu0 0.0
        %5122 = vmatprep.mubr.f32.mxu0 0.0
        %5123 = vmatmul.mubr.f32.gmra.mrb[0].mxu0 %v5052
        %v5124 = vpop.f32.mrb[0].mxu0
        %v5125 = vadd.f32 %v5047, %v5124
        %v5126 = vpop.f32.mrb[0].mxu0
        %5127 = vdwg.mxu0
        %v5128 = vld [vmem:[%s19] sm:$0x1]
        %v5130 = vlaneseq
        %v5131 = vshrl.u32 %v5130, 7
        %v5132 = vsub.s32 0, %v5131
        %v5133 = vrot.slane %v5128, %v5132
        %v5135 = vadd.f32 %v5125, %v5133
        %v5136 = vmax.f32 %v5135, 0.0
        %v5137 = vld [vmem:[%s20] sm:$0xff]
        %v5138 = vld [vmem:[%s20 + $0x8] sm:$0xff]
        %v5139 = vld [vmem:[%s20 + $0x10] sm:$0xff]
        %v5140 = vld [vmem:[%s20 + $0x18] sm:$0xff]
        %v5141 = vld [vmem:[%s21] sm:$0x1]
        %v5143 = vlaneseq
        %v5144 = vshrl.u32 %v5143, 7
        %v5145 = vsub.s32 0, %v5144
        %v5146 = vrot.slane %v5141, %v5145
        %v5149 = vsel %vm843, %v5136, 0
        %5151 = vmatprep.subr.mxu0 0.0
        %5152 = vmatpush1.msra.mxu0 %v5137
        %5153 = vmatprep.subr.mxu0 0.0
        %5154 = vmatpush1.msra.mxu0 %v5138
        %5155 = vmatprep.subr.mxu0 0.0
        %5156 = vmatpush1.msra.mxu0 %v5139
        %5157 = vmatprep.subr.mxu0 0.0
        %5158 = vmatpush1.msra.mxu0 %v5140
        %5159 = vmatprep.subr.mxu0 0.0
        %5160 = vmatpush1.msra.mxu0 0.0
        %5161 = vmatprep.subr.mxu0 0.0
        %5162 = vmatpush1.msra.mxu0 0.0
        %5163 = vmatprep.subr.mxu0 0.0
        %5164 = vmatpush1.msra.mxu0 0.0
        %5165 = vmatprep.subr.mxu0 0.0
        %5166 = vmatpush1.msra.mxu0 0.0
        %5167 = vmatprep.subr.mxu0 0.0
        %5168 = vmatpush1.msra.mxu0 0.0
        %5169 = vmatprep.subr.mxu0 0.0
        %5170 = vmatpush1.msra.mxu0 0.0
        %5171 = vmatprep.subr.mxu0 0.0
        %5172 = vmatpush1.msra.mxu0 0.0
        %5173 = vmatprep.subr.mxu0 0.0
        %5174 = vmatpush1.msra.mxu0 0.0
        %5175 = vmatprep.subr.mxu0 0.0
        %5176 = vmatpush1.msra.mxu0 0.0
        %5177 = vmatprep.subr.mxu0 0.0
        %5178 = vmatpush1.msra.mxu0 0.0
        %5179 = vmatprep.subr.mxu0 0.0
        %5180 = vmatpush1.msra.mxu0 0.0
        %5181 = vmatprep.subr.mxu0 0.0
        %5182 = vmatpush1.msra.mxu0 0.0
        %5183 = vmatprep.subr.mxu0 0.0
        %5184 = vmatpush1.msra.mxu0 0.0
        %5185 = vmatprep.subr.mxu0 0.0
        %5186 = vmatpush1.msra.mxu0 0.0
        %5187 = vmatprep.subr.mxu0 0.0
        %5188 = vmatpush1.msra.mxu0 0.0
        %5189 = vmatprep.subr.mxu0 0.0
        %5190 = vmatpush1.msra.mxu0 0.0
        %5191 = vmatprep.subr.mxu0 0.0
        %5192 = vmatpush1.msra.mxu0 0.0
        %5193 = vmatprep.subr.mxu0 0.0
        %5194 = vmatpush1.msra.mxu0 0.0
        %5195 = vmatprep.subr.mxu0 0.0
        %5196 = vmatpush1.msra.mxu0 0.0
        %5197 = vmatprep.subr.mxu0 0.0
        %5198 = vmatpush1.msra.mxu0 0.0
        %5199 = vmatprep.subr.mxu0 0.0
        %5200 = vmatpush1.msra.mxu0 0.0
        %5201 = vmatprep.subr.mxu0 0.0
        %5202 = vmatpush1.msra.mxu0 0.0
        %5203 = vmatprep.subr.mxu0 0.0
        %5204 = vmatpush1.msra.mxu0 0.0
        %5205 = vmatprep.subr.mxu0 0.0
        %5206 = vmatpush1.msra.mxu0 0.0
        %5207 = vmatprep.subr.mxu0 0.0
        %5208 = vmatpush1.msra.mxu0 0.0
        %5209 = vmatprep.subr.mxu0 0.0
        %5210 = vmatpush1.msra.mxu0 0.0
        %5211 = vmatprep.subr.mxu0 0.0
        %5212 = vmatpush1.msra.mxu0 0.0
        %5213 = vmatprep.subr.mxu0 0.0
        %5214 = vmatpush1.msra.mxu0 0.0
        %5215 = vmatprep.mubr.f32.mxu0 0.0
        %5216 = vmatmul.mubr.f32.gmra.mrb[0].mxu0 %v5149
        %v5217 = vpop.f32.mrb[0].mxu0
        %v5218 = vadd.f32 %v5146, %v5217
        %v5219 = vpop.f32.mrb[0].mxu0
        %5220 = vdwg.mxu0
        %5221 = vst [vmem:[%s692] sm:$0xff] %v5218
        %s5222 = sand.u32 %s518, 1
        %s5223 = scalar_lea.sflag [#allocation4], %s5222
        %s5224 = sand.u32 %s518, 1
        %s5225 = smul.addr %s5224, 8
        %s5226 = scalar_lea.vmem [#allocation3], %s5225
        // Predicated region
        $region109: #{tpu_custom_call.1} parent=107 // pred_check
          %p5227 = pneg %p528
        $region110: #{tpu_custom_call.1} parent=107 // pred_check_branch
          %5229 = sbr.rel (%p5227) target = $region112
        $region111: #{tpu_custom_call.1} parent=107 // pred_region
          %s5231 = ssub.s32 128, 128
          %5232 = vsyncadd %s5223, %s5231
          %s5233 = smul.addr %s38, 128
          %s5234 = scalar_lea.hbm %s22, %s5233
          %s5236 = sshll.u32 %s5226, 4
          %s5237 = int_to_ptr.vmem [resolvable:$true] %s5236
          %5239 = dma.vmem_to_hbm [thread:$0]  %s5237, 128, %s5234, %s5223
        $region112: #{tpu_custom_call.1} parent=107 // pred_fallthru
          _
      $region108: #{tpu_custom_call.1} parent=5 // pred_fallthru
        _
      %p5240 = scmp.le.s32.totalorder 2, %s33
      // Predicated region
      $region113: #{tpu_custom_call.1} parent=5 // pred_check
        %p5241 = pneg %p5240
      $region114: #{tpu_custom_call.1} parent=5 // pred_check_branch
        %5243 = sbr.rel (%p5241) target = $region116
      $region115: #{tpu_custom_call.1} parent=5 // pred_region
        %s5244 = ssub.s32 %s33, 2
        // Predicated region
        $region117: #{tpu_custom_call.1} parent=115 // pred_check
          %p5245 = pneg %p534
        $region118: #{tpu_custom_call.1} parent=115 // pred_check_branch
          %5247 = sbr.rel (%p5245) target = $region120
        $region119: #{tpu_custom_call.1} parent=115 // pred_region
          %s5248 = sand.u32 %s519, 1
          %s5249 = scalar_lea.sflag [#allocation4], %s5248
          %s5250 = sand.u32 %s519, 1
          %s5251 = smul.addr %s5250, 8
          %s5252 = scalar_lea.vmem [#allocation3], %s5251
          %5253 = dma.done %s5249, 128
        $region120: #{tpu_custom_call.1} parent=115 // pred_fallthru
          _
      $region116: #{tpu_custom_call.1} parent=5 // pred_fallthru
        _
    $region6: #{tpu_custom_call.1} parent=1 // loop_footer
      %s37 = sadd.s32 1, %s33
    $region7: #{tpu_custom_call.1} parent=1 // loop_footer_branch
      %32 = sbr.rel target = $region3
    $region8: #{tpu_custom_call.1} parent=1 // loop_exit
      _
    %5254 = vsyncpa [#allocation4], 1
    %s5255 = scalar_lea.sflag [#allocation4], 1
    %5256 = vsyncpa %s5255, 1

</llo_original>
